<compile_context>
chip_gen: v7x
topology: tpu7x:2x2x1
jax: 0.10.0
libtpu: 0.0.40
codegen_flags: <defaults>
</compile_context>

<pallas_src>
import functools
import math

import jax
import jax.numpy as jnp
from jax.experimental import pallas as pl
from jax.experimental.pallas import tpu as pltpu  # noqa: F401  (TPU backend assumed)

# ----------------------------- small config -----------------------------------
B = 2
IMG_SIZE = 16
PATCH_SIZE = 8
NUM_PATCHES = (IMG_SIZE // PATCH_SIZE) ** 2          # 4
EMBED_DIM = 32
NUM_HEADS = 4
HEAD_DIM = EMBED_DIM // NUM_HEADS                    # 8
MLP_RATIO = 4.0
MLP_HIDDEN = int(EMBED_DIM * MLP_RATIO)              # 128
DEPTH = 2
C_IN = 2                                             # ConvPatchEmbed input_channels
FEATURE_DIM = C_IN * NUM_PATCHES                     # 8
SEQ = NUM_PATCHES + 1                                # 5 (cls + patches)
LN_EPS = 1e-5
INV_SQRT2 = 0.7071067811865476
NEG_BIG = -1e30                                      # additive mask for cross-batch keys


# ------------------------------- fused kernel -----------------------------------
def fused_vit_kernel(xin_ref, emb_ref, mask_ref, wc_ref,
                     g1_ref, b1_ref, wqkv_ref, wproj_ref, bproj_ref,
                     g2_ref, b2_ref, w1_ref, bm1_ref, w2_ref, bm2_ref,
                     o_ref, *, depth, num_heads, head_dim, embed_dim):
    f32 = jnp.float32

    def layernorm(v, g, b):
        mu = jnp.mean(v, axis=-1, keepdims=True)
        var = jnp.mean(jnp.square(v - mu), axis=-1, keepdims=True)
        return (v - mu) * jax.lax.rsqrt(var + LN_EPS) * g + b

    # Patch embed (1x1 conv == per-token linear). cls rows have zero conv input, so one
    # matmul + the precomputed additive term (cls/pos/conv-bias) builds the full sequence
    # without any in-kernel concatenation or row scatter.
    x = jnp.dot(xin_ref[...], wc_ref[...], preferred_element_type=f32) + emb_ref[...]

    mask = mask_ref[...]                  # (BN, BN): 0 within batch, -1e30 across batches
    D, hd = embed_dim, head_dim

    for l in range(depth):                # statically unrolled layers (DEPTH=2)
        # ---------------- attention ----------------
        xn = layernorm(x, g1_ref[l], b1_ref[l])
        for h in range(num_heads):        # statically unrolled heads
            # per-head q/k/v via static ref slices of the qkv weight (scale pre-folded
            # into the Q columns at parameter-prep time).
            q = jnp.dot(xn, wqkv_ref[l, :, h * hd:(h + 1) * hd],
                        preferred_element_type=f32)
            k = jnp.dot(xn, wqkv_ref[l, :, D + h * hd:D + (h + 1) * hd],
                        preferred_element_type=f32)
            v = jnp.dot(xn, wqkv_ref[l, :, 2 * D + h * hd:2 * D + (h + 1) * hd],
                        preferred_element_type=f32)
            # q @ k^T without materializing a transpose.
            s = jax.lax.dot_general(q, k, (((1,), (1,)), ((), ())),
                                    preferred_element_type=f32) + mask
            s = s - jnp.max(s, axis=-1, keepdims=True)
            p = jnp.exp(s)
            p = p * (1.0 / jnp.sum(p, axis=-1, keepdims=True))   # exact reciprocal
            ctx = jnp.dot(p, v, preferred_element_type=f32)      # (BN, hd)
            # per-head projection accumulation (aligned sublane ref slice of W_proj):
            # no lane-dim concatenation of head outputs.
            x = x + jnp.dot(ctx, wproj_ref[l, h * hd:(h + 1) * hd, :],
                            preferred_element_type=f32)
        x = x + bproj_ref[l]

        # ---------------- mlp ----------------
        xn2 = layernorm(x, g2_ref[l], b2_ref[l])
        h1 = jnp.dot(xn2, w1_ref[l], preferred_element_type=f32) + bm1_ref[l]
        h1 = 0.5 * h1 * (1.0 + jax.lax.erf(h1 * INV_SQRT2))      # exact GELU
        x = x + jnp.dot(h1, w2_ref[l], preferred_element_type=f32) + bm2_ref[l]

    o_ref[...] = x


# ------------------------------- wrappers ---------------------------------------
def prepare_fused(params, batch):
    """Host-side, one-time parameter prep: stack per-layer weights, fold attn scale into
    the Q columns, precompute the embed additive term and the cross-batch mask."""
    scale = HEAD_DIM ** (-0.5)
    stk = lambda key: jnp.stack([blk[key] for blk in params["blocks"]])

    wqkv = stk("wqkv_t")                                            # (L, D, 3D)
    wqkv = wqkv.at[:, :, :EMBED_DIM].multiply(scale)                # fold attention scale

    pos = params["pos"]                                             # (SEQ, D)
    per_batch_add = jnp.concatenate(
        [params["cls"] + pos[0:1], params["bc"] + pos[1:]], axis=0)  # (SEQ, D)
    embed_add = jnp.tile(per_batch_add, (batch, 1))                 # (B*SEQ, D)

    bid = jnp.arange(batch * SEQ) // SEQ
    mask = jnp.where(bid[:, None] == bid[None, :], 0.0, NEG_BIG).astype(jnp.float32)

    return dict(
        wc_t=params["wc_t"], embed_add=embed_add, mask=mask,
        g1=stk("g1"), b1=stk("b1"), wqkv=wqkv, wproj=stk("wproj_t"), bproj=stk("bproj"),
        g2=stk("g2"), b2=stk("b2"),
        w1=stk("w1"), bm1=stk("bm1"), w2=stk("w2"), bm2=stk("bm2"),
    )


def vit_forward(x, fp):
    # ConvPatchEmbed view: (B, feature_dim) -> (B, C_in, P); tokens at position p use
    # channels x[b, :, p].  A zero row is inserted per batch where the cls token sits so
    # the kernel needs no concatenation.
    Bn = x.shape[0]
    x_bpc = x.reshape(Bn, C_IN, NUM_PATCHES).transpose(0, 2, 1)          # (B, P, C)
    xin = jnp.concatenate([jnp.zeros((Bn, 1, C_IN), x.dtype), x_bpc],
                          axis=1).reshape(Bn * SEQ, C_IN)                # (B*SEQ, C)

    kern = functools.partial(fused_vit_kernel, depth=DEPTH, num_heads=NUM_HEADS,
                             head_dim=HEAD_DIM, embed_dim=EMBED_DIM)
    # Single launch, no grid: everything (weights ~150 KB + activations) lives in VMEM.
    out = pl.pallas_call(
        kern,
        out_shape=jax.ShapeDtypeStruct((Bn * SEQ, EMBED_DIM), jnp.float32),
    )(xin, fp["embed_add"], fp["mask"], fp["wc_t"],
      fp["g1"], fp["b1"], fp["wqkv"], fp["wproj"], fp["bproj"],
      fp["g2"], fp["b2"], fp["w1"], fp["bm1"], fp["w2"], fp["bm2"])
    return out.reshape(Bn, SEQ, EMBED_DIM)


# ------------------------------ reference (plain JAX) ----------------------------
def reference_forward(x, params):
    Bn = x.shape[0]
    xp = x.reshape(Bn, C_IN, NUM_PATCHES).transpose(0, 2, 1)
    tok = xp @ params["wc_t"] + params["bc"]
    cls = jnp.broadcast_to(params["cls"][None], (Bn, 1, EMBED_DIM))
    t = jnp.concatenate([cls, tok], axis=1) + params["pos"][None]

    def ln(v, g, b):
        mu = v.mean(-1, keepdims=True)
        var = ((v - mu) ** 2).mean(-1, keepdims=True)
        return (v - mu) / jnp.sqrt(var + LN_EPS) * g + b

    for lp in params["blocks"]:
        xn = ln(t, lp["g1"], lp["b1"])
        qkv = xn @ lp["wqkv_t"]
        q, k, v = jnp.split(qkv, 3, axis=-1)

        def heads(a):
            return a.reshape(Bn, -1, NUM_HEADS, HEAD_DIM).transpose(0, 2, 1, 3)

        q = heads(q) * HEAD_DIM ** (-0.5)
        k = heads(k)
        v = heads(v)
        att = jax.nn.softmax(q @ k.transpose(0, 1, 3, 2), axis=-1)
        ao = (att @ v).transpose(0, 2, 1, 3).reshape(Bn, -1, EMBED_DIM)
        t = t + ao @ lp["wproj_t"] + lp["bproj"]

        xn2 = ln(t, lp["g2"], lp["b2"])
        h = xn2 @ lp["w1"] + lp["bm1"]
        h = 0.5 * h * (1.0 + jax.lax.erf(h / jnp.sqrt(2.0)))
        t = t + h @ lp["w2"] + lp["bm2"]
    return t


# ------------------------------ parameter init -----------------------------------
def init_params(key):
    ks = iter(jax.random.split(key, 64))

    def nrm(shape, std=0.02):
        return std * jax.random.normal(next(ks), shape, dtype=jnp.float32)

    # ConvPatchEmbed: kaiming_uniform weight (D, C_in), default conv bias.
    wc = jax.random.uniform(next(ks), (EMBED_DIM, C_IN), jnp.float32,
                            -1.0, 1.0) * math.sqrt(6.0 / C_IN)
    bc = jax.random.uniform(next(ks), (1, EMBED_DIM), jnp.float32,
                            -1.0, 1.0) / math.sqrt(C_IN)
    params = {
        "wc_t": wc.T,                                   # (C, D)
        "bc": bc,                                       # (1, D)
        "cls": nrm((1, EMBED_DIM)),                     # cls_token (trunc_normal 0.02)
        "pos": nrm((SEQ, EMBED_DIM)),                   # pos_embed (trunc_normal 0.02)
        "blocks": [],
    }
    for layer_id in range(1, DEPTH + 1):
        rescale = 1.0 / math.sqrt(2.0 * layer_id)       # fix_init_weight
        blk = {
            "g1": jnp.ones((1, EMBED_DIM), jnp.float32),
            "b1": jnp.zeros((1, EMBED_DIM), jnp.float32),
            "wqkv_t": nrm((3 * EMBED_DIM, EMBED_DIM)).T,              # (D, 3D), no bias
            "wproj_t": (nrm((EMBED_DIM, EMBED_DIM)) * rescale).T,     # (D, D)
            "bproj": jnp.zeros((1, EMBED_DIM), jnp.float32),
            "g2": jnp.ones((1, EMBED_DIM), jnp.float32),
            "b2": jnp.zeros((1, EMBED_DIM), jnp.float32),
            "w1": nrm((MLP_HIDDEN, EMBED_DIM)).T,                     # (D, Hid)
            "bm1": jnp.zeros((1, MLP_HIDDEN), jnp.float32),
            "w2": (nrm((EMBED_DIM, MLP_HIDDEN)) * rescale).T,         # (Hid, D)
            "bm2": jnp.zeros((1, EMBED_DIM), jnp.float32),
        }
        params["blocks"].append(blk)
    return params


# ----------------------------------- main -----------------------------------------
if __name__ == "__main__":
    key = jax.random.PRNGKey(0)
    kp, kx = jax.random.split(key)
    params = init_params(kp)
    fused_params = prepare_fused(params, B)
    x = jax.random.normal(kx, (B, FEATURE_DIM), dtype=jnp.float32)

    out = vit_forward(x, fused_params)
    out = jax.block_until_ready(out)

    ref = reference_forward(x, params)
    assert out.shape == (B, SEQ, EMBED_DIM), out.shape
    err = float(jnp.max(jnp.abs(out - ref)))
    assert err < 1e-3, f"mismatch vs reference: {err}"
    # TODO(synk): debug print inside ConvPatchEmbed.forward and the (unused in this
    # config) relative-position-bias branch are not replicated.
    print("KERNEL_OK")
</pallas_src>

<mosaic_0001>
module attributes {stable_mosaic.version = 11 : i64} {
  func.func @fused_vit_kernel(%arg0: memref<10x2xf32, #tpu.memory_space<vmem>>, %arg1: memref<10x32xf32, #tpu.memory_space<vmem>>, %arg2: memref<10x10xf32, #tpu.memory_space<vmem>>, %arg3: memref<2x32xf32, #tpu.memory_space<vmem>>, %arg4: memref<2x1x32xf32, #tpu.memory_space<vmem>>, %arg5: memref<2x1x32xf32, #tpu.memory_space<vmem>>, %arg6: memref<2x32x96xf32, #tpu.memory_space<vmem>>, %arg7: memref<2x32x32xf32, #tpu.memory_space<vmem>>, %arg8: memref<2x1x32xf32, #tpu.memory_space<vmem>>, %arg9: memref<2x1x32xf32, #tpu.memory_space<vmem>>, %arg10: memref<2x1x32xf32, #tpu.memory_space<vmem>>, %arg11: memref<2x32x128xf32, #tpu.memory_space<vmem>>, %arg12: memref<2x1x128xf32, #tpu.memory_space<vmem>>, %arg13: memref<2x128x32xf32, #tpu.memory_space<vmem>>, %arg14: memref<2x1x32xf32, #tpu.memory_space<vmem>>, %arg15: memref<10x32xf32, #tpu.memory_space<vmem>>) attributes {dimension_semantics = [], scalar_prefetch = 0 : i64, scratch_operands = 0 : i64, tpu.core_type = #tpu.core_type<tc>} {
    %c0 = arith.constant 0 : index
    %c0_0 = arith.constant 0 : index
    %0 = vector.load %arg0[%c0, %c0_0] : memref<10x2xf32, #tpu.memory_space<vmem>>, vector<10x2xf32>
    %c0_1 = arith.constant 0 : index
    %c0_2 = arith.constant 0 : index
    %1 = vector.load %arg3[%c0_1, %c0_2] : memref<2x32xf32, #tpu.memory_space<vmem>>, vector<2x32xf32>
    %cst = arith.constant dense<0.000000e+00> : vector<10x32xf32>
    %2 = tpu.matmul %0, %1, %cst {dimension_numbers = #tpu.dot_dimension_numbers<[1], [0], [0], [1], [0, 0, 1, 1], [], []>} : vector<10x2xf32>, vector<2x32xf32>, vector<10x32xf32> -> vector<10x32xf32>
    %c0_3 = arith.constant 0 : index
    %c0_4 = arith.constant 0 : index
    %3 = vector.load %arg1[%c0_3, %c0_4] : memref<10x32xf32, #tpu.memory_space<vmem>>, vector<10x32xf32>
    %4 = arith.addf %2, %3 : vector<10x32xf32>
    %c0_5 = arith.constant 0 : index
    %c0_6 = arith.constant 0 : index
    %5 = vector.load %arg2[%c0_5, %c0_6] : memref<10x10xf32, #tpu.memory_space<vmem>>, vector<10x10xf32>
    %c0_7 = arith.constant 0 : index
    %c0_8 = arith.constant 0 : index
    %c0_9 = arith.constant 0 : index
    %6 = vector.load %arg4[%c0_7, %c0_8, %c0_9] : memref<2x1x32xf32, #tpu.memory_space<vmem>>, vector<1x1x32xf32>
    %7 = vector.shape_cast %6 : vector<1x1x32xf32> to vector<1x32xf32>
    %c0_10 = arith.constant 0 : index
    %c0_11 = arith.constant 0 : index
    %c0_12 = arith.constant 0 : index
    %8 = vector.load %arg5[%c0_10, %c0_11, %c0_12] : memref<2x1x32xf32, #tpu.memory_space<vmem>>, vector<1x1x32xf32>
    %9 = vector.shape_cast %8 : vector<1x1x32xf32> to vector<1x32xf32>
    %cst_13 = arith.constant dense<0.000000e+00> : vector<10xf32>
    %10 = vector.multi_reduction <add>, %4, %cst_13 [1] : vector<10x32xf32> to vector<10xf32>
    %11 = vector.shape_cast %10 : vector<10xf32> to vector<10x1xf32>
    %cst_14 = arith.constant 3.200000e+01 : f32
    %12 = vector.broadcast %cst_14 : f32 to vector<10x1xf32>
    %13 = arith.divf %11, %12 : vector<10x1xf32>
    %14 = vector.broadcast %13 : vector<10x1xf32> to vector<10x32xf32>
    %15 = arith.subf %4, %14 : vector<10x32xf32>
    %16 = arith.mulf %15, %15 : vector<10x32xf32>
    %cst_15 = arith.constant dense<0.000000e+00> : vector<10xf32>
    %17 = vector.multi_reduction <add>, %16, %cst_15 [1] : vector<10x32xf32> to vector<10xf32>
    %18 = vector.shape_cast %17 : vector<10xf32> to vector<10x1xf32>
    %cst_16 = arith.constant 3.200000e+01 : f32
    %19 = vector.broadcast %cst_16 : f32 to vector<10x1xf32>
    %20 = arith.divf %18, %19 : vector<10x1xf32>
    %21 = vector.broadcast %13 : vector<10x1xf32> to vector<10x32xf32>
    %22 = arith.subf %4, %21 : vector<10x32xf32>
    %cst_17 = arith.constant 9.99999974E-6 : f32
    %23 = vector.broadcast %cst_17 : f32 to vector<10x1xf32>
    %24 = arith.addf %20, %23 : vector<10x1xf32>
    %25 = math.rsqrt %24 : vector<10x1xf32>
    %26 = vector.broadcast %25 : vector<10x1xf32> to vector<10x32xf32>
    %27 = arith.mulf %22, %26 : vector<10x32xf32>
    %28 = vector.broadcast %7 : vector<1x32xf32> to vector<10x32xf32>
    %29 = arith.mulf %27, %28 : vector<10x32xf32>
    %30 = vector.broadcast %9 : vector<1x32xf32> to vector<10x32xf32>
    %31 = arith.addf %29, %30 : vector<10x32xf32>
    %c0_18 = arith.constant 0 : index
    %c0_19 = arith.constant 0 : index
    %c0_20 = arith.constant 0 : index
    %32 = vector.load %arg6[%c0_18, %c0_19, %c0_20] : memref<2x32x96xf32, #tpu.memory_space<vmem>>, vector<1x32x8xf32>
    %33 = vector.shape_cast %32 : vector<1x32x8xf32> to vector<32x8xf32>
    %cst_21 = arith.constant dense<0.000000e+00> : vector<10x8xf32>
    %34 = tpu.matmul %31, %33, %cst_21 {dimension_numbers = #tpu.dot_dimension_numbers<[1], [0], [0], [1], [0, 0, 1, 1], [], []>} : vector<10x32xf32>, vector<32x8xf32>, vector<10x8xf32> -> vector<10x8xf32>
    %c0_22 = arith.constant 0 : index
    %c0_23 = arith.constant 0 : index
    %c32 = arith.constant 32 : index
    %35 = vector.load %arg6[%c0_22, %c0_23, %c32] : memref<2x32x96xf32, #tpu.memory_space<vmem>>, vector<1x32x8xf32>
    %36 = vector.shape_cast %35 : vector<1x32x8xf32> to vector<32x8xf32>
    %cst_24 = arith.constant dense<0.000000e+00> : vector<10x8xf32>
    %37 = tpu.matmul %31, %36, %cst_24 {dimension_numbers = #tpu.dot_dimension_numbers<[1], [0], [0], [1], [0, 0, 1, 1], [], []>} : vector<10x32xf32>, vector<32x8xf32>, vector<10x8xf32> -> vector<10x8xf32>
    %c0_25 = arith.constant 0 : index
    %c0_26 = arith.constant 0 : index
    %c64 = arith.constant 64 : index
    %38 = vector.load %arg6[%c0_25, %c0_26, %c64] : memref<2x32x96xf32, #tpu.memory_space<vmem>>, vector<1x32x8xf32>
    %39 = vector.shape_cast %38 : vector<1x32x8xf32> to vector<32x8xf32>
    %cst_27 = arith.constant dense<0.000000e+00> : vector<10x8xf32>
    %40 = tpu.matmul %31, %39, %cst_27 {dimension_numbers = #tpu.dot_dimension_numbers<[1], [0], [0], [1], [0, 0, 1, 1], [], []>} : vector<10x32xf32>, vector<32x8xf32>, vector<10x8xf32> -> vector<10x8xf32>
    %cst_28 = arith.constant dense<0.000000e+00> : vector<10x10xf32>
    %41 = tpu.matmul %34, %37, %cst_28 {dimension_numbers = #tpu.dot_dimension_numbers<[1], [1], [0], [0], [0, 0, 1, 0], [], []>} : vector<10x8xf32>, vector<10x8xf32>, vector<10x10xf32> -> vector<10x10xf32>
    %42 = arith.addf %41, %5 : vector<10x10xf32>
    %cst_29 = arith.constant dense<0xFF800000> : vector<10xf32>
    %43 = vector.multi_reduction <maximumf>, %42, %cst_29 [1] : vector<10x10xf32> to vector<10xf32>
    %44 = vector.shape_cast %43 : vector<10xf32> to vector<10x1xf32>
    %45 = vector.broadcast %44 : vector<10x1xf32> to vector<10x10xf32>
    %46 = arith.subf %42, %45 : vector<10x10xf32>
    %47 = math.exp %46 : vector<10x10xf32>
    %cst_30 = arith.constant dense<0.000000e+00> : vector<10xf32>
    %48 = vector.multi_reduction <add>, %47, %cst_30 [1] : vector<10x10xf32> to vector<10xf32>
    %49 = vector.shape_cast %48 : vector<10xf32> to vector<10x1xf32>
    %cst_31 = arith.constant 1.000000e+00 : f32
    %50 = vector.broadcast %cst_31 : f32 to vector<10x1xf32>
    %51 = arith.divf %50, %49 : vector<10x1xf32>
    %52 = vector.broadcast %51 : vector<10x1xf32> to vector<10x10xf32>
    %53 = arith.mulf %47, %52 : vector<10x10xf32>
    %cst_32 = arith.constant dense<0.000000e+00> : vector<10x8xf32>
    %54 = tpu.matmul %53, %40, %cst_32 {dimension_numbers = #tpu.dot_dimension_numbers<[1], [0], [0], [1], [0, 0, 1, 1], [], []>} : vector<10x10xf32>, vector<10x8xf32>, vector<10x8xf32> -> vector<10x8xf32>
    %c0_33 = arith.constant 0 : index
    %c0_34 = arith.constant 0 : index
    %c0_35 = arith.constant 0 : index
    %55 = vector.load %arg7[%c0_33, %c0_34, %c0_35] : memref<2x32x32xf32, #tpu.memory_space<vmem>>, vector<1x8x32xf32>
    %56 = vector.shape_cast %55 : vector<1x8x32xf32> to vector<8x32xf32>
    %cst_36 = arith.constant dense<0.000000e+00> : vector<10x32xf32>
    %57 = tpu.matmul %54, %56, %cst_36 {dimension_numbers = #tpu.dot_dimension_numbers<[1], [0], [0], [1], [0, 0, 1, 1], [], []>} : vector<10x8xf32>, vector<8x32xf32>, vector<10x32xf32> -> vector<10x32xf32>
    %58 = arith.addf %4, %57 : vector<10x32xf32>
    %c0_37 = arith.constant 0 : index
    %c0_38 = arith.constant 0 : index
    %c8 = arith.constant 8 : index
    %59 = vector.load %arg6[%c0_37, %c0_38, %c8] : memref<2x32x96xf32, #tpu.memory_space<vmem>>, vector<1x32x8xf32>
    %60 = vector.shape_cast %59 : vector<1x32x8xf32> to vector<32x8xf32>
    %cst_39 = arith.constant dense<0.000000e+00> : vector<10x8xf32>
    %61 = tpu.matmul %31, %60, %cst_39 {dimension_numbers = #tpu.dot_dimension_numbers<[1], [0], [0], [1], [0, 0, 1, 1], [], []>} : vector<10x32xf32>, vector<32x8xf32>, vector<10x8xf32> -> vector<10x8xf32>
    %c0_40 = arith.constant 0 : index
    %c0_41 = arith.constant 0 : index
    %c40 = arith.constant 40 : index
    %62 = vector.load %arg6[%c0_40, %c0_41, %c40] : memref<2x32x96xf32, #tpu.memory_space<vmem>>, vector<1x32x8xf32>
    %63 = vector.shape_cast %62 : vector<1x32x8xf32> to vector<32x8xf32>
    %cst_42 = arith.constant dense<0.000000e+00> : vector<10x8xf32>
    %64 = tpu.matmul %31, %63, %cst_42 {dimension_numbers = #tpu.dot_dimension_numbers<[1], [0], [0], [1], [0, 0, 1, 1], [], []>} : vector<10x32xf32>, vector<32x8xf32>, vector<10x8xf32> -> vector<10x8xf32>
    %c0_43 = arith.constant 0 : index
    %c0_44 = arith.constant 0 : index
    %c72 = arith.constant 72 : index
    %65 = vector.load %arg6[%c0_43, %c0_44, %c72] : memref<2x32x96xf32, #tpu.memory_space<vmem>>, vector<1x32x8xf32>
    %66 = vector.shape_cast %65 : vector<1x32x8xf32> to vector<32x8xf32>
    %cst_45 = arith.constant dense<0.000000e+00> : vector<10x8xf32>
    %67 = tpu.matmul %31, %66, %cst_45 {dimension_numbers = #tpu.dot_dimension_numbers<[1], [0], [0], [1], [0, 0, 1, 1], [], []>} : vector<10x32xf32>, vector<32x8xf32>, vector<10x8xf32> -> vector<10x8xf32>
    %cst_46 = arith.constant dense<0.000000e+00> : vector<10x10xf32>
    %68 = tpu.matmul %61, %64, %cst_46 {dimension_numbers = #tpu.dot_dimension_numbers<[1], [1], [0], [0], [0, 0, 1, 0], [], []>} : vector<10x8xf32>, vector<10x8xf32>, vector<10x10xf32> -> vector<10x10xf32>
    %69 = arith.addf %68, %5 : vector<10x10xf32>
    %cst_47 = arith.constant dense<0xFF800000> : vector<10xf32>
    %70 = vector.multi_reduction <maximumf>, %69, %cst_47 [1] : vector<10x10xf32> to vector<10xf32>
    %71 = vector.shape_cast %70 : vector<10xf32> to vector<10x1xf32>
    %72 = vector.broadcast %71 : vector<10x1xf32> to vector<10x10xf32>
    %73 = arith.subf %69, %72 : vector<10x10xf32>
    %74 = math.exp %73 : vector<10x10xf32>
    %cst_48 = arith.constant dense<0.000000e+00> : vector<10xf32>
    %75 = vector.multi_reduction <add>, %74, %cst_48 [1] : vector<10x10xf32> to vector<10xf32>
    %76 = vector.shape_cast %75 : vector<10xf32> to vector<10x1xf32>
    %cst_49 = arith.constant 1.000000e+00 : f32
    %77 = vector.broadcast %cst_49 : f32 to vector<10x1xf32>
    %78 = arith.divf %77, %76 : vector<10x1xf32>
    %79 = vector.broadcast %78 : vector<10x1xf32> to vector<10x10xf32>
    %80 = arith.mulf %74, %79 : vector<10x10xf32>
    %cst_50 = arith.constant dense<0.000000e+00> : vector<10x8xf32>
    %81 = tpu.matmul %80, %67, %cst_50 {dimension_numbers = #tpu.dot_dimension_numbers<[1], [0], [0], [1], [0, 0, 1, 1], [], []>} : vector<10x10xf32>, vector<10x8xf32>, vector<10x8xf32> -> vector<10x8xf32>
    %c0_51 = arith.constant 0 : index
    %c8_52 = arith.constant 8 : index
    %c0_53 = arith.constant 0 : index
    %82 = vector.load %arg7[%c0_51, %c8_52, %c0_53] : memref<2x32x32xf32, #tpu.memory_space<vmem>>, vector<1x8x32xf32>
    %83 = vector.shape_cast %82 : vector<1x8x32xf32> to vector<8x32xf32>
    %cst_54 = arith.constant dense<0.000000e+00> : vector<10x32xf32>
    %84 = tpu.matmul %81, %83, %cst_54 {dimension_numbers = #tpu.dot_dimension_numbers<[1], [0], [0], [1], [0, 0, 1, 1], [], []>} : vector<10x8xf32>, vector<8x32xf32>, vector<10x32xf32> -> vector<10x32xf32>
    %85 = arith.addf %58, %84 : vector<10x32xf32>
    %c0_55 = arith.constant 0 : index
    %c0_56 = arith.constant 0 : index
    %c16 = arith.constant 16 : index
    %86 = vector.load %arg6[%c0_55, %c0_56, %c16] : memref<2x32x96xf32, #tpu.memory_space<vmem>>, vector<1x32x8xf32>
    %87 = vector.shape_cast %86 : vector<1x32x8xf32> to vector<32x8xf32>
    %cst_57 = arith.constant dense<0.000000e+00> : vector<10x8xf32>
    %88 = tpu.matmul %31, %87, %cst_57 {dimension_numbers = #tpu.dot_dimension_numbers<[1], [0], [0], [1], [0, 0, 1, 1], [], []>} : vector<10x32xf32>, vector<32x8xf32>, vector<10x8xf32> -> vector<10x8xf32>
    %c0_58 = arith.constant 0 : index
    %c0_59 = arith.constant 0 : index
    %c48 = arith.constant 48 : index
    %89 = vector.load %arg6[%c0_58, %c0_59, %c48] : memref<2x32x96xf32, #tpu.memory_space<vmem>>, vector<1x32x8xf32>
    %90 = vector.shape_cast %89 : vector<1x32x8xf32> to vector<32x8xf32>
    %cst_60 = arith.constant dense<0.000000e+00> : vector<10x8xf32>
    %91 = tpu.matmul %31, %90, %cst_60 {dimension_numbers = #tpu.dot_dimension_numbers<[1], [0], [0], [1], [0, 0, 1, 1], [], []>} : vector<10x32xf32>, vector<32x8xf32>, vector<10x8xf32> -> vector<10x8xf32>
    %c0_61 = arith.constant 0 : index
    %c0_62 = arith.constant 0 : index
    %c80 = arith.constant 80 : index
    %92 = vector.load %arg6[%c0_61, %c0_62, %c80] : memref<2x32x96xf32, #tpu.memory_space<vmem>>, vector<1x32x8xf32>
    %93 = vector.shape_cast %92 : vector<1x32x8xf32> to vector<32x8xf32>
    %cst_63 = arith.constant dense<0.000000e+00> : vector<10x8xf32>
    %94 = tpu.matmul %31, %93, %cst_63 {dimension_numbers = #tpu.dot_dimension_numbers<[1], [0], [0], [1], [0, 0, 1, 1], [], []>} : vector<10x32xf32>, vector<32x8xf32>, vector<10x8xf32> -> vector<10x8xf32>
    %cst_64 = arith.constant dense<0.000000e+00> : vector<10x10xf32>
    %95 = tpu.matmul %88, %91, %cst_64 {dimension_numbers = #tpu.dot_dimension_numbers<[1], [1], [0], [0], [0, 0, 1, 0], [], []>} : vector<10x8xf32>, vector<10x8xf32>, vector<10x10xf32> -> vector<10x10xf32>
    %96 = arith.addf %95, %5 : vector<10x10xf32>
    %cst_65 = arith.constant dense<0xFF800000> : vector<10xf32>
    %97 = vector.multi_reduction <maximumf>, %96, %cst_65 [1] : vector<10x10xf32> to vector<10xf32>
    %98 = vector.shape_cast %97 : vector<10xf32> to vector<10x1xf32>
    %99 = vector.broadcast %98 : vector<10x1xf32> to vector<10x10xf32>
    %100 = arith.subf %96, %99 : vector<10x10xf32>
    %101 = math.exp %100 : vector<10x10xf32>
    %cst_66 = arith.constant dense<0.000000e+00> : vector<10xf32>
    %102 = vector.multi_reduction <add>, %101, %cst_66 [1] : vector<10x10xf32> to vector<10xf32>
    %103 = vector.shape_cast %102 : vector<10xf32> to vector<10x1xf32>
    %cst_67 = arith.constant 1.000000e+00 : f32
    %104 = vector.broadcast %cst_67 : f32 to vector<10x1xf32>
    %105 = arith.divf %104, %103 : vector<10x1xf32>
    %106 = vector.broadcast %105 : vector<10x1xf32> to vector<10x10xf32>
    %107 = arith.mulf %101, %106 : vector<10x10xf32>
    %cst_68 = arith.constant dense<0.000000e+00> : vector<10x8xf32>
    %108 = tpu.matmul %107, %94, %cst_68 {dimension_numbers = #tpu.dot_dimension_numbers<[1], [0], [0], [1], [0, 0, 1, 1], [], []>} : vector<10x10xf32>, vector<10x8xf32>, vector<10x8xf32> -> vector<10x8xf32>
    %c0_69 = arith.constant 0 : index
    %c16_70 = arith.constant 16 : index
    %c0_71 = arith.constant 0 : index
    %109 = vector.load %arg7[%c0_69, %c16_70, %c0_71] : memref<2x32x32xf32, #tpu.memory_space<vmem>>, vector<1x8x32xf32>
    %110 = vector.shape_cast %109 : vector<1x8x32xf32> to vector<8x32xf32>
    %cst_72 = arith.constant dense<0.000000e+00> : vector<10x32xf32>
    %111 = tpu.matmul %108, %110, %cst_72 {dimension_numbers = #tpu.dot_dimension_numbers<[1], [0], [0], [1], [0, 0, 1, 1], [], []>} : vector<10x8xf32>, vector<8x32xf32>, vector<10x32xf32> -> vector<10x32xf32>
    %112 = arith.addf %85, %111 : vector<10x32xf32>
    %c0_73 = arith.constant 0 : index
    %c0_74 = arith.constant 0 : index
    %c24 = arith.constant 24 : index
    %113 = vector.load %arg6[%c0_73, %c0_74, %c24] : memref<2x32x96xf32, #tpu.memory_space<vmem>>, vector<1x32x8xf32>
    %114 = vector.shape_cast %113 : vector<1x32x8xf32> to vector<32x8xf32>
    %cst_75 = arith.constant dense<0.000000e+00> : vector<10x8xf32>
    %115 = tpu.matmul %31, %114, %cst_75 {dimension_numbers = #tpu.dot_dimension_numbers<[1], [0], [0], [1], [0, 0, 1, 1], [], []>} : vector<10x32xf32>, vector<32x8xf32>, vector<10x8xf32> -> vector<10x8xf32>
    %c0_76 = arith.constant 0 : index
    %c0_77 = arith.constant 0 : index
    %c56 = arith.constant 56 : index
    %116 = vector.load %arg6[%c0_76, %c0_77, %c56] : memref<2x32x96xf32, #tpu.memory_space<vmem>>, vector<1x32x8xf32>
    %117 = vector.shape_cast %116 : vector<1x32x8xf32> to vector<32x8xf32>
    %cst_78 = arith.constant dense<0.000000e+00> : vector<10x8xf32>
    %118 = tpu.matmul %31, %117, %cst_78 {dimension_numbers = #tpu.dot_dimension_numbers<[1], [0], [0], [1], [0, 0, 1, 1], [], []>} : vector<10x32xf32>, vector<32x8xf32>, vector<10x8xf32> -> vector<10x8xf32>
    %c0_79 = arith.constant 0 : index
    %c0_80 = arith.constant 0 : index
    %c88 = arith.constant 88 : index
    %119 = vector.load %arg6[%c0_79, %c0_80, %c88] : memref<2x32x96xf32, #tpu.memory_space<vmem>>, vector<1x32x8xf32>
    %120 = vector.shape_cast %119 : vector<1x32x8xf32> to vector<32x8xf32>
    %cst_81 = arith.constant dense<0.000000e+00> : vector<10x8xf32>
    %121 = tpu.matmul %31, %120, %cst_81 {dimension_numbers = #tpu.dot_dimension_numbers<[1], [0], [0], [1], [0, 0, 1, 1], [], []>} : vector<10x32xf32>, vector<32x8xf32>, vector<10x8xf32> -> vector<10x8xf32>
    %cst_82 = arith.constant dense<0.000000e+00> : vector<10x10xf32>
    %122 = tpu.matmul %115, %118, %cst_82 {dimension_numbers = #tpu.dot_dimension_numbers<[1], [1], [0], [0], [0, 0, 1, 0], [], []>} : vector<10x8xf32>, vector<10x8xf32>, vector<10x10xf32> -> vector<10x10xf32>
    %123 = arith.addf %122, %5 : vector<10x10xf32>
    %cst_83 = arith.constant dense<0xFF800000> : vector<10xf32>
    %124 = vector.multi_reduction <maximumf>, %123, %cst_83 [1] : vector<10x10xf32> to vector<10xf32>
    %125 = vector.shape_cast %124 : vector<10xf32> to vector<10x1xf32>
    %126 = vector.broadcast %125 : vector<10x1xf32> to vector<10x10xf32>
    %127 = arith.subf %123, %126 : vector<10x10xf32>
    %128 = math.exp %127 : vector<10x10xf32>
    %cst_84 = arith.constant dense<0.000000e+00> : vector<10xf32>
    %129 = vector.multi_reduction <add>, %128, %cst_84 [1] : vector<10x10xf32> to vector<10xf32>
    %130 = vector.shape_cast %129 : vector<10xf32> to vector<10x1xf32>
    %cst_85 = arith.constant 1.000000e+00 : f32
    %131 = vector.broadcast %cst_85 : f32 to vector<10x1xf32>
    %132 = arith.divf %131, %130 : vector<10x1xf32>
    %133 = vector.broadcast %132 : vector<10x1xf32> to vector<10x10xf32>
    %134 = arith.mulf %128, %133 : vector<10x10xf32>
    %cst_86 = arith.constant dense<0.000000e+00> : vector<10x8xf32>
    %135 = tpu.matmul %134, %121, %cst_86 {dimension_numbers = #tpu.dot_dimension_numbers<[1], [0], [0], [1], [0, 0, 1, 1], [], []>} : vector<10x10xf32>, vector<10x8xf32>, vector<10x8xf32> -> vector<10x8xf32>
    %c0_87 = arith.constant 0 : index
    %c24_88 = arith.constant 24 : index
    %c0_89 = arith.constant 0 : index
    %136 = vector.load %arg7[%c0_87, %c24_88, %c0_89] : memref<2x32x32xf32, #tpu.memory_space<vmem>>, vector<1x8x32xf32>
    %137 = vector.shape_cast %136 : vector<1x8x32xf32> to vector<8x32xf32>
    %cst_90 = arith.constant dense<0.000000e+00> : vector<10x32xf32>
    %138 = tpu.matmul %135, %137, %cst_90 {dimension_numbers = #tpu.dot_dimension_numbers<[1], [0], [0], [1], [0, 0, 1, 1], [], []>} : vector<10x8xf32>, vector<8x32xf32>, vector<10x32xf32> -> vector<10x32xf32>
    %139 = arith.addf %112, %138 : vector<10x32xf32>
    %c0_91 = arith.constant 0 : index
    %c0_92 = arith.constant 0 : index
    %c0_93 = arith.constant 0 : index
    %140 = vector.load %arg8[%c0_91, %c0_92, %c0_93] : memref<2x1x32xf32, #tpu.memory_space<vmem>>, vector<1x1x32xf32>
    %141 = vector.shape_cast %140 : vector<1x1x32xf32> to vector<1x32xf32>
    %142 = vector.broadcast %141 : vector<1x32xf32> to vector<10x32xf32>
    %143 = arith.addf %139, %142 : vector<10x32xf32>
    %c0_94 = arith.constant 0 : index
    %c0_95 = arith.constant 0 : index
    %c0_96 = arith.constant 0 : index
    %144 = vector.load %arg9[%c0_94, %c0_95, %c0_96] : memref<2x1x32xf32, #tpu.memory_space<vmem>>, vector<1x1x32xf32>
    %145 = vector.shape_cast %144 : vector<1x1x32xf32> to vector<1x32xf32>
    %c0_97 = arith.constant 0 : index
    %c0_98 = arith.constant 0 : index
    %c0_99 = arith.constant 0 : index
    %146 = vector.load %arg10[%c0_97, %c0_98, %c0_99] : memref<2x1x32xf32, #tpu.memory_space<vmem>>, vector<1x1x32xf32>
    %147 = vector.shape_cast %146 : vector<1x1x32xf32> to vector<1x32xf32>
    %cst_100 = arith.constant dense<0.000000e+00> : vector<10xf32>
    %148 = vector.multi_reduction <add>, %143, %cst_100 [1] : vector<10x32xf32> to vector<10xf32>
    %149 = vector.shape_cast %148 : vector<10xf32> to vector<10x1xf32>
    %cst_101 = arith.constant 3.200000e+01 : f32
    %150 = vector.broadcast %cst_101 : f32 to vector<10x1xf32>
    %151 = arith.divf %149, %150 : vector<10x1xf32>
    %152 = vector.broadcast %151 : vector<10x1xf32> to vector<10x32xf32>
    %153 = arith.subf %143, %152 : vector<10x32xf32>
    %154 = arith.mulf %153, %153 : vector<10x32xf32>
    %cst_102 = arith.constant dense<0.000000e+00> : vector<10xf32>
    %155 = vector.multi_reduction <add>, %154, %cst_102 [1] : vector<10x32xf32> to vector<10xf32>
    %156 = vector.shape_cast %155 : vector<10xf32> to vector<10x1xf32>
    %cst_103 = arith.constant 3.200000e+01 : f32
    %157 = vector.broadcast %cst_103 : f32 to vector<10x1xf32>
    %158 = arith.divf %156, %157 : vector<10x1xf32>
    %159 = vector.broadcast %151 : vector<10x1xf32> to vector<10x32xf32>
    %160 = arith.subf %143, %159 : vector<10x32xf32>
    %cst_104 = arith.constant 9.99999974E-6 : f32
    %161 = vector.broadcast %cst_104 : f32 to vector<10x1xf32>
    %162 = arith.addf %158, %161 : vector<10x1xf32>
    %163 = math.rsqrt %162 : vector<10x1xf32>
    %164 = vector.broadcast %163 : vector<10x1xf32> to vector<10x32xf32>
    %165 = arith.mulf %160, %164 : vector<10x32xf32>
    %166 = vector.broadcast %145 : vector<1x32xf32> to vector<10x32xf32>
    %167 = arith.mulf %165, %166 : vector<10x32xf32>
    %168 = vector.broadcast %147 : vector<1x32xf32> to vector<10x32xf32>
    %169 = arith.addf %167, %168 : vector<10x32xf32>
    %c0_105 = arith.constant 0 : index
    %c0_106 = arith.constant 0 : index
    %c0_107 = arith.constant 0 : index
    %170 = vector.load %arg11[%c0_105, %c0_106, %c0_107] : memref<2x32x128xf32, #tpu.memory_space<vmem>>, vector<1x32x128xf32>
    %171 = vector.shape_cast %170 : vector<1x32x128xf32> to vector<32x128xf32>
    %cst_108 = arith.constant dense<0.000000e+00> : vector<10x128xf32>
    %172 = tpu.matmul %169, %171, %cst_108 {dimension_numbers = #tpu.dot_dimension_numbers<[1], [0], [0], [1], [0, 0, 1, 1], [], []>} : vector<10x32xf32>, vector<32x128xf32>, vector<10x128xf32> -> vector<10x128xf32>
    %c0_109 = arith.constant 0 : index
    %c0_110 = arith.constant 0 : index
    %c0_111 = arith.constant 0 : index
    %173 = vector.load %arg12[%c0_109, %c0_110, %c0_111] : memref<2x1x128xf32, #tpu.memory_space<vmem>>, vector<1x1x128xf32>
    %174 = vector.shape_cast %173 : vector<1x1x128xf32> to vector<1x128xf32>
    %175 = vector.broadcast %174 : vector<1x128xf32> to vector<10x128xf32>
    %176 = arith.addf %172, %175 : vector<10x128xf32>
    %cst_112 = arith.constant 5.000000e-01 : f32
    %177 = vector.broadcast %cst_112 : f32 to vector<10x128xf32>
    %178 = arith.mulf %177, %176 : vector<10x128xf32>
    %cst_113 = arith.constant 0.707106769 : f32
    %179 = vector.broadcast %cst_113 : f32 to vector<10x128xf32>
    %180 = arith.mulf %176, %179 : vector<10x128xf32>
    %181 = math.erf %180 : vector<10x128xf32>
    %cst_114 = arith.constant 1.000000e+00 : f32
    %182 = vector.broadcast %cst_114 : f32 to vector<10x128xf32>
    %183 = arith.addf %182, %181 : vector<10x128xf32>
    %184 = arith.mulf %178, %183 : vector<10x128xf32>
    %c0_115 = arith.constant 0 : index
    %c0_116 = arith.constant 0 : index
    %c0_117 = arith.constant 0 : index
    %185 = vector.load %arg13[%c0_115, %c0_116, %c0_117] : memref<2x128x32xf32, #tpu.memory_space<vmem>>, vector<1x128x32xf32>
    %186 = vector.shape_cast %185 : vector<1x128x32xf32> to vector<128x32xf32>
    %cst_118 = arith.constant dense<0.000000e+00> : vector<10x32xf32>
    %187 = tpu.matmul %184, %186, %cst_118 {dimension_numbers = #tpu.dot_dimension_numbers<[1], [0], [0], [1], [0, 0, 1, 1], [], []>} : vector<10x128xf32>, vector<128x32xf32>, vector<10x32xf32> -> vector<10x32xf32>
    %188 = arith.addf %143, %187 : vector<10x32xf32>
    %c0_119 = arith.constant 0 : index
    %c0_120 = arith.constant 0 : index
    %c0_121 = arith.constant 0 : index
    %189 = vector.load %arg14[%c0_119, %c0_120, %c0_121] : memref<2x1x32xf32, #tpu.memory_space<vmem>>, vector<1x1x32xf32>
    %190 = vector.shape_cast %189 : vector<1x1x32xf32> to vector<1x32xf32>
    %191 = vector.broadcast %190 : vector<1x32xf32> to vector<10x32xf32>
    %192 = arith.addf %188, %191 : vector<10x32xf32>
    %c1 = arith.constant 1 : index
    %c0_122 = arith.constant 0 : index
    %c0_123 = arith.constant 0 : index
    %193 = vector.load %arg4[%c1, %c0_122, %c0_123] : memref<2x1x32xf32, #tpu.memory_space<vmem>>, vector<1x1x32xf32>
    %194 = vector.shape_cast %193 : vector<1x1x32xf32> to vector<1x32xf32>
    %c1_124 = arith.constant 1 : index
    %c0_125 = arith.constant 0 : index
    %c0_126 = arith.constant 0 : index
    %195 = vector.load %arg5[%c1_124, %c0_125, %c0_126] : memref<2x1x32xf32, #tpu.memory_space<vmem>>, vector<1x1x32xf32>
    %196 = vector.shape_cast %195 : vector<1x1x32xf32> to vector<1x32xf32>
    %cst_127 = arith.constant dense<0.000000e+00> : vector<10xf32>
    %197 = vector.multi_reduction <add>, %192, %cst_127 [1] : vector<10x32xf32> to vector<10xf32>
    %198 = vector.shape_cast %197 : vector<10xf32> to vector<10x1xf32>
    %cst_128 = arith.constant 3.200000e+01 : f32
    %199 = vector.broadcast %cst_128 : f32 to vector<10x1xf32>
    %200 = arith.divf %198, %199 : vector<10x1xf32>
    %201 = vector.broadcast %200 : vector<10x1xf32> to vector<10x32xf32>
    %202 = arith.subf %192, %201 : vector<10x32xf32>
    %203 = arith.mulf %202, %202 : vector<10x32xf32>
    %cst_129 = arith.constant dense<0.000000e+00> : vector<10xf32>
    %204 = vector.multi_reduction <add>, %203, %cst_129 [1] : vector<10x32xf32> to vector<10xf32>
    %205 = vector.shape_cast %204 : vector<10xf32> to vector<10x1xf32>
    %cst_130 = arith.constant 3.200000e+01 : f32
    %206 = vector.broadcast %cst_130 : f32 to vector<10x1xf32>
    %207 = arith.divf %205, %206 : vector<10x1xf32>
    %208 = vector.broadcast %200 : vector<10x1xf32> to vector<10x32xf32>
    %209 = arith.subf %192, %208 : vector<10x32xf32>
    %cst_131 = arith.constant 9.99999974E-6 : f32
    %210 = vector.broadcast %cst_131 : f32 to vector<10x1xf32>
    %211 = arith.addf %207, %210 : vector<10x1xf32>
    %212 = math.rsqrt %211 : vector<10x1xf32>
    %213 = vector.broadcast %212 : vector<10x1xf32> to vector<10x32xf32>
    %214 = arith.mulf %209, %213 : vector<10x32xf32>
    %215 = vector.broadcast %194 : vector<1x32xf32> to vector<10x32xf32>
    %216 = arith.mulf %214, %215 : vector<10x32xf32>
    %217 = vector.broadcast %196 : vector<1x32xf32> to vector<10x32xf32>
    %218 = arith.addf %216, %217 : vector<10x32xf32>
    %c1_132 = arith.constant 1 : index
    %c0_133 = arith.constant 0 : index
    %c0_134 = arith.constant 0 : index
    %219 = vector.load %arg6[%c1_132, %c0_133, %c0_134] : memref<2x32x96xf32, #tpu.memory_space<vmem>>, vector<1x32x8xf32>
    %220 = vector.shape_cast %219 : vector<1x32x8xf32> to vector<32x8xf32>
    %cst_135 = arith.constant dense<0.000000e+00> : vector<10x8xf32>
    %221 = tpu.matmul %218, %220, %cst_135 {dimension_numbers = #tpu.dot_dimension_numbers<[1], [0], [0], [1], [0, 0, 1, 1], [], []>} : vector<10x32xf32>, vector<32x8xf32>, vector<10x8xf32> -> vector<10x8xf32>
    %c1_136 = arith.constant 1 : index
    %c0_137 = arith.constant 0 : index
    %c32_138 = arith.constant 32 : index
    %222 = vector.load %arg6[%c1_136, %c0_137, %c32_138] : memref<2x32x96xf32, #tpu.memory_space<vmem>>, vector<1x32x8xf32>
    %223 = vector.shape_cast %222 : vector<1x32x8xf32> to vector<32x8xf32>
    %cst_139 = arith.constant dense<0.000000e+00> : vector<10x8xf32>
    %224 = tpu.matmul %218, %223, %cst_139 {dimension_numbers = #tpu.dot_dimension_numbers<[1], [0], [0], [1], [0, 0, 1, 1], [], []>} : vector<10x32xf32>, vector<32x8xf32>, vector<10x8xf32> -> vector<10x8xf32>
    %c1_140 = arith.constant 1 : index
    %c0_141 = arith.constant 0 : index
    %c64_142 = arith.constant 64 : index
    %225 = vector.load %arg6[%c1_140, %c0_141, %c64_142] : memref<2x32x96xf32, #tpu.memory_space<vmem>>, vector<1x32x8xf32>
    %226 = vector.shape_cast %225 : vector<1x32x8xf32> to vector<32x8xf32>
    %cst_143 = arith.constant dense<0.000000e+00> : vector<10x8xf32>
    %227 = tpu.matmul %218, %226, %cst_143 {dimension_numbers = #tpu.dot_dimension_numbers<[1], [0], [0], [1], [0, 0, 1, 1], [], []>} : vector<10x32xf32>, vector<32x8xf32>, vector<10x8xf32> -> vector<10x8xf32>
    %cst_144 = arith.constant dense<0.000000e+00> : vector<10x10xf32>
    %228 = tpu.matmul %221, %224, %cst_144 {dimension_numbers = #tpu.dot_dimension_numbers<[1], [1], [0], [0], [0, 0, 1, 0], [], []>} : vector<10x8xf32>, vector<10x8xf32>, vector<10x10xf32> -> vector<10x10xf32>
    %229 = arith.addf %228, %5 : vector<10x10xf32>
    %cst_145 = arith.constant dense<0xFF800000> : vector<10xf32>
    %230 = vector.multi_reduction <maximumf>, %229, %cst_145 [1] : vector<10x10xf32> to vector<10xf32>
    %231 = vector.shape_cast %230 : vector<10xf32> to vector<10x1xf32>
    %232 = vector.broadcast %231 : vector<10x1xf32> to vector<10x10xf32>
    %233 = arith.subf %229, %232 : vector<10x10xf32>
    %234 = math.exp %233 : vector<10x10xf32>
    %cst_146 = arith.constant dense<0.000000e+00> : vector<10xf32>
    %235 = vector.multi_reduction <add>, %234, %cst_146 [1] : vector<10x10xf32> to vector<10xf32>
    %236 = vector.shape_cast %235 : vector<10xf32> to vector<10x1xf32>
    %cst_147 = arith.constant 1.000000e+00 : f32
    %237 = vector.broadcast %cst_147 : f32 to vector<10x1xf32>
    %238 = arith.divf %237, %236 : vector<10x1xf32>
    %239 = vector.broadcast %238 : vector<10x1xf32> to vector<10x10xf32>
    %240 = arith.mulf %234, %239 : vector<10x10xf32>
    %cst_148 = arith.constant dense<0.000000e+00> : vector<10x8xf32>
    %241 = tpu.matmul %240, %227, %cst_148 {dimension_numbers = #tpu.dot_dimension_numbers<[1], [0], [0], [1], [0, 0, 1, 1], [], []>} : vector<10x10xf32>, vector<10x8xf32>, vector<10x8xf32> -> vector<10x8xf32>
    %c1_149 = arith.constant 1 : index
    %c0_150 = arith.constant 0 : index
    %c0_151 = arith.constant 0 : index
    %242 = vector.load %arg7[%c1_149, %c0_150, %c0_151] : memref<2x32x32xf32, #tpu.memory_space<vmem>>, vector<1x8x32xf32>
    %243 = vector.shape_cast %242 : vector<1x8x32xf32> to vector<8x32xf32>
    %cst_152 = arith.constant dense<0.000000e+00> : vector<10x32xf32>
    %244 = tpu.matmul %241, %243, %cst_152 {dimension_numbers = #tpu.dot_dimension_numbers<[1], [0], [0], [1], [0, 0, 1, 1], [], []>} : vector<10x8xf32>, vector<8x32xf32>, vector<10x32xf32> -> vector<10x32xf32>
    %245 = arith.addf %192, %244 : vector<10x32xf32>
    %c1_153 = arith.constant 1 : index
    %c0_154 = arith.constant 0 : index
    %c8_155 = arith.constant 8 : index
    %246 = vector.load %arg6[%c1_153, %c0_154, %c8_155] : memref<2x32x96xf32, #tpu.memory_space<vmem>>, vector<1x32x8xf32>
    %247 = vector.shape_cast %246 : vector<1x32x8xf32> to vector<32x8xf32>
    %cst_156 = arith.constant dense<0.000000e+00> : vector<10x8xf32>
    %248 = tpu.matmul %218, %247, %cst_156 {dimension_numbers = #tpu.dot_dimension_numbers<[1], [0], [0], [1], [0, 0, 1, 1], [], []>} : vector<10x32xf32>, vector<32x8xf32>, vector<10x8xf32> -> vector<10x8xf32>
    %c1_157 = arith.constant 1 : index
    %c0_158 = arith.constant 0 : index
    %c40_159 = arith.constant 40 : index
    %249 = vector.load %arg6[%c1_157, %c0_158, %c40_159] : memref<2x32x96xf32, #tpu.memory_space<vmem>>, vector<1x32x8xf32>
    %250 = vector.shape_cast %249 : vector<1x32x8xf32> to vector<32x8xf32>
    %cst_160 = arith.constant dense<0.000000e+00> : vector<10x8xf32>
    %251 = tpu.matmul %218, %250, %cst_160 {dimension_numbers = #tpu.dot_dimension_numbers<[1], [0], [0], [1], [0, 0, 1, 1], [], []>} : vector<10x32xf32>, vector<32x8xf32>, vector<10x8xf32> -> vector<10x8xf32>
    %c1_161 = arith.constant 1 : index
    %c0_162 = arith.constant 0 : index
    %c72_163 = arith.constant 72 : index
    %252 = vector.load %arg6[%c1_161, %c0_162, %c72_163] : memref<2x32x96xf32, #tpu.memory_space<vmem>>, vector<1x32x8xf32>
    %253 = vector.shape_cast %252 : vector<1x32x8xf32> to vector<32x8xf32>
    %cst_164 = arith.constant dense<0.000000e+00> : vector<10x8xf32>
    %254 = tpu.matmul %218, %253, %cst_164 {dimension_numbers = #tpu.dot_dimension_numbers<[1], [0], [0], [1], [0, 0, 1, 1], [], []>} : vector<10x32xf32>, vector<32x8xf32>, vector<10x8xf32> -> vector<10x8xf32>
    %cst_165 = arith.constant dense<0.000000e+00> : vector<10x10xf32>
    %255 = tpu.matmul %248, %251, %cst_165 {dimension_numbers = #tpu.dot_dimension_numbers<[1], [1], [0], [0], [0, 0, 1, 0], [], []>} : vector<10x8xf32>, vector<10x8xf32>, vector<10x10xf32> -> vector<10x10xf32>
    %256 = arith.addf %255, %5 : vector<10x10xf32>
    %cst_166 = arith.constant dense<0xFF800000> : vector<10xf32>
    %257 = vector.multi_reduction <maximumf>, %256, %cst_166 [1] : vector<10x10xf32> to vector<10xf32>
    %258 = vector.shape_cast %257 : vector<10xf32> to vector<10x1xf32>
    %259 = vector.broadcast %258 : vector<10x1xf32> to vector<10x10xf32>
    %260 = arith.subf %256, %259 : vector<10x10xf32>
    %261 = math.exp %260 : vector<10x10xf32>
    %cst_167 = arith.constant dense<0.000000e+00> : vector<10xf32>
    %262 = vector.multi_reduction <add>, %261, %cst_167 [1] : vector<10x10xf32> to vector<10xf32>
    %263 = vector.shape_cast %262 : vector<10xf32> to vector<10x1xf32>
    %cst_168 = arith.constant 1.000000e+00 : f32
    %264 = vector.broadcast %cst_168 : f32 to vector<10x1xf32>
    %265 = arith.divf %264, %263 : vector<10x1xf32>
    %266 = vector.broadcast %265 : vector<10x1xf32> to vector<10x10xf32>
    %267 = arith.mulf %261, %266 : vector<10x10xf32>
    %cst_169 = arith.constant dense<0.000000e+00> : vector<10x8xf32>
    %268 = tpu.matmul %267, %254, %cst_169 {dimension_numbers = #tpu.dot_dimension_numbers<[1], [0], [0], [1], [0, 0, 1, 1], [], []>} : vector<10x10xf32>, vector<10x8xf32>, vector<10x8xf32> -> vector<10x8xf32>
    %c1_170 = arith.constant 1 : index
    %c8_171 = arith.constant 8 : index
    %c0_172 = arith.constant 0 : index
    %269 = vector.load %arg7[%c1_170, %c8_171, %c0_172] : memref<2x32x32xf32, #tpu.memory_space<vmem>>, vector<1x8x32xf32>
    %270 = vector.shape_cast %269 : vector<1x8x32xf32> to vector<8x32xf32>
    %cst_173 = arith.constant dense<0.000000e+00> : vector<10x32xf32>
    %271 = tpu.matmul %268, %270, %cst_173 {dimension_numbers = #tpu.dot_dimension_numbers<[1], [0], [0], [1], [0, 0, 1, 1], [], []>} : vector<10x8xf32>, vector<8x32xf32>, vector<10x32xf32> -> vector<10x32xf32>
    %272 = arith.addf %245, %271 : vector<10x32xf32>
    %c1_174 = arith.constant 1 : index
    %c0_175 = arith.constant 0 : index
    %c16_176 = arith.constant 16 : index
    %273 = vector.load %arg6[%c1_174, %c0_175, %c16_176] : memref<2x32x96xf32, #tpu.memory_space<vmem>>, vector<1x32x8xf32>
    %274 = vector.shape_cast %273 : vector<1x32x8xf32> to vector<32x8xf32>
    %cst_177 = arith.constant dense<0.000000e+00> : vector<10x8xf32>
    %275 = tpu.matmul %218, %274, %cst_177 {dimension_numbers = #tpu.dot_dimension_numbers<[1], [0], [0], [1], [0, 0, 1, 1], [], []>} : vector<10x32xf32>, vector<32x8xf32>, vector<10x8xf32> -> vector<10x8xf32>
    %c1_178 = arith.constant 1 : index
    %c0_179 = arith.constant 0 : index
    %c48_180 = arith.constant 48 : index
    %276 = vector.load %arg6[%c1_178, %c0_179, %c48_180] : memref<2x32x96xf32, #tpu.memory_space<vmem>>, vector<1x32x8xf32>
    %277 = vector.shape_cast %276 : vector<1x32x8xf32> to vector<32x8xf32>
    %cst_181 = arith.constant dense<0.000000e+00> : vector<10x8xf32>
    %278 = tpu.matmul %218, %277, %cst_181 {dimension_numbers = #tpu.dot_dimension_numbers<[1], [0], [0], [1], [0, 0, 1, 1], [], []>} : vector<10x32xf32>, vector<32x8xf32>, vector<10x8xf32> -> vector<10x8xf32>
    %c1_182 = arith.constant 1 : index
    %c0_183 = arith.constant 0 : index
    %c80_184 = arith.constant 80 : index
    %279 = vector.load %arg6[%c1_182, %c0_183, %c80_184] : memref<2x32x96xf32, #tpu.memory_space<vmem>>, vector<1x32x8xf32>
    %280 = vector.shape_cast %279 : vector<1x32x8xf32> to vector<32x8xf32>
    %cst_185 = arith.constant dense<0.000000e+00> : vector<10x8xf32>
    %281 = tpu.matmul %218, %280, %cst_185 {dimension_numbers = #tpu.dot_dimension_numbers<[1], [0], [0], [1], [0, 0, 1, 1], [], []>} : vector<10x32xf32>, vector<32x8xf32>, vector<10x8xf32> -> vector<10x8xf32>
    %cst_186 = arith.constant dense<0.000000e+00> : vector<10x10xf32>
    %282 = tpu.matmul %275, %278, %cst_186 {dimension_numbers = #tpu.dot_dimension_numbers<[1], [1], [0], [0], [0, 0, 1, 0], [], []>} : vector<10x8xf32>, vector<10x8xf32>, vector<10x10xf32> -> vector<10x10xf32>
    %283 = arith.addf %282, %5 : vector<10x10xf32>
    %cst_187 = arith.constant dense<0xFF800000> : vector<10xf32>
    %284 = vector.multi_reduction <maximumf>, %283, %cst_187 [1] : vector<10x10xf32> to vector<10xf32>
    %285 = vector.shape_cast %284 : vector<10xf32> to vector<10x1xf32>
    %286 = vector.broadcast %285 : vector<10x1xf32> to vector<10x10xf32>
    %287 = arith.subf %283, %286 : vector<10x10xf32>
    %288 = math.exp %287 : vector<10x10xf32>
    %cst_188 = arith.constant dense<0.000000e+00> : vector<10xf32>
    %289 = vector.multi_reduction <add>, %288, %cst_188 [1] : vector<10x10xf32> to vector<10xf32>
    %290 = vector.shape_cast %289 : vector<10xf32> to vector<10x1xf32>
    %cst_189 = arith.constant 1.000000e+00 : f32
    %291 = vector.broadcast %cst_189 : f32 to vector<10x1xf32>
    %292 = arith.divf %291, %290 : vector<10x1xf32>
    %293 = vector.broadcast %292 : vector<10x1xf32> to vector<10x10xf32>
    %294 = arith.mulf %288, %293 : vector<10x10xf32>
    %cst_190 = arith.constant dense<0.000000e+00> : vector<10x8xf32>
    %295 = tpu.matmul %294, %281, %cst_190 {dimension_numbers = #tpu.dot_dimension_numbers<[1], [0], [0], [1], [0, 0, 1, 1], [], []>} : vector<10x10xf32>, vector<10x8xf32>, vector<10x8xf32> -> vector<10x8xf32>
    %c1_191 = arith.constant 1 : index
    %c16_192 = arith.constant 16 : index
    %c0_193 = arith.constant 0 : index
    %296 = vector.load %arg7[%c1_191, %c16_192, %c0_193] : memref<2x32x32xf32, #tpu.memory_space<vmem>>, vector<1x8x32xf32>
    %297 = vector.shape_cast %296 : vector<1x8x32xf32> to vector<8x32xf32>
    %cst_194 = arith.constant dense<0.000000e+00> : vector<10x32xf32>
    %298 = tpu.matmul %295, %297, %cst_194 {dimension_numbers = #tpu.dot_dimension_numbers<[1], [0], [0], [1], [0, 0, 1, 1], [], []>} : vector<10x8xf32>, vector<8x32xf32>, vector<10x32xf32> -> vector<10x32xf32>
    %299 = arith.addf %272, %298 : vector<10x32xf32>
    %c1_195 = arith.constant 1 : index
    %c0_196 = arith.constant 0 : index
    %c24_197 = arith.constant 24 : index
    %300 = vector.load %arg6[%c1_195, %c0_196, %c24_197] : memref<2x32x96xf32, #tpu.memory_space<vmem>>, vector<1x32x8xf32>
    %301 = vector.shape_cast %300 : vector<1x32x8xf32> to vector<32x8xf32>
    %cst_198 = arith.constant dense<0.000000e+00> : vector<10x8xf32>
    %302 = tpu.matmul %218, %301, %cst_198 {dimension_numbers = #tpu.dot_dimension_numbers<[1], [0], [0], [1], [0, 0, 1, 1], [], []>} : vector<10x32xf32>, vector<32x8xf32>, vector<10x8xf32> -> vector<10x8xf32>
    %c1_199 = arith.constant 1 : index
    %c0_200 = arith.constant 0 : index
    %c56_201 = arith.constant 56 : index
    %303 = vector.load %arg6[%c1_199, %c0_200, %c56_201] : memref<2x32x96xf32, #tpu.memory_space<vmem>>, vector<1x32x8xf32>
    %304 = vector.shape_cast %303 : vector<1x32x8xf32> to vector<32x8xf32>
    %cst_202 = arith.constant dense<0.000000e+00> : vector<10x8xf32>
    %305 = tpu.matmul %218, %304, %cst_202 {dimension_numbers = #tpu.dot_dimension_numbers<[1], [0], [0], [1], [0, 0, 1, 1], [], []>} : vector<10x32xf32>, vector<32x8xf32>, vector<10x8xf32> -> vector<10x8xf32>
    %c1_203 = arith.constant 1 : index
    %c0_204 = arith.constant 0 : index
    %c88_205 = arith.constant 88 : index
    %306 = vector.load %arg6[%c1_203, %c0_204, %c88_205] : memref<2x32x96xf32, #tpu.memory_space<vmem>>, vector<1x32x8xf32>
    %307 = vector.shape_cast %306 : vector<1x32x8xf32> to vector<32x8xf32>
    %cst_206 = arith.constant dense<0.000000e+00> : vector<10x8xf32>
    %308 = tpu.matmul %218, %307, %cst_206 {dimension_numbers = #tpu.dot_dimension_numbers<[1], [0], [0], [1], [0, 0, 1, 1], [], []>} : vector<10x32xf32>, vector<32x8xf32>, vector<10x8xf32> -> vector<10x8xf32>
    %cst_207 = arith.constant dense<0.000000e+00> : vector<10x10xf32>
    %309 = tpu.matmul %302, %305, %cst_207 {dimension_numbers = #tpu.dot_dimension_numbers<[1], [1], [0], [0], [0, 0, 1, 0], [], []>} : vector<10x8xf32>, vector<10x8xf32>, vector<10x10xf32> -> vector<10x10xf32>
    %310 = arith.addf %309, %5 : vector<10x10xf32>
    %cst_208 = arith.constant dense<0xFF800000> : vector<10xf32>
    %311 = vector.multi_reduction <maximumf>, %310, %cst_208 [1] : vector<10x10xf32> to vector<10xf32>
    %312 = vector.shape_cast %311 : vector<10xf32> to vector<10x1xf32>
    %313 = vector.broadcast %312 : vector<10x1xf32> to vector<10x10xf32>
    %314 = arith.subf %310, %313 : vector<10x10xf32>
    %315 = math.exp %314 : vector<10x10xf32>
    %cst_209 = arith.constant dense<0.000000e+00> : vector<10xf32>
    %316 = vector.multi_reduction <add>, %315, %cst_209 [1] : vector<10x10xf32> to vector<10xf32>
    %317 = vector.shape_cast %316 : vector<10xf32> to vector<10x1xf32>
    %cst_210 = arith.constant 1.000000e+00 : f32
    %318 = vector.broadcast %cst_210 : f32 to vector<10x1xf32>
    %319 = arith.divf %318, %317 : vector<10x1xf32>
    %320 = vector.broadcast %319 : vector<10x1xf32> to vector<10x10xf32>
    %321 = arith.mulf %315, %320 : vector<10x10xf32>
    %cst_211 = arith.constant dense<0.000000e+00> : vector<10x8xf32>
    %322 = tpu.matmul %321, %308, %cst_211 {dimension_numbers = #tpu.dot_dimension_numbers<[1], [0], [0], [1], [0, 0, 1, 1], [], []>} : vector<10x10xf32>, vector<10x8xf32>, vector<10x8xf32> -> vector<10x8xf32>
    %c1_212 = arith.constant 1 : index
    %c24_213 = arith.constant 24 : index
    %c0_214 = arith.constant 0 : index
    %323 = vector.load %arg7[%c1_212, %c24_213, %c0_214] : memref<2x32x32xf32, #tpu.memory_space<vmem>>, vector<1x8x32xf32>
    %324 = vector.shape_cast %323 : vector<1x8x32xf32> to vector<8x32xf32>
    %cst_215 = arith.constant dense<0.000000e+00> : vector<10x32xf32>
    %325 = tpu.matmul %322, %324, %cst_215 {dimension_numbers = #tpu.dot_dimension_numbers<[1], [0], [0], [1], [0, 0, 1, 1], [], []>} : vector<10x8xf32>, vector<8x32xf32>, vector<10x32xf32> -> vector<10x32xf32>
    %326 = arith.addf %299, %325 : vector<10x32xf32>
    %c1_216 = arith.constant 1 : index
    %c0_217 = arith.constant 0 : index
    %c0_218 = arith.constant 0 : index
    %327 = vector.load %arg8[%c1_216, %c0_217, %c0_218] : memref<2x1x32xf32, #tpu.memory_space<vmem>>, vector<1x1x32xf32>
    %328 = vector.shape_cast %327 : vector<1x1x32xf32> to vector<1x32xf32>
    %329 = vector.broadcast %328 : vector<1x32xf32> to vector<10x32xf32>
    %330 = arith.addf %326, %329 : vector<10x32xf32>
    %c1_219 = arith.constant 1 : index
    %c0_220 = arith.constant 0 : index
    %c0_221 = arith.constant 0 : index
    %331 = vector.load %arg9[%c1_219, %c0_220, %c0_221] : memref<2x1x32xf32, #tpu.memory_space<vmem>>, vector<1x1x32xf32>
    %332 = vector.shape_cast %331 : vector<1x1x32xf32> to vector<1x32xf32>
    %c1_222 = arith.constant 1 : index
    %c0_223 = arith.constant 0 : index
    %c0_224 = arith.constant 0 : index
    %333 = vector.load %arg10[%c1_222, %c0_223, %c0_224] : memref<2x1x32xf32, #tpu.memory_space<vmem>>, vector<1x1x32xf32>
    %334 = vector.shape_cast %333 : vector<1x1x32xf32> to vector<1x32xf32>
    %cst_225 = arith.constant dense<0.000000e+00> : vector<10xf32>
    %335 = vector.multi_reduction <add>, %330, %cst_225 [1] : vector<10x32xf32> to vector<10xf32>
    %336 = vector.shape_cast %335 : vector<10xf32> to vector<10x1xf32>
    %cst_226 = arith.constant 3.200000e+01 : f32
    %337 = vector.broadcast %cst_226 : f32 to vector<10x1xf32>
    %338 = arith.divf %336, %337 : vector<10x1xf32>
    %339 = vector.broadcast %338 : vector<10x1xf32> to vector<10x32xf32>
    %340 = arith.subf %330, %339 : vector<10x32xf32>
    %341 = arith.mulf %340, %340 : vector<10x32xf32>
    %cst_227 = arith.constant dense<0.000000e+00> : vector<10xf32>
    %342 = vector.multi_reduction <add>, %341, %cst_227 [1] : vector<10x32xf32> to vector<10xf32>
    %343 = vector.shape_cast %342 : vector<10xf32> to vector<10x1xf32>
    %cst_228 = arith.constant 3.200000e+01 : f32
    %344 = vector.broadcast %cst_228 : f32 to vector<10x1xf32>
    %345 = arith.divf %343, %344 : vector<10x1xf32>
    %346 = vector.broadcast %338 : vector<10x1xf32> to vector<10x32xf32>
    %347 = arith.subf %330, %346 : vector<10x32xf32>
    %cst_229 = arith.constant 9.99999974E-6 : f32
    %348 = vector.broadcast %cst_229 : f32 to vector<10x1xf32>
    %349 = arith.addf %345, %348 : vector<10x1xf32>
    %350 = math.rsqrt %349 : vector<10x1xf32>
    %351 = vector.broadcast %350 : vector<10x1xf32> to vector<10x32xf32>
    %352 = arith.mulf %347, %351 : vector<10x32xf32>
    %353 = vector.broadcast %332 : vector<1x32xf32> to vector<10x32xf32>
    %354 = arith.mulf %352, %353 : vector<10x32xf32>
    %355 = vector.broadcast %334 : vector<1x32xf32> to vector<10x32xf32>
    %356 = arith.addf %354, %355 : vector<10x32xf32>
    %c1_230 = arith.constant 1 : index
    %c0_231 = arith.constant 0 : index
    %c0_232 = arith.constant 0 : index
    %357 = vector.load %arg11[%c1_230, %c0_231, %c0_232] : memref<2x32x128xf32, #tpu.memory_space<vmem>>, vector<1x32x128xf32>
    %358 = vector.shape_cast %357 : vector<1x32x128xf32> to vector<32x128xf32>
    %cst_233 = arith.constant dense<0.000000e+00> : vector<10x128xf32>
    %359 = tpu.matmul %356, %358, %cst_233 {dimension_numbers = #tpu.dot_dimension_numbers<[1], [0], [0], [1], [0, 0, 1, 1], [], []>} : vector<10x32xf32>, vector<32x128xf32>, vector<10x128xf32> -> vector<10x128xf32>
    %c1_234 = arith.constant 1 : index
    %c0_235 = arith.constant 0 : index
    %c0_236 = arith.constant 0 : index
    %360 = vector.load %arg12[%c1_234, %c0_235, %c0_236] : memref<2x1x128xf32, #tpu.memory_space<vmem>>, vector<1x1x128xf32>
    %361 = vector.shape_cast %360 : vector<1x1x128xf32> to vector<1x128xf32>
    %362 = vector.broadcast %361 : vector<1x128xf32> to vector<10x128xf32>
    %363 = arith.addf %359, %362 : vector<10x128xf32>
    %cst_237 = arith.constant 5.000000e-01 : f32
    %364 = vector.broadcast %cst_237 : f32 to vector<10x128xf32>
    %365 = arith.mulf %364, %363 : vector<10x128xf32>
    %cst_238 = arith.constant 0.707106769 : f32
    %366 = vector.broadcast %cst_238 : f32 to vector<10x128xf32>
    %367 = arith.mulf %363, %366 : vector<10x128xf32>
    %368 = math.erf %367 : vector<10x128xf32>
    %cst_239 = arith.constant 1.000000e+00 : f32
    %369 = vector.broadcast %cst_239 : f32 to vector<10x128xf32>
    %370 = arith.addf %369, %368 : vector<10x128xf32>
    %371 = arith.mulf %365, %370 : vector<10x128xf32>
    %c1_240 = arith.constant 1 : index
    %c0_241 = arith.constant 0 : index
    %c0_242 = arith.constant 0 : index
    %372 = vector.load %arg13[%c1_240, %c0_241, %c0_242] : memref<2x128x32xf32, #tpu.memory_space<vmem>>, vector<1x128x32xf32>
    %373 = vector.shape_cast %372 : vector<1x128x32xf32> to vector<128x32xf32>
    %cst_243 = arith.constant dense<0.000000e+00> : vector<10x32xf32>
    %374 = tpu.matmul %371, %373, %cst_243 {dimension_numbers = #tpu.dot_dimension_numbers<[1], [0], [0], [1], [0, 0, 1, 1], [], []>} : vector<10x128xf32>, vector<128x32xf32>, vector<10x32xf32> -> vector<10x32xf32>
    %375 = arith.addf %330, %374 : vector<10x32xf32>
    %c1_244 = arith.constant 1 : index
    %c0_245 = arith.constant 0 : index
    %c0_246 = arith.constant 0 : index
    %376 = vector.load %arg14[%c1_244, %c0_245, %c0_246] : memref<2x1x32xf32, #tpu.memory_space<vmem>>, vector<1x1x32xf32>
    %377 = vector.shape_cast %376 : vector<1x1x32xf32> to vector<1x32xf32>
    %378 = vector.broadcast %377 : vector<1x32xf32> to vector<10x32xf32>
    %379 = arith.addf %375, %378 : vector<10x32xf32>
    %c0_247 = arith.constant 0 : index
    %c0_248 = arith.constant 0 : index
    %380 = vector.load %arg15[%c0_247, %c0_248] : memref<10x32xf32, #tpu.memory_space<vmem>>, vector<10x32xf32>
    tpu.vector_store %arg15[%c0_247, %c0_248], %379 {strides = array<i32>} : memref<10x32xf32, #tpu.memory_space<vmem>>, vector<10x32xf32>,
    return
  }
}

</mosaic_0001>

<llo_original>
// kernel: tpu_custom_call.1
$region0: #{tpu_custom_call.1}
  #allocation0 [shape = 'u32[]', space=smem, size = 0x4, offset = 0x4, fixed_abs, tag = 'smem constant byte address 0x4 - core index']
  #allocation1 [shape = 'u32[144,128]{1,0:T(1,128)}', space=vmem, size = 0x12000, scoped, tag = 'internal scratch']
  %s0 = inlined_call_operand.vmem [shape: f32[10,2], index: 0, kind: input, shape index: {}]
  %s1 = inlined_call_operand.vmem [shape: f32[10,32], index: 1, kind: input, shape index: {}]
  %s2 = inlined_call_operand.vmem [shape: f32[10,10], index: 2, kind: input, shape index: {}]
  %s3 = inlined_call_operand.vmem [shape: f32[2,32], index: 3, kind: input, shape index: {}]
  %s4 = inlined_call_operand.vmem [shape: f32[2,1,32], index: 4, kind: input, shape index: {}]
  %s5 = inlined_call_operand.vmem [shape: f32[2,1,32], index: 5, kind: input, shape index: {}]
  %s6 = inlined_call_operand.vmem [shape: f32[2,32,96], index: 6, kind: input, shape index: {}]
  %s7 = inlined_call_operand.vmem [shape: f32[2,32,32], index: 7, kind: input, shape index: {}]
  %s8 = inlined_call_operand.vmem [shape: f32[2,1,32], index: 8, kind: input, shape index: {}]
  %s9 = inlined_call_operand.vmem [shape: f32[2,1,32], index: 9, kind: input, shape index: {}]
  %s10 = inlined_call_operand.vmem [shape: f32[2,1,32], index: 10, kind: input, shape index: {}]
  %s11 = inlined_call_operand.vmem [shape: f32[2,32,128], index: 11, kind: input, shape index: {}]
  %s12 = inlined_call_operand.vmem [shape: f32[2,1,128], index: 12, kind: input, shape index: {}]
  %s13 = inlined_call_operand.vmem [shape: f32[2,128,32], index: 13, kind: input, shape index: {}]
  %s14 = inlined_call_operand.vmem [shape: f32[2,1,32], index: 14, kind: input, shape index: {}]
  %s15 = inlined_call_operand.hbm [shape: f32[10,32], index: 15, kind: output, shape index: {}]
  %s16 = sld [smem:[#allocation0]]
  $region70: #{tpu_custom_call.1} parent=0
    _
  %s18 = ssub.s32 1, %s16
  %s19 = scalar_select 0, %s18, %s16
  $region1: #{tpu_custom_call.1} parent=0
    #allocation2 [shape = 'u8[8192]{0}', space=vmem, size = 0x2000, scoped, tag = 'output window, operand 0, single buffered']
    #allocation3 [shape = 's32[1]{0}', space=sflag, size = 0x4, scoped, tag = 'scoped memory for tpu_custom_call.1']
    %20 = vsyncpa [#allocation3], 0
    // Predicated region
    $region2: #{tpu_custom_call.1} parent=1 // pred_check
      _
    $region3: #{tpu_custom_call.1} parent=1 // pred_check_branch
      %22 = sbr.rel (0) target = $region5
    $region4: #{tpu_custom_call.1} parent=1 // pred_region
      _
    $region5: #{tpu_custom_call.1} parent=1 // pred_fallthru
      _
    // Predicated region
    $region6: #{tpu_custom_call.1} parent=1 // pred_check
      _
    $region7: #{tpu_custom_call.1} parent=1 // pred_check_branch
      %24 = sbr.rel (0) target = $region9
    $region8: #{tpu_custom_call.1} parent=1 // pred_region
      _
    $region9: #{tpu_custom_call.1} parent=1 // pred_fallthru
      _
    // Predicated region
    $region10: #{tpu_custom_call.1} parent=1 // pred_check
      _
    $region11: #{tpu_custom_call.1} parent=1 // pred_check_branch
      %26 = sbr.rel (0) target = $region13
    $region12: #{tpu_custom_call.1} parent=1 // pred_region
      _
    $region13: #{tpu_custom_call.1} parent=1 // pred_fallthru
      _
    // Predicated region
    $region14: #{tpu_custom_call.1} parent=1 // pred_check
      _
    $region15: #{tpu_custom_call.1} parent=1 // pred_check_branch
      %28 = sbr.rel (0) target = $region17
    $region16: #{tpu_custom_call.1} parent=1 // pred_region
      _
    $region17: #{tpu_custom_call.1} parent=1 // pred_fallthru
      _
    // Predicated region
    $region18: #{tpu_custom_call.1} parent=1 // pred_check
      _
    $region19: #{tpu_custom_call.1} parent=1 // pred_check_branch
      %30 = sbr.rel (0) target = $region21
    $region20: #{tpu_custom_call.1} parent=1 // pred_region
      _
    $region21: #{tpu_custom_call.1} parent=1 // pred_fallthru
      _
    // Predicated region
    $region22: #{tpu_custom_call.1} parent=1 // pred_check
      _
    $region23: #{tpu_custom_call.1} parent=1 // pred_check_branch
      %32 = sbr.rel (0) target = $region25
    $region24: #{tpu_custom_call.1} parent=1 // pred_region
      _
    $region25: #{tpu_custom_call.1} parent=1 // pred_fallthru
      _
    // Predicated region
    $region26: #{tpu_custom_call.1} parent=1 // pred_check
      _
    $region27: #{tpu_custom_call.1} parent=1 // pred_check_branch
      %34 = sbr.rel (0) target = $region29
    $region28: #{tpu_custom_call.1} parent=1 // pred_region
      _
    $region29: #{tpu_custom_call.1} parent=1 // pred_fallthru
      _
    // Predicated region
    $region30: #{tpu_custom_call.1} parent=1 // pred_check
      _
    $region31: #{tpu_custom_call.1} parent=1 // pred_check_branch
      %36 = sbr.rel (0) target = $region33
    $region32: #{tpu_custom_call.1} parent=1 // pred_region
      _
    $region33: #{tpu_custom_call.1} parent=1 // pred_fallthru
      _
    // Predicated region
    $region34: #{tpu_custom_call.1} parent=1 // pred_check
      _
    $region35: #{tpu_custom_call.1} parent=1 // pred_check_branch
      %38 = sbr.rel (0) target = $region37
    $region36: #{tpu_custom_call.1} parent=1 // pred_region
      _
    $region37: #{tpu_custom_call.1} parent=1 // pred_fallthru
      _
    // Predicated region
    $region38: #{tpu_custom_call.1} parent=1 // pred_check
      _
    $region39: #{tpu_custom_call.1} parent=1 // pred_check_branch
      %40 = sbr.rel (0) target = $region41
    $region40: #{tpu_custom_call.1} parent=1 // pred_region
      _
    $region41: #{tpu_custom_call.1} parent=1 // pred_fallthru
      _
    // Predicated region
    $region42: #{tpu_custom_call.1} parent=1 // pred_check
      _
    $region43: #{tpu_custom_call.1} parent=1 // pred_check_branch
      %42 = sbr.rel (0) target = $region45
    $region44: #{tpu_custom_call.1} parent=1 // pred_region
      _
    $region45: #{tpu_custom_call.1} parent=1 // pred_fallthru
      _
    // Predicated region
    $region46: #{tpu_custom_call.1} parent=1 // pred_check
      _
    $region47: #{tpu_custom_call.1} parent=1 // pred_check_branch
      %44 = sbr.rel (0) target = $region49
    $region48: #{tpu_custom_call.1} parent=1 // pred_region
      _
    $region49: #{tpu_custom_call.1} parent=1 // pred_fallthru
      _
    // Predicated region
    $region50: #{tpu_custom_call.1} parent=1 // pred_check
      _
    $region51: #{tpu_custom_call.1} parent=1 // pred_check_branch
      %46 = sbr.rel (0) target = $region53
    $region52: #{tpu_custom_call.1} parent=1 // pred_region
      _
    $region53: #{tpu_custom_call.1} parent=1 // pred_fallthru
      _
    // Predicated region
    $region54: #{tpu_custom_call.1} parent=1 // pred_check
      _
    $region55: #{tpu_custom_call.1} parent=1 // pred_check_branch
      %48 = sbr.rel (0) target = $region57
    $region56: #{tpu_custom_call.1} parent=1 // pred_region
      _
    $region57: #{tpu_custom_call.1} parent=1 // pred_fallthru
      _
    // Predicated region
    $region58: #{tpu_custom_call.1} parent=1 // pred_check
      _
    $region59: #{tpu_custom_call.1} parent=1 // pred_check_branch
      %50 = sbr.rel (0) target = $region61
    $region60: #{tpu_custom_call.1} parent=1 // pred_region
      _
    $region61: #{tpu_custom_call.1} parent=1 // pred_fallthru
      _
    %v51 = vld [vmem:[%s0] sm:$0xff]
    %v52 = vld [vmem:[%s0 + $0x8] sm:$0x3]
    %v53 = vld [vmem:[%s3] sm:$0x3]
    %v54 = vld [vmem:[%s1] sm:$0xff]
    %v55 = vld [vmem:[%s1 + $0x8] sm:$0x3]
    %vm56 = vcmask 15360
    %v58 = vsel %vm56, %v51, 0
    %v61 = vsel %vm56, %v52, 0
    %vm63 = vcmask 1041408
    %v65 = vsel %vm63, %v53, 0
    %67 = vmatprep.subr.mxu0 0.0
    %68 = vmatpush1.msra.mxu0 %v65
    %69 = vmatprep.subr.mxu0 0.0
    %70 = vmatpush1.msra.mxu0 0.0
    %71 = vmatprep.subr.mxu0 0.0
    %72 = vmatpush1.msra.mxu0 0.0
    %73 = vmatprep.subr.mxu0 0.0
    %74 = vmatpush1.msra.mxu0 0.0
    %75 = vmatprep.subr.mxu0 0.0
    %76 = vmatpush1.msra.mxu0 0.0
    %77 = vmatprep.subr.mxu0 0.0
    %78 = vmatpush1.msra.mxu0 0.0
    %79 = vmatprep.subr.mxu0 0.0
    %80 = vmatpush1.msra.mxu0 0.0
    %81 = vmatprep.subr.mxu0 0.0
    %82 = vmatpush1.msra.mxu0 0.0
    %83 = vmatprep.subr.mxu0 0.0
    %84 = vmatpush1.msra.mxu0 0.0
    %85 = vmatprep.subr.mxu0 0.0
    %86 = vmatpush1.msra.mxu0 0.0
    %87 = vmatprep.subr.mxu0 0.0
    %88 = vmatpush1.msra.mxu0 0.0
    %89 = vmatprep.subr.mxu0 0.0
    %90 = vmatpush1.msra.mxu0 0.0
    %91 = vmatprep.subr.mxu0 0.0
    %92 = vmatpush1.msra.mxu0 0.0
    %93 = vmatprep.subr.mxu0 0.0
    %94 = vmatpush1.msra.mxu0 0.0
    %95 = vmatprep.subr.mxu0 0.0
    %96 = vmatpush1.msra.mxu0 0.0
    %97 = vmatprep.subr.mxu0 0.0
    %98 = vmatpush1.msra.mxu0 0.0
    %99 = vmatprep.subr.mxu0 0.0
    %100 = vmatpush1.msra.mxu0 0.0
    %101 = vmatprep.subr.mxu0 0.0
    %102 = vmatpush1.msra.mxu0 0.0
    %103 = vmatprep.subr.mxu0 0.0
    %104 = vmatpush1.msra.mxu0 0.0
    %105 = vmatprep.subr.mxu0 0.0
    %106 = vmatpush1.msra.mxu0 0.0
    %107 = vmatprep.subr.mxu0 0.0
    %108 = vmatpush1.msra.mxu0 0.0
    %109 = vmatprep.subr.mxu0 0.0
    %110 = vmatpush1.msra.mxu0 0.0
    %111 = vmatprep.subr.mxu0 0.0
    %112 = vmatpush1.msra.mxu0 0.0
    %113 = vmatprep.subr.mxu0 0.0
    %114 = vmatpush1.msra.mxu0 0.0
    %115 = vmatprep.subr.mxu0 0.0
    %116 = vmatpush1.msra.mxu0 0.0
    %117 = vmatprep.subr.mxu0 0.0
    %118 = vmatpush1.msra.mxu0 0.0
    %119 = vmatprep.subr.mxu0 0.0
    %120 = vmatpush1.msra.mxu0 0.0
    %121 = vmatprep.subr.mxu0 0.0
    %122 = vmatpush1.msra.mxu0 0.0
    %123 = vmatprep.subr.mxu0 0.0
    %124 = vmatpush1.msra.mxu0 0.0
    %125 = vmatprep.subr.mxu0 0.0
    %126 = vmatpush1.msra.mxu0 0.0
    %127 = vmatprep.subr.mxu0 0.0
    %128 = vmatpush1.msra.mxu0 0.0
    %129 = vmatprep.subr.mxu0 0.0
    %130 = vmatpush1.msra.mxu0 0.0
    %131 = vmatprep.mubr.f32.mxu0 0.0
    %132 = vmatmul.mubr.f32.gmra.mrb[0].mxu0 %v58
    %v133 = vpop.f32.mrb[0].mxu0
    %v134 = vadd.f32 %v54, %v133
    %v135 = vpop.f32.mrb[0].mxu0
    %136 = vmatprep.mubr.f32.mxu0 0.0
    %137 = vmatmul.mubr.f32.gmra.mrb[0].mxu0 %v61
    %v138 = vpop.f32.mrb[0].mxu0
    %v139 = vadd.f32 %v55, %v138
    %v140 = vpop.f32.mrb[0].mxu0
    %141 = vdwg.mxu0
    %v142 = vld [vmem:[%s2] sm:$0xff]
    %v143 = vld [vmem:[%s2 + $0x8] sm:$0x3]
    %v144 = vld [vmem:[%s4] sm:$0x1]
    %v145 = vld [vmem:[%s5] sm:$0x1]
    %vm146 = vcmask 261120
    %v147 = vsel %vm146, %v134, 0.0
    %148 = vadd.xlane.f32.xlu0 %v147
    %v149 = vpop.xlane.xlu0 %148
    %vm150 = vcmask 254976
    %v151 = vsel %vm150, %v139, 0.0
    %152 = vadd.xlane.f32.xlu0 %v151
    %v153 = vpop.xlane.xlu0 %152
    %v154 = vrcp.pop 32.0
    %v155 = vmul.f32 %v149, %v154
    %v156 = vmul.f32 %v153, %v154
    %v157 = vsub.f32 %v134, %v155
    %v158 = vsub.f32 %v139, %v156
    %v159 = vmul.f32 %v157, %v157
    %v160 = vmul.f32 %v158, %v158
    %v161 = vsel %vm146, %v159, 0.0
    %162 = vadd.xlane.f32.xlu0 %v161
    %v163 = vpop.xlane.xlu0 %162
    %v164 = vsel %vm150, %v160, 0.0
    %165 = vadd.xlane.f32.xlu0 %v164
    %v166 = vpop.xlane.xlu0 %165
    %v167 = vmul.f32 %v163, %v154
    %v168 = vmul.f32 %v166, %v154
    %v169 = vadd.f32 %v167, 1e-05
    %v170 = vadd.f32 %v168, 1e-05
    %v171 = vrsqrt.pop %v169
    %v172 = vrsqrt.pop %v170
    %v173 = vmul.f32 %v157, %v171
    %v174 = vmul.f32 %v158, %v172
    %v176 = vlaneseq
    %v177 = vshrl.u32 %v176, 7
    %v178 = vsub.s32 0, %v177
    %v179 = vrot.slane %v144, %v178
    %v181 = vmul.f32 %v173, %v179
    %v182 = vmul.f32 %v174, %v179
    %v184 = vlaneseq
    %v185 = vshrl.u32 %v184, 7
    %v186 = vsub.s32 0, %v185
    %v187 = vrot.slane %v145, %v186
    %v189 = vadd.f32 %v181, %v187
    %v190 = vadd.f32 %v182, %v187
    %v191 = vld [vmem:[%s6] sm:$0xff]
    %v192 = vld [vmem:[%s6 + $0x8] sm:$0xff]
    %v193 = vld [vmem:[%s6 + $0x10] sm:$0xff]
    %v194 = vld [vmem:[%s6 + $0x18] sm:$0xff]
    %v196 = vsel %vm146, %v189, 0
    %v199 = vsel %vm146, %v190, 0
    %201 = vmatprep.subr.mxu0 0.0
    %202 = vmatpush1.msra.mxu0 %v191
    %203 = vmatprep.subr.mxu0 0.0
    %204 = vmatpush1.msra.mxu0 %v192
    %205 = vmatprep.subr.mxu0 0.0
    %206 = vmatpush1.msra.mxu0 %v193
    %207 = vmatprep.subr.mxu0 0.0
    %208 = vmatpush1.msra.mxu0 %v194
    %209 = vmatprep.subr.mxu0 0.0
    %210 = vmatpush1.msra.mxu0 0.0
    %211 = vmatprep.subr.mxu0 0.0
    %212 = vmatpush1.msra.mxu0 0.0
    %213 = vmatprep.subr.mxu0 0.0
    %214 = vmatpush1.msra.mxu0 0.0
    %215 = vmatprep.subr.mxu0 0.0
    %216 = vmatpush1.msra.mxu0 0.0
    %217 = vmatprep.subr.mxu0 0.0
    %218 = vmatpush1.msra.mxu0 0.0
    %219 = vmatprep.subr.mxu0 0.0
    %220 = vmatpush1.msra.mxu0 0.0
    %221 = vmatprep.subr.mxu0 0.0
    %222 = vmatpush1.msra.mxu0 0.0
    %223 = vmatprep.subr.mxu0 0.0
    %224 = vmatpush1.msra.mxu0 0.0
    %225 = vmatprep.subr.mxu0 0.0
    %226 = vmatpush1.msra.mxu0 0.0
    %227 = vmatprep.subr.mxu0 0.0
    %228 = vmatpush1.msra.mxu0 0.0
    %229 = vmatprep.subr.mxu0 0.0
    %230 = vmatpush1.msra.mxu0 0.0
    %231 = vmatprep.subr.mxu0 0.0
    %232 = vmatpush1.msra.mxu0 0.0
    %233 = vmatprep.subr.mxu0 0.0
    %234 = vmatpush1.msra.mxu0 0.0
    %235 = vmatprep.subr.mxu0 0.0
    %236 = vmatpush1.msra.mxu0 0.0
    %237 = vmatprep.subr.mxu0 0.0
    %238 = vmatpush1.msra.mxu0 0.0
    %239 = vmatprep.subr.mxu0 0.0
    %240 = vmatpush1.msra.mxu0 0.0
    %241 = vmatprep.subr.mxu0 0.0
    %242 = vmatpush1.msra.mxu0 0.0
    %243 = vmatprep.subr.mxu0 0.0
    %244 = vmatpush1.msra.mxu0 0.0
    %245 = vmatprep.subr.mxu0 0.0
    %246 = vmatpush1.msra.mxu0 0.0
    %247 = vmatprep.subr.mxu0 0.0
    %248 = vmatpush1.msra.mxu0 0.0
    %249 = vmatprep.subr.mxu0 0.0
    %250 = vmatpush1.msra.mxu0 0.0
    %251 = vmatprep.subr.mxu0 0.0
    %252 = vmatpush1.msra.mxu0 0.0
    %253 = vmatprep.subr.mxu0 0.0
    %254 = vmatpush1.msra.mxu0 0.0
    %255 = vmatprep.subr.mxu0 0.0
    %256 = vmatpush1.msra.mxu0 0.0
    %257 = vmatprep.subr.mxu0 0.0
    %258 = vmatpush1.msra.mxu0 0.0
    %259 = vmatprep.subr.mxu0 0.0
    %260 = vmatpush1.msra.mxu0 0.0
    %261 = vmatprep.subr.mxu0 0.0
    %262 = vmatpush1.msra.mxu0 0.0
    %263 = vmatprep.subr.mxu0 0.0
    %264 = vmatpush1.msra.mxu0 0.0
    %265 = vmatprep.mubr.f32.mxu0 0.0
    %266 = vmatmul.mubr.f32.gmra.mrb[0].mxu0 %v196
    %v267 = vpop.f32.mrb[0].mxu0
    %v268 = vadd.f32 0.0, %v267
    %v269 = vpop.f32.mrb[0].mxu0
    %270 = vmatprep.mubr.f32.mxu0 0.0
    %271 = vmatmul.mubr.f32.gmra.mrb[0].mxu0 %v199
    %v272 = vpop.f32.mrb[0].mxu0
    %v273 = vadd.f32 0.0, %v272
    %v274 = vpop.f32.mrb[0].mxu0
    %275 = vdwg.mxu0
    %280 = vrot.lane.b32.xlu0 %v191, 96
    %v281 = vpop.permute.xlu0 %280
    %282 = vrot.lane.b32.xlu0 %v192, 96
    %v283 = vpop.permute.xlu0 %282
    %284 = vrot.lane.b32.xlu0 %v193, 96
    %v285 = vpop.permute.xlu0 %284
    %286 = vrot.lane.b32.xlu0 %v194, 96
    %v287 = vpop.permute.xlu0 %286
    %292 = vmatprep.subr.mxu0 0.0
    %293 = vmatpush1.msra.mxu0 %v281
    %294 = vmatprep.subr.mxu0 0.0
    %295 = vmatpush1.msra.mxu0 %v283
    %296 = vmatprep.subr.mxu0 0.0
    %297 = vmatpush1.msra.mxu0 %v285
    %298 = vmatprep.subr.mxu0 0.0
    %299 = vmatpush1.msra.mxu0 %v287
    %300 = vmatprep.subr.mxu0 0.0
    %301 = vmatpush1.msra.mxu0 0.0
    %302 = vmatprep.subr.mxu0 0.0
    %303 = vmatpush1.msra.mxu0 0.0
    %304 = vmatprep.subr.mxu0 0.0
    %305 = vmatpush1.msra.mxu0 0.0
    %306 = vmatprep.subr.mxu0 0.0
    %307 = vmatpush1.msra.mxu0 0.0
    %308 = vmatprep.subr.mxu0 0.0
    %309 = vmatpush1.msra.mxu0 0.0
    %310 = vmatprep.subr.mxu0 0.0
    %311 = vmatpush1.msra.mxu0 0.0
    %312 = vmatprep.subr.mxu0 0.0
    %313 = vmatpush1.msra.mxu0 0.0
    %314 = vmatprep.subr.mxu0 0.0
    %315 = vmatpush1.msra.mxu0 0.0
    %316 = vmatprep.subr.mxu0 0.0
    %317 = vmatpush1.msra.mxu0 0.0
    %318 = vmatprep.subr.mxu0 0.0
    %319 = vmatpush1.msra.mxu0 0.0
    %320 = vmatprep.subr.mxu0 0.0
    %321 = vmatpush1.msra.mxu0 0.0
    %322 = vmatprep.subr.mxu0 0.0
    %323 = vmatpush1.msra.mxu0 0.0
    %324 = vmatprep.subr.mxu0 0.0
    %325 = vmatpush1.msra.mxu0 0.0
    %326 = vmatprep.subr.mxu0 0.0
    %327 = vmatpush1.msra.mxu0 0.0
    %328 = vmatprep.subr.mxu0 0.0
    %329 = vmatpush1.msra.mxu0 0.0
    %330 = vmatprep.subr.mxu0 0.0
    %331 = vmatpush1.msra.mxu0 0.0
    %332 = vmatprep.subr.mxu0 0.0
    %333 = vmatpush1.msra.mxu0 0.0
    %334 = vmatprep.subr.mxu0 0.0
    %335 = vmatpush1.msra.mxu0 0.0
    %336 = vmatprep.subr.mxu0 0.0
    %337 = vmatpush1.msra.mxu0 0.0
    %338 = vmatprep.subr.mxu0 0.0
    %339 = vmatpush1.msra.mxu0 0.0
    %340 = vmatprep.subr.mxu0 0.0
    %341 = vmatpush1.msra.mxu0 0.0
    %342 = vmatprep.subr.mxu0 0.0
    %343 = vmatpush1.msra.mxu0 0.0
    %344 = vmatprep.subr.mxu0 0.0
    %345 = vmatpush1.msra.mxu0 0.0
    %346 = vmatprep.subr.mxu0 0.0
    %347 = vmatpush1.msra.mxu0 0.0
    %348 = vmatprep.subr.mxu0 0.0
    %349 = vmatpush1.msra.mxu0 0.0
    %350 = vmatprep.subr.mxu0 0.0
    %351 = vmatpush1.msra.mxu0 0.0
    %352 = vmatprep.subr.mxu0 0.0
    %353 = vmatpush1.msra.mxu0 0.0
    %354 = vmatprep.subr.mxu0 0.0
    %355 = vmatpush1.msra.mxu0 0.0
    %356 = vmatprep.mubr.f32.mxu0 0.0
    %357 = vmatmul.mubr.f32.gmra.mrb[0].mxu0 %v196
    %v358 = vpop.f32.mrb[0].mxu0
    %v359 = vadd.f32 0.0, %v358
    %v360 = vpop.f32.mrb[0].mxu0
    %361 = vmatprep.mubr.f32.mxu0 0.0
    %362 = vmatmul.mubr.f32.gmra.mrb[0].mxu0 %v199
    %v363 = vpop.f32.mrb[0].mxu0
    %v364 = vadd.f32 0.0, %v363
    %v365 = vpop.f32.mrb[0].mxu0
    %366 = vdwg.mxu0
    %367 = vrot.lane.b32.xlu0 %v191, 64
    %v368 = vpop.permute.xlu0 %367
    %369 = vrot.lane.b32.xlu0 %v192, 64
    %v370 = vpop.permute.xlu0 %369
    %371 = vrot.lane.b32.xlu0 %v193, 64
    %v372 = vpop.permute.xlu0 %371
    %373 = vrot.lane.b32.xlu0 %v194, 64
    %v374 = vpop.permute.xlu0 %373
    %379 = vmatprep.subr.mxu0 0.0
    %380 = vmatpush1.msra.mxu0 %v368
    %381 = vmatprep.subr.mxu0 0.0
    %382 = vmatpush1.msra.mxu0 %v370
    %383 = vmatprep.subr.mxu0 0.0
    %384 = vmatpush1.msra.mxu0 %v372
    %385 = vmatprep.subr.mxu0 0.0
    %386 = vmatpush1.msra.mxu0 %v374
    %387 = vmatprep.subr.mxu0 0.0
    %388 = vmatpush1.msra.mxu0 0.0
    %389 = vmatprep.subr.mxu0 0.0
    %390 = vmatpush1.msra.mxu0 0.0
    %391 = vmatprep.subr.mxu0 0.0
    %392 = vmatpush1.msra.mxu0 0.0
    %393 = vmatprep.subr.mxu0 0.0
    %394 = vmatpush1.msra.mxu0 0.0
    %395 = vmatprep.subr.mxu0 0.0
    %396 = vmatpush1.msra.mxu0 0.0
    %397 = vmatprep.subr.mxu0 0.0
    %398 = vmatpush1.msra.mxu0 0.0
    %399 = vmatprep.subr.mxu0 0.0
    %400 = vmatpush1.msra.mxu0 0.0
    %401 = vmatprep.subr.mxu0 0.0
    %402 = vmatpush1.msra.mxu0 0.0
    %403 = vmatprep.subr.mxu0 0.0
    %404 = vmatpush1.msra.mxu0 0.0
    %405 = vmatprep.subr.mxu0 0.0
    %406 = vmatpush1.msra.mxu0 0.0
    %407 = vmatprep.subr.mxu0 0.0
    %408 = vmatpush1.msra.mxu0 0.0
    %409 = vmatprep.subr.mxu0 0.0
    %410 = vmatpush1.msra.mxu0 0.0
    %411 = vmatprep.subr.mxu0 0.0
    %412 = vmatpush1.msra.mxu0 0.0
    %413 = vmatprep.subr.mxu0 0.0
    %414 = vmatpush1.msra.mxu0 0.0
    %415 = vmatprep.subr.mxu0 0.0
    %416 = vmatpush1.msra.mxu0 0.0
    %417 = vmatprep.subr.mxu0 0.0
    %418 = vmatpush1.msra.mxu0 0.0
    %419 = vmatprep.subr.mxu0 0.0
    %420 = vmatpush1.msra.mxu0 0.0
    %421 = vmatprep.subr.mxu0 0.0
    %422 = vmatpush1.msra.mxu0 0.0
    %423 = vmatprep.subr.mxu0 0.0
    %424 = vmatpush1.msra.mxu0 0.0
    %425 = vmatprep.subr.mxu0 0.0
    %426 = vmatpush1.msra.mxu0 0.0
    %427 = vmatprep.subr.mxu0 0.0
    %428 = vmatpush1.msra.mxu0 0.0
    %429 = vmatprep.subr.mxu0 0.0
    %430 = vmatpush1.msra.mxu0 0.0
    %431 = vmatprep.subr.mxu0 0.0
    %432 = vmatpush1.msra.mxu0 0.0
    %433 = vmatprep.subr.mxu0 0.0
    %434 = vmatpush1.msra.mxu0 0.0
    %435 = vmatprep.subr.mxu0 0.0
    %436 = vmatpush1.msra.mxu0 0.0
    %437 = vmatprep.subr.mxu0 0.0
    %438 = vmatpush1.msra.mxu0 0.0
    %439 = vmatprep.subr.mxu0 0.0
    %440 = vmatpush1.msra.mxu0 0.0
    %441 = vmatprep.subr.mxu0 0.0
    %442 = vmatpush1.msra.mxu0 0.0
    %443 = vmatprep.mubr.f32.mxu0 0.0
    %444 = vmatmul.mubr.f32.gmra.mrb[0].mxu0 %v196
    %v445 = vpop.f32.mrb[0].mxu0
    %v446 = vadd.f32 0.0, %v445
    %v447 = vpop.f32.mrb[0].mxu0
    %448 = vmatprep.mubr.f32.mxu0 0.0
    %449 = vmatmul.mubr.f32.gmra.mrb[0].mxu0 %v199
    %v450 = vpop.f32.mrb[0].mxu0
    %v451 = vadd.f32 0.0, %v450
    %v452 = vpop.f32.mrb[0].mxu0
    %453 = vdwg.mxu0
    %vm454 = vcmask 64512
    %v456 = vsel %vm454, %v268, 0
    %v459 = vsel %vm454, %v273, 0
    %v462 = vsel %vm454, %v359, 0
    %v465 = vsel %vm454, %v364, 0
    %467 = vmatprep.subr.mxu0 0.0
    %468 = vmatpush1.xpose.msra.mxu0 %v462
    %469 = vmatprep.subr.mxu0 0.0
    %470 = vmatpush1.xpose.msra.mxu0 %v465
    %471 = vmatprep.subr.mxu0 0.0
    %472 = vmatpush1.xpose.msra.mxu0 0.0
    %473 = vmatprep.subr.mxu0 0.0
    %474 = vmatpush1.xpose.msra.mxu0 0.0
    %475 = vmatprep.subr.mxu0 0.0
    %476 = vmatpush1.xpose.msra.mxu0 0.0
    %477 = vmatprep.subr.mxu0 0.0
    %478 = vmatpush1.xpose.msra.mxu0 0.0
    %479 = vmatprep.subr.mxu0 0.0
    %480 = vmatpush1.xpose.msra.mxu0 0.0
    %481 = vmatprep.subr.mxu0 0.0
    %482 = vmatpush1.xpose.msra.mxu0 0.0
    %483 = vmatprep.subr.mxu0 0.0
    %484 = vmatpush1.xpose.msra.mxu0 0.0
    %485 = vmatprep.subr.mxu0 0.0
    %486 = vmatpush1.xpose.msra.mxu0 0.0
    %487 = vmatprep.subr.mxu0 0.0
    %488 = vmatpush1.xpose.msra.mxu0 0.0
    %489 = vmatprep.subr.mxu0 0.0
    %490 = vmatpush1.xpose.msra.mxu0 0.0
    %491 = vmatprep.subr.mxu0 0.0
    %492 = vmatpush1.xpose.msra.mxu0 0.0
    %493 = vmatprep.subr.mxu0 0.0
    %494 = vmatpush1.xpose.msra.mxu0 0.0
    %495 = vmatprep.subr.mxu0 0.0
    %496 = vmatpush1.xpose.msra.mxu0 0.0
    %497 = vmatprep.subr.mxu0 0.0
    %498 = vmatpush1.xpose.msra.mxu0 0.0
    %499 = vmatprep.subr.mxu0 0.0
    %500 = vmatpush1.xpose.msra.mxu0 0.0
    %501 = vmatprep.subr.mxu0 0.0
    %502 = vmatpush1.xpose.msra.mxu0 0.0
    %503 = vmatprep.subr.mxu0 0.0
    %504 = vmatpush1.xpose.msra.mxu0 0.0
    %505 = vmatprep.subr.mxu0 0.0
    %506 = vmatpush1.xpose.msra.mxu0 0.0
    %507 = vmatprep.subr.mxu0 0.0
    %508 = vmatpush1.xpose.msra.mxu0 0.0
    %509 = vmatprep.subr.mxu0 0.0
    %510 = vmatpush1.xpose.msra.mxu0 0.0
    %511 = vmatprep.subr.mxu0 0.0
    %512 = vmatpush1.xpose.msra.mxu0 0.0
    %513 = vmatprep.subr.mxu0 0.0
    %514 = vmatpush1.xpose.msra.mxu0 0.0
    %515 = vmatprep.subr.mxu0 0.0
    %516 = vmatpush1.xpose.msra.mxu0 0.0
    %517 = vmatprep.subr.mxu0 0.0
    %518 = vmatpush1.xpose.msra.mxu0 0.0
    %519 = vmatprep.subr.mxu0 0.0
    %520 = vmatpush1.xpose.msra.mxu0 0.0
    %521 = vmatprep.subr.mxu0 0.0
    %522 = vmatpush1.xpose.msra.mxu0 0.0
    %523 = vmatprep.subr.mxu0 0.0
    %524 = vmatpush1.xpose.msra.mxu0 0.0
    %525 = vmatprep.subr.mxu0 0.0
    %526 = vmatpush1.xpose.msra.mxu0 0.0
    %527 = vmatprep.subr.mxu0 0.0
    %528 = vmatpush1.xpose.msra.mxu0 0.0
    %529 = vmatprep.subr.mxu0 0.0
    %530 = vmatpush1.xpose.msra.mxu0 0.0
    %531 = vmatprep.mubr.f32.mxu0 0.0
    %532 = vmatmul.mubr.f32.gmra.mrb[0].mxu0 %v456
    %v533 = vpop.f32.mrb[0].mxu0
    %v534 = vadd.f32 %v142, %v533
    %v535 = vpop.f32.mrb[0].mxu0
    %536 = vmatprep.mubr.f32.mxu0 0.0
    %537 = vmatmul.mubr.f32.gmra.mrb[0].mxu0 %v459
    %v538 = vpop.f32.mrb[0].mxu0
    %v539 = vadd.f32 %v143, %v538
    %v540 = vpop.f32.mrb[0].mxu0
    %541 = vdwg.mxu0
    %vm542 = vcmask 80896
    %v543 = vsel %vm542, %v534, -inf
    %544 = vmax.xlane.f32.xlu0 %v543
    %v545 = vpop.xlane.xlu0 %544
    %vm546 = vcmask 74752
    %v547 = vsel %vm546, %v539, -inf
    %548 = vmax.xlane.f32.xlu0 %v547
    %v549 = vpop.xlane.xlu0 %548
    %v550 = vsub.f32 %v534, %v545
    %v551 = vsub.f32 %v539, %v549
    %v552 = vmul.f32 %v550, 1.442695
    %v553 = vpow.pop %v552
    %v554 = vmul.f32 %v551, 1.442695
    %v555 = vpow.pop %v554
    %v556 = vsel %vm542, %v553, 0.0
    %557 = vadd.xlane.f32.xlu0 %v556
    %v558 = vpop.xlane.xlu0 %557
    %v559 = vsel %vm546, %v555, 0.0
    %560 = vadd.xlane.f32.xlu0 %v559
    %v561 = vpop.xlane.xlu0 %560
    %v562 = vrcp.pop %v558
    %v563 = vmul.f32 1.0, %v562
    %v564 = vrcp.pop %v561
    %v565 = vmul.f32 1.0, %v564
    %v566 = vmul.f32 %v553, %v563
    %v567 = vmul.f32 %v555, %v565
    %v569 = vsel %vm542, %v566, 0
    %v572 = vsel %vm542, %v567, 0
    %v575 = vsel %vm63, %v451, 0
    %577 = vmatprep.subr.mxu0 0.0
    %578 = vmatpush1.msra.mxu0 %v446
    %579 = vmatprep.subr.mxu0 0.0
    %580 = vmatpush1.msra.mxu0 %v575
    %581 = vmatprep.subr.mxu0 0.0
    %582 = vmatpush1.msra.mxu0 0.0
    %583 = vmatprep.subr.mxu0 0.0
    %584 = vmatpush1.msra.mxu0 0.0
    %585 = vmatprep.subr.mxu0 0.0
    %586 = vmatpush1.msra.mxu0 0.0
    %587 = vmatprep.subr.mxu0 0.0
    %588 = vmatpush1.msra.mxu0 0.0
    %589 = vmatprep.subr.mxu0 0.0
    %590 = vmatpush1.msra.mxu0 0.0
    %591 = vmatprep.subr.mxu0 0.0
    %592 = vmatpush1.msra.mxu0 0.0
    %593 = vmatprep.subr.mxu0 0.0
    %594 = vmatpush1.msra.mxu0 0.0
    %595 = vmatprep.subr.mxu0 0.0
    %596 = vmatpush1.msra.mxu0 0.0
    %597 = vmatprep.subr.mxu0 0.0
    %598 = vmatpush1.msra.mxu0 0.0
    %599 = vmatprep.subr.mxu0 0.0
    %600 = vmatpush1.msra.mxu0 0.0
    %601 = vmatprep.subr.mxu0 0.0
    %602 = vmatpush1.msra.mxu0 0.0
    %603 = vmatprep.subr.mxu0 0.0
    %604 = vmatpush1.msra.mxu0 0.0
    %605 = vmatprep.subr.mxu0 0.0
    %606 = vmatpush1.msra.mxu0 0.0
    %607 = vmatprep.subr.mxu0 0.0
    %608 = vmatpush1.msra.mxu0 0.0
    %609 = vmatprep.subr.mxu0 0.0
    %610 = vmatpush1.msra.mxu0 0.0
    %611 = vmatprep.subr.mxu0 0.0
    %612 = vmatpush1.msra.mxu0 0.0
    %613 = vmatprep.subr.mxu0 0.0
    %614 = vmatpush1.msra.mxu0 0.0
    %615 = vmatprep.subr.mxu0 0.0
    %616 = vmatpush1.msra.mxu0 0.0
    %617 = vmatprep.subr.mxu0 0.0
    %618 = vmatpush1.msra.mxu0 0.0
    %619 = vmatprep.subr.mxu0 0.0
    %620 = vmatpush1.msra.mxu0 0.0
    %621 = vmatprep.subr.mxu0 0.0
    %622 = vmatpush1.msra.mxu0 0.0
    %623 = vmatprep.subr.mxu0 0.0
    %624 = vmatpush1.msra.mxu0 0.0
    %625 = vmatprep.subr.mxu0 0.0
    %626 = vmatpush1.msra.mxu0 0.0
    %627 = vmatprep.subr.mxu0 0.0
    %628 = vmatpush1.msra.mxu0 0.0
    %629 = vmatprep.subr.mxu0 0.0
    %630 = vmatpush1.msra.mxu0 0.0
    %631 = vmatprep.subr.mxu0 0.0
    %632 = vmatpush1.msra.mxu0 0.0
    %633 = vmatprep.subr.mxu0 0.0
    %634 = vmatpush1.msra.mxu0 0.0
    %635 = vmatprep.subr.mxu0 0.0
    %636 = vmatpush1.msra.mxu0 0.0
    %637 = vmatprep.subr.mxu0 0.0
    %638 = vmatpush1.msra.mxu0 0.0
    %639 = vmatprep.subr.mxu0 0.0
    %640 = vmatpush1.msra.mxu0 0.0
    %641 = vmatprep.mubr.f32.mxu0 0.0
    %642 = vmatmul.mubr.f32.gmra.mrb[0].mxu0 %v569
    %v643 = vpop.f32.mrb[0].mxu0
    %v644 = vadd.f32 0.0, %v643
    %v645 = vpop.f32.mrb[0].mxu0
    %646 = vmatprep.mubr.f32.mxu0 0.0
    %647 = vmatmul.mubr.f32.gmra.mrb[0].mxu0 %v572
    %v648 = vpop.f32.mrb[0].mxu0
    %v649 = vadd.f32 0.0, %v648
    %v650 = vpop.f32.mrb[0].mxu0
    %651 = vdwg.mxu0
    %v652 = vld [vmem:[%s7] sm:$0xff]
    %v654 = vsel %vm454, %v644, 0
    %v657 = vsel %vm454, %v649, 0
    %659 = vmatprep.subr.mxu0 0.0
    %660 = vmatpush1.msra.mxu0 %v652
    %661 = vmatprep.subr.mxu0 0.0
    %662 = vmatpush1.msra.mxu0 0.0
    %663 = vmatprep.subr.mxu0 0.0
    %664 = vmatpush1.msra.mxu0 0.0
    %665 = vmatprep.subr.mxu0 0.0
    %666 = vmatpush1.msra.mxu0 0.0
    %667 = vmatprep.subr.mxu0 0.0
    %668 = vmatpush1.msra.mxu0 0.0
    %669 = vmatprep.subr.mxu0 0.0
    %670 = vmatpush1.msra.mxu0 0.0
    %671 = vmatprep.subr.mxu0 0.0
    %672 = vmatpush1.msra.mxu0 0.0
    %673 = vmatprep.subr.mxu0 0.0
    %674 = vmatpush1.msra.mxu0 0.0
    %675 = vmatprep.subr.mxu0 0.0
    %676 = vmatpush1.msra.mxu0 0.0
    %677 = vmatprep.subr.mxu0 0.0
    %678 = vmatpush1.msra.mxu0 0.0
    %679 = vmatprep.subr.mxu0 0.0
    %680 = vmatpush1.msra.mxu0 0.0
    %681 = vmatprep.subr.mxu0 0.0
    %682 = vmatpush1.msra.mxu0 0.0
    %683 = vmatprep.subr.mxu0 0.0
    %684 = vmatpush1.msra.mxu0 0.0
    %685 = vmatprep.subr.mxu0 0.0
    %686 = vmatpush1.msra.mxu0 0.0
    %687 = vmatprep.subr.mxu0 0.0
    %688 = vmatpush1.msra.mxu0 0.0
    %689 = vmatprep.subr.mxu0 0.0
    %690 = vmatpush1.msra.mxu0 0.0
    %691 = vmatprep.subr.mxu0 0.0
    %692 = vmatpush1.msra.mxu0 0.0
    %693 = vmatprep.subr.mxu0 0.0
    %694 = vmatpush1.msra.mxu0 0.0
    %695 = vmatprep.subr.mxu0 0.0
    %696 = vmatpush1.msra.mxu0 0.0
    %697 = vmatprep.subr.mxu0 0.0
    %698 = vmatpush1.msra.mxu0 0.0
    %699 = vmatprep.subr.mxu0 0.0
    %700 = vmatpush1.msra.mxu0 0.0
    %701 = vmatprep.subr.mxu0 0.0
    %702 = vmatpush1.msra.mxu0 0.0
    %703 = vmatprep.subr.mxu0 0.0
    %704 = vmatpush1.msra.mxu0 0.0
    %705 = vmatprep.subr.mxu0 0.0
    %706 = vmatpush1.msra.mxu0 0.0
    %707 = vmatprep.subr.mxu0 0.0
    %708 = vmatpush1.msra.mxu0 0.0
    %709 = vmatprep.subr.mxu0 0.0
    %710 = vmatpush1.msra.mxu0 0.0
    %711 = vmatprep.subr.mxu0 0.0
    %712 = vmatpush1.msra.mxu0 0.0
    %713 = vmatprep.subr.mxu0 0.0
    %714 = vmatpush1.msra.mxu0 0.0
    %715 = vmatprep.subr.mxu0 0.0
    %716 = vmatpush1.msra.mxu0 0.0
    %717 = vmatprep.subr.mxu0 0.0
    %718 = vmatpush1.msra.mxu0 0.0
    %719 = vmatprep.subr.mxu0 0.0
    %720 = vmatpush1.msra.mxu0 0.0
    %721 = vmatprep.subr.mxu0 0.0
    %722 = vmatpush1.msra.mxu0 0.0
    %723 = vmatprep.mubr.f32.mxu0 0.0
    %724 = vmatmul.mubr.f32.gmra.mrb[0].mxu0 %v654
    %v725 = vpop.f32.mrb[0].mxu0
    %v726 = vadd.f32 0.0, %v725
    %v727 = vpop.f32.mrb[0].mxu0
    %728 = vmatprep.mubr.f32.mxu0 0.0
    %729 = vmatmul.mubr.f32.gmra.mrb[0].mxu0 %v657
    %v730 = vpop.f32.mrb[0].mxu0
    %v731 = vadd.f32 0.0, %v730
    %v732 = vpop.f32.mrb[0].mxu0
    %733 = vdwg.mxu0
    %v734 = vadd.f32 %v134, %v726
    %v735 = vadd.f32 %v139, %v731
    %736 = vrot.lane.b32.xlu0 %v191, 120
    %v737 = vpop.permute.xlu0 %736
    %738 = vrot.lane.b32.xlu0 %v192, 120
    %v739 = vpop.permute.xlu0 %738
    %740 = vrot.lane.b32.xlu0 %v193, 120
    %v741 = vpop.permute.xlu0 %740
    %742 = vrot.lane.b32.xlu0 %v194, 120
    %v743 = vpop.permute.xlu0 %742
    %748 = vmatprep.subr.mxu0 0.0
    %749 = vmatpush1.msra.mxu0 %v737
    %750 = vmatprep.subr.mxu0 0.0
    %751 = vmatpush1.msra.mxu0 %v739
    %752 = vmatprep.subr.mxu0 0.0
    %753 = vmatpush1.msra.mxu0 %v741
    %754 = vmatprep.subr.mxu0 0.0
    %755 = vmatpush1.msra.mxu0 %v743
    %756 = vmatprep.subr.mxu0 0.0
    %757 = vmatpush1.msra.mxu0 0.0
    %758 = vmatprep.subr.mxu0 0.0
    %759 = vmatpush1.msra.mxu0 0.0
    %760 = vmatprep.subr.mxu0 0.0
    %761 = vmatpush1.msra.mxu0 0.0
    %762 = vmatprep.subr.mxu0 0.0
    %763 = vmatpush1.msra.mxu0 0.0
    %764 = vmatprep.subr.mxu0 0.0
    %765 = vmatpush1.msra.mxu0 0.0
    %766 = vmatprep.subr.mxu0 0.0
    %767 = vmatpush1.msra.mxu0 0.0
    %768 = vmatprep.subr.mxu0 0.0
    %769 = vmatpush1.msra.mxu0 0.0
    %770 = vmatprep.subr.mxu0 0.0
    %771 = vmatpush1.msra.mxu0 0.0
    %772 = vmatprep.subr.mxu0 0.0
    %773 = vmatpush1.msra.mxu0 0.0
    %774 = vmatprep.subr.mxu0 0.0
    %775 = vmatpush1.msra.mxu0 0.0
    %776 = vmatprep.subr.mxu0 0.0
    %777 = vmatpush1.msra.mxu0 0.0
    %778 = vmatprep.subr.mxu0 0.0
    %779 = vmatpush1.msra.mxu0 0.0
    %780 = vmatprep.subr.mxu0 0.0
    %781 = vmatpush1.msra.mxu0 0.0
    %782 = vmatprep.subr.mxu0 0.0
    %783 = vmatpush1.msra.mxu0 0.0
    %784 = vmatprep.subr.mxu0 0.0
    %785 = vmatpush1.msra.mxu0 0.0
    %786 = vmatprep.subr.mxu0 0.0
    %787 = vmatpush1.msra.mxu0 0.0
    %788 = vmatprep.subr.mxu0 0.0
    %789 = vmatpush1.msra.mxu0 0.0
    %790 = vmatprep.subr.mxu0 0.0
    %791 = vmatpush1.msra.mxu0 0.0
    %792 = vmatprep.subr.mxu0 0.0
    %793 = vmatpush1.msra.mxu0 0.0
    %794 = vmatprep.subr.mxu0 0.0
    %795 = vmatpush1.msra.mxu0 0.0
    %796 = vmatprep.subr.mxu0 0.0
    %797 = vmatpush1.msra.mxu0 0.0
    %798 = vmatprep.subr.mxu0 0.0
    %799 = vmatpush1.msra.mxu0 0.0
    %800 = vmatprep.subr.mxu0 0.0
    %801 = vmatpush1.msra.mxu0 0.0
    %802 = vmatprep.subr.mxu0 0.0
    %803 = vmatpush1.msra.mxu0 0.0
    %804 = vmatprep.subr.mxu0 0.0
    %805 = vmatpush1.msra.mxu0 0.0
    %806 = vmatprep.subr.mxu0 0.0
    %807 = vmatpush1.msra.mxu0 0.0
    %808 = vmatprep.subr.mxu0 0.0
    %809 = vmatpush1.msra.mxu0 0.0
    %810 = vmatprep.subr.mxu0 0.0
    %811 = vmatpush1.msra.mxu0 0.0
    %812 = vmatprep.mubr.f32.mxu0 0.0
    %813 = vmatmul.mubr.f32.gmra.mrb[0].mxu0 %v196
    %v814 = vpop.f32.mrb[0].mxu0
    %v815 = vadd.f32 0.0, %v814
    %v816 = vpop.f32.mrb[0].mxu0
    %817 = vmatprep.mubr.f32.mxu0 0.0
    %818 = vmatmul.mubr.f32.gmra.mrb[0].mxu0 %v199
    %v819 = vpop.f32.mrb[0].mxu0
    %v820 = vadd.f32 0.0, %v819
    %v821 = vpop.f32.mrb[0].mxu0
    %822 = vdwg.mxu0
    %823 = vrot.lane.b32.xlu0 %v191, 88
    %v824 = vpop.permute.xlu0 %823
    %825 = vrot.lane.b32.xlu0 %v192, 88
    %v826 = vpop.permute.xlu0 %825
    %827 = vrot.lane.b32.xlu0 %v193, 88
    %v828 = vpop.permute.xlu0 %827
    %829 = vrot.lane.b32.xlu0 %v194, 88
    %v830 = vpop.permute.xlu0 %829
    %835 = vmatprep.subr.mxu0 0.0
    %836 = vmatpush1.msra.mxu0 %v824
    %837 = vmatprep.subr.mxu0 0.0
    %838 = vmatpush1.msra.mxu0 %v826
    %839 = vmatprep.subr.mxu0 0.0
    %840 = vmatpush1.msra.mxu0 %v828
    %841 = vmatprep.subr.mxu0 0.0
    %842 = vmatpush1.msra.mxu0 %v830
    %843 = vmatprep.subr.mxu0 0.0
    %844 = vmatpush1.msra.mxu0 0.0
    %845 = vmatprep.subr.mxu0 0.0
    %846 = vmatpush1.msra.mxu0 0.0
    %847 = vmatprep.subr.mxu0 0.0
    %848 = vmatpush1.msra.mxu0 0.0
    %849 = vmatprep.subr.mxu0 0.0
    %850 = vmatpush1.msra.mxu0 0.0
    %851 = vmatprep.subr.mxu0 0.0
    %852 = vmatpush1.msra.mxu0 0.0
    %853 = vmatprep.subr.mxu0 0.0
    %854 = vmatpush1.msra.mxu0 0.0
    %855 = vmatprep.subr.mxu0 0.0
    %856 = vmatpush1.msra.mxu0 0.0
    %857 = vmatprep.subr.mxu0 0.0
    %858 = vmatpush1.msra.mxu0 0.0
    %859 = vmatprep.subr.mxu0 0.0
    %860 = vmatpush1.msra.mxu0 0.0
    %861 = vmatprep.subr.mxu0 0.0
    %862 = vmatpush1.msra.mxu0 0.0
    %863 = vmatprep.subr.mxu0 0.0
    %864 = vmatpush1.msra.mxu0 0.0
    %865 = vmatprep.subr.mxu0 0.0
    %866 = vmatpush1.msra.mxu0 0.0
    %867 = vmatprep.subr.mxu0 0.0
    %868 = vmatpush1.msra.mxu0 0.0
    %869 = vmatprep.subr.mxu0 0.0
    %870 = vmatpush1.msra.mxu0 0.0
    %871 = vmatprep.subr.mxu0 0.0
    %872 = vmatpush1.msra.mxu0 0.0
    %873 = vmatprep.subr.mxu0 0.0
    %874 = vmatpush1.msra.mxu0 0.0
    %875 = vmatprep.subr.mxu0 0.0
    %876 = vmatpush1.msra.mxu0 0.0
    %877 = vmatprep.subr.mxu0 0.0
    %878 = vmatpush1.msra.mxu0 0.0
    %879 = vmatprep.subr.mxu0 0.0
    %880 = vmatpush1.msra.mxu0 0.0
    %881 = vmatprep.subr.mxu0 0.0
    %882 = vmatpush1.msra.mxu0 0.0
    %883 = vmatprep.subr.mxu0 0.0
    %884 = vmatpush1.msra.mxu0 0.0
    %885 = vmatprep.subr.mxu0 0.0
    %886 = vmatpush1.msra.mxu0 0.0
    %887 = vmatprep.subr.mxu0 0.0
    %888 = vmatpush1.msra.mxu0 0.0
    %889 = vmatprep.subr.mxu0 0.0
    %890 = vmatpush1.msra.mxu0 0.0
    %891 = vmatprep.subr.mxu0 0.0
    %892 = vmatpush1.msra.mxu0 0.0
    %893 = vmatprep.subr.mxu0 0.0
    %894 = vmatpush1.msra.mxu0 0.0
    %895 = vmatprep.subr.mxu0 0.0
    %896 = vmatpush1.msra.mxu0 0.0
    %897 = vmatprep.subr.mxu0 0.0
    %898 = vmatpush1.msra.mxu0 0.0
    %899 = vmatprep.mubr.f32.mxu0 0.0
    %900 = vmatmul.mubr.f32.gmra.mrb[0].mxu0 %v196
    %v901 = vpop.f32.mrb[0].mxu0
    %v902 = vadd.f32 0.0, %v901
    %v903 = vpop.f32.mrb[0].mxu0
    %904 = vmatprep.mubr.f32.mxu0 0.0
    %905 = vmatmul.mubr.f32.gmra.mrb[0].mxu0 %v199
    %v906 = vpop.f32.mrb[0].mxu0
    %v907 = vadd.f32 0.0, %v906
    %v908 = vpop.f32.mrb[0].mxu0
    %909 = vdwg.mxu0
    %910 = vrot.lane.b32.xlu0 %v191, 56
    %v911 = vpop.permute.xlu0 %910
    %912 = vrot.lane.b32.xlu0 %v192, 56
    %v913 = vpop.permute.xlu0 %912
    %914 = vrot.lane.b32.xlu0 %v193, 56
    %v915 = vpop.permute.xlu0 %914
    %916 = vrot.lane.b32.xlu0 %v194, 56
    %v917 = vpop.permute.xlu0 %916
    %922 = vmatprep.subr.mxu0 0.0
    %923 = vmatpush1.msra.mxu0 %v911
    %924 = vmatprep.subr.mxu0 0.0
    %925 = vmatpush1.msra.mxu0 %v913
    %926 = vmatprep.subr.mxu0 0.0
    %927 = vmatpush1.msra.mxu0 %v915
    %928 = vmatprep.subr.mxu0 0.0
    %929 = vmatpush1.msra.mxu0 %v917
    %930 = vmatprep.subr.mxu0 0.0
    %931 = vmatpush1.msra.mxu0 0.0
    %932 = vmatprep.subr.mxu0 0.0
    %933 = vmatpush1.msra.mxu0 0.0
    %934 = vmatprep.subr.mxu0 0.0
    %935 = vmatpush1.msra.mxu0 0.0
    %936 = vmatprep.subr.mxu0 0.0
    %937 = vmatpush1.msra.mxu0 0.0
    %938 = vmatprep.subr.mxu0 0.0
    %939 = vmatpush1.msra.mxu0 0.0
    %940 = vmatprep.subr.mxu0 0.0
    %941 = vmatpush1.msra.mxu0 0.0
    %942 = vmatprep.subr.mxu0 0.0
    %943 = vmatpush1.msra.mxu0 0.0
    %944 = vmatprep.subr.mxu0 0.0
    %945 = vmatpush1.msra.mxu0 0.0
    %946 = vmatprep.subr.mxu0 0.0
    %947 = vmatpush1.msra.mxu0 0.0
    %948 = vmatprep.subr.mxu0 0.0
    %949 = vmatpush1.msra.mxu0 0.0
    %950 = vmatprep.subr.mxu0 0.0
    %951 = vmatpush1.msra.mxu0 0.0
    %952 = vmatprep.subr.mxu0 0.0
    %953 = vmatpush1.msra.mxu0 0.0
    %954 = vmatprep.subr.mxu0 0.0
    %955 = vmatpush1.msra.mxu0 0.0
    %956 = vmatprep.subr.mxu0 0.0
    %957 = vmatpush1.msra.mxu0 0.0
    %958 = vmatprep.subr.mxu0 0.0
    %959 = vmatpush1.msra.mxu0 0.0
    %960 = vmatprep.subr.mxu0 0.0
    %961 = vmatpush1.msra.mxu0 0.0
    %962 = vmatprep.subr.mxu0 0.0
    %963 = vmatpush1.msra.mxu0 0.0
    %964 = vmatprep.subr.mxu0 0.0
    %965 = vmatpush1.msra.mxu0 0.0
    %966 = vmatprep.subr.mxu0 0.0
    %967 = vmatpush1.msra.mxu0 0.0
    %968 = vmatprep.subr.mxu0 0.0
    %969 = vmatpush1.msra.mxu0 0.0
    %970 = vmatprep.subr.mxu0 0.0
    %971 = vmatpush1.msra.mxu0 0.0
    %972 = vmatprep.subr.mxu0 0.0
    %973 = vmatpush1.msra.mxu0 0.0
    %974 = vmatprep.subr.mxu0 0.0
    %975 = vmatpush1.msra.mxu0 0.0
    %976 = vmatprep.subr.mxu0 0.0
    %977 = vmatpush1.msra.mxu0 0.0
    %978 = vmatprep.subr.mxu0 0.0
    %979 = vmatpush1.msra.mxu0 0.0
    %980 = vmatprep.subr.mxu0 0.0
    %981 = vmatpush1.msra.mxu0 0.0
    %982 = vmatprep.subr.mxu0 0.0
    %983 = vmatpush1.msra.mxu0 0.0
    %984 = vmatprep.subr.mxu0 0.0
    %985 = vmatpush1.msra.mxu0 0.0
    %986 = vmatprep.mubr.f32.mxu0 0.0
    %987 = vmatmul.mubr.f32.gmra.mrb[0].mxu0 %v196
    %v988 = vpop.f32.mrb[0].mxu0
    %v989 = vadd.f32 0.0, %v988
    %v990 = vpop.f32.mrb[0].mxu0
    %991 = vmatprep.mubr.f32.mxu0 0.0
    %992 = vmatmul.mubr.f32.gmra.mrb[0].mxu0 %v199
    %v993 = vpop.f32.mrb[0].mxu0
    %v994 = vadd.f32 0.0, %v993
    %v995 = vpop.f32.mrb[0].mxu0
    %996 = vdwg.mxu0
    %v998 = vsel %vm454, %v815, 0
    %v1001 = vsel %vm454, %v820, 0
    %v1004 = vsel %vm454, %v902, 0
    %v1007 = vsel %vm454, %v907, 0
    %1009 = vmatprep.subr.mxu0 0.0
    %1010 = vmatpush1.xpose.msra.mxu0 %v1004
    %1011 = vmatprep.subr.mxu0 0.0
    %1012 = vmatpush1.xpose.msra.mxu0 %v1007
    %1013 = vmatprep.subr.mxu0 0.0
    %1014 = vmatpush1.xpose.msra.mxu0 0.0
    %1015 = vmatprep.subr.mxu0 0.0
    %1016 = vmatpush1.xpose.msra.mxu0 0.0
    %1017 = vmatprep.subr.mxu0 0.0
    %1018 = vmatpush1.xpose.msra.mxu0 0.0
    %1019 = vmatprep.subr.mxu0 0.0
    %1020 = vmatpush1.xpose.msra.mxu0 0.0
    %1021 = vmatprep.subr.mxu0 0.0
    %1022 = vmatpush1.xpose.msra.mxu0 0.0
    %1023 = vmatprep.subr.mxu0 0.0
    %1024 = vmatpush1.xpose.msra.mxu0 0.0
    %1025 = vmatprep.subr.mxu0 0.0
    %1026 = vmatpush1.xpose.msra.mxu0 0.0
    %1027 = vmatprep.subr.mxu0 0.0
    %1028 = vmatpush1.xpose.msra.mxu0 0.0
    %1029 = vmatprep.subr.mxu0 0.0
    %1030 = vmatpush1.xpose.msra.mxu0 0.0
    %1031 = vmatprep.subr.mxu0 0.0
    %1032 = vmatpush1.xpose.msra.mxu0 0.0
    %1033 = vmatprep.subr.mxu0 0.0
    %1034 = vmatpush1.xpose.msra.mxu0 0.0
    %1035 = vmatprep.subr.mxu0 0.0
    %1036 = vmatpush1.xpose.msra.mxu0 0.0
    %1037 = vmatprep.subr.mxu0 0.0
    %1038 = vmatpush1.xpose.msra.mxu0 0.0
    %1039 = vmatprep.subr.mxu0 0.0
    %1040 = vmatpush1.xpose.msra.mxu0 0.0
    %1041 = vmatprep.subr.mxu0 0.0
    %1042 = vmatpush1.xpose.msra.mxu0 0.0
    %1043 = vmatprep.subr.mxu0 0.0
    %1044 = vmatpush1.xpose.msra.mxu0 0.0
    %1045 = vmatprep.subr.mxu0 0.0
    %1046 = vmatpush1.xpose.msra.mxu0 0.0
    %1047 = vmatprep.subr.mxu0 0.0
    %1048 = vmatpush1.xpose.msra.mxu0 0.0
    %1049 = vmatprep.subr.mxu0 0.0
    %1050 = vmatpush1.xpose.msra.mxu0 0.0
    %1051 = vmatprep.subr.mxu0 0.0
    %1052 = vmatpush1.xpose.msra.mxu0 0.0
    %1053 = vmatprep.subr.mxu0 0.0
    %1054 = vmatpush1.xpose.msra.mxu0 0.0
    %1055 = vmatprep.subr.mxu0 0.0
    %1056 = vmatpush1.xpose.msra.mxu0 0.0
    %1057 = vmatprep.subr.mxu0 0.0
    %1058 = vmatpush1.xpose.msra.mxu0 0.0
    %1059 = vmatprep.subr.mxu0 0.0
    %1060 = vmatpush1.xpose.msra.mxu0 0.0
    %1061 = vmatprep.subr.mxu0 0.0
    %1062 = vmatpush1.xpose.msra.mxu0 0.0
    %1063 = vmatprep.subr.mxu0 0.0
    %1064 = vmatpush1.xpose.msra.mxu0 0.0
    %1065 = vmatprep.subr.mxu0 0.0
    %1066 = vmatpush1.xpose.msra.mxu0 0.0
    %1067 = vmatprep.subr.mxu0 0.0
    %1068 = vmatpush1.xpose.msra.mxu0 0.0
    %1069 = vmatprep.subr.mxu0 0.0
    %1070 = vmatpush1.xpose.msra.mxu0 0.0
    %1071 = vmatprep.subr.mxu0 0.0
    %1072 = vmatpush1.xpose.msra.mxu0 0.0
    %1073 = vmatprep.mubr.f32.mxu0 0.0
    %1074 = vmatmul.mubr.f32.gmra.mrb[0].mxu0 %v998
    %v1075 = vpop.f32.mrb[0].mxu0
    %v1076 = vadd.f32 %v142, %v1075
    %v1077 = vpop.f32.mrb[0].mxu0
    %1078 = vmatprep.mubr.f32.mxu0 0.0
    %1079 = vmatmul.mubr.f32.gmra.mrb[0].mxu0 %v1001
    %v1080 = vpop.f32.mrb[0].mxu0
    %v1081 = vadd.f32 %v143, %v1080
    %v1082 = vpop.f32.mrb[0].mxu0
    %1083 = vdwg.mxu0
    %v1084 = vsel %vm542, %v1076, -inf
    %1085 = vmax.xlane.f32.xlu0 %v1084
    %v1086 = vpop.xlane.xlu0 %1085
    %v1087 = vsel %vm546, %v1081, -inf
    %1088 = vmax.xlane.f32.xlu0 %v1087
    %v1089 = vpop.xlane.xlu0 %1088
    %v1090 = vsub.f32 %v1076, %v1086
    %v1091 = vsub.f32 %v1081, %v1089
    %v1092 = vmul.f32 %v1090, 1.442695
    %v1093 = vpow.pop %v1092
    %v1094 = vmul.f32 %v1091, 1.442695
    %v1095 = vpow.pop %v1094
    %v1096 = vsel %vm542, %v1093, 0.0
    %1097 = vadd.xlane.f32.xlu0 %v1096
    %v1098 = vpop.xlane.xlu0 %1097
    %v1099 = vsel %vm546, %v1095, 0.0
    %1100 = vadd.xlane.f32.xlu0 %v1099
    %v1101 = vpop.xlane.xlu0 %1100
    %v1102 = vrcp.pop %v1098
    %v1103 = vmul.f32 1.0, %v1102
    %v1104 = vrcp.pop %v1101
    %v1105 = vmul.f32 1.0, %v1104
    %v1106 = vmul.f32 %v1093, %v1103
    %v1107 = vmul.f32 %v1095, %v1105
    %v1109 = vsel %vm542, %v1106, 0
    %v1112 = vsel %vm542, %v1107, 0
    %v1115 = vsel %vm63, %v994, 0
    %1117 = vmatprep.subr.mxu0 0.0
    %1118 = vmatpush1.msra.mxu0 %v989
    %1119 = vmatprep.subr.mxu0 0.0
    %1120 = vmatpush1.msra.mxu0 %v1115
    %1121 = vmatprep.subr.mxu0 0.0
    %1122 = vmatpush1.msra.mxu0 0.0
    %1123 = vmatprep.subr.mxu0 0.0
    %1124 = vmatpush1.msra.mxu0 0.0
    %1125 = vmatprep.subr.mxu0 0.0
    %1126 = vmatpush1.msra.mxu0 0.0
    %1127 = vmatprep.subr.mxu0 0.0
    %1128 = vmatpush1.msra.mxu0 0.0
    %1129 = vmatprep.subr.mxu0 0.0
    %1130 = vmatpush1.msra.mxu0 0.0
    %1131 = vmatprep.subr.mxu0 0.0
    %1132 = vmatpush1.msra.mxu0 0.0
    %1133 = vmatprep.subr.mxu0 0.0
    %1134 = vmatpush1.msra.mxu0 0.0
    %1135 = vmatprep.subr.mxu0 0.0
    %1136 = vmatpush1.msra.mxu0 0.0
    %1137 = vmatprep.subr.mxu0 0.0
    %1138 = vmatpush1.msra.mxu0 0.0
    %1139 = vmatprep.subr.mxu0 0.0
    %1140 = vmatpush1.msra.mxu0 0.0
    %1141 = vmatprep.subr.mxu0 0.0
    %1142 = vmatpush1.msra.mxu0 0.0
    %1143 = vmatprep.subr.mxu0 0.0
    %1144 = vmatpush1.msra.mxu0 0.0
    %1145 = vmatprep.subr.mxu0 0.0
    %1146 = vmatpush1.msra.mxu0 0.0
    %1147 = vmatprep.subr.mxu0 0.0
    %1148 = vmatpush1.msra.mxu0 0.0
    %1149 = vmatprep.subr.mxu0 0.0
    %1150 = vmatpush1.msra.mxu0 0.0
    %1151 = vmatprep.subr.mxu0 0.0
    %1152 = vmatpush1.msra.mxu0 0.0
    %1153 = vmatprep.subr.mxu0 0.0
    %1154 = vmatpush1.msra.mxu0 0.0
    %1155 = vmatprep.subr.mxu0 0.0
    %1156 = vmatpush1.msra.mxu0 0.0
    %1157 = vmatprep.subr.mxu0 0.0
    %1158 = vmatpush1.msra.mxu0 0.0
    %1159 = vmatprep.subr.mxu0 0.0
    %1160 = vmatpush1.msra.mxu0 0.0
    %1161 = vmatprep.subr.mxu0 0.0
    %1162 = vmatpush1.msra.mxu0 0.0
    %1163 = vmatprep.subr.mxu0 0.0
    %1164 = vmatpush1.msra.mxu0 0.0
    %1165 = vmatprep.subr.mxu0 0.0
    %1166 = vmatpush1.msra.mxu0 0.0
    %1167 = vmatprep.subr.mxu0 0.0
    %1168 = vmatpush1.msra.mxu0 0.0
    %1169 = vmatprep.subr.mxu0 0.0
    %1170 = vmatpush1.msra.mxu0 0.0
    %1171 = vmatprep.subr.mxu0 0.0
    %1172 = vmatpush1.msra.mxu0 0.0
    %1173 = vmatprep.subr.mxu0 0.0
    %1174 = vmatpush1.msra.mxu0 0.0
    %1175 = vmatprep.subr.mxu0 0.0
    %1176 = vmatpush1.msra.mxu0 0.0
    %1177 = vmatprep.subr.mxu0 0.0
    %1178 = vmatpush1.msra.mxu0 0.0
    %1179 = vmatprep.subr.mxu0 0.0
    %1180 = vmatpush1.msra.mxu0 0.0
    %1181 = vmatprep.mubr.f32.mxu0 0.0
    %1182 = vmatmul.mubr.f32.gmra.mrb[0].mxu0 %v1109
    %v1183 = vpop.f32.mrb[0].mxu0
    %v1184 = vadd.f32 0.0, %v1183
    %v1185 = vpop.f32.mrb[0].mxu0
    %1186 = vmatprep.mubr.f32.mxu0 0.0
    %1187 = vmatmul.mubr.f32.gmra.mrb[0].mxu0 %v1112
    %v1188 = vpop.f32.mrb[0].mxu0
    %v1189 = vadd.f32 0.0, %v1188
    %v1190 = vpop.f32.mrb[0].mxu0
    %1191 = vdwg.mxu0
    %v1192 = vld [vmem:[%s7 + $0x8] sm:$0xff]
    %v1194 = vsel %vm454, %v1184, 0
    %v1197 = vsel %vm454, %v1189, 0
    %1199 = vmatprep.subr.mxu0 0.0
    %1200 = vmatpush1.msra.mxu0 %v1192
    %1201 = vmatprep.subr.mxu0 0.0
    %1202 = vmatpush1.msra.mxu0 0.0
    %1203 = vmatprep.subr.mxu0 0.0
    %1204 = vmatpush1.msra.mxu0 0.0
    %1205 = vmatprep.subr.mxu0 0.0
    %1206 = vmatpush1.msra.mxu0 0.0
    %1207 = vmatprep.subr.mxu0 0.0
    %1208 = vmatpush1.msra.mxu0 0.0
    %1209 = vmatprep.subr.mxu0 0.0
    %1210 = vmatpush1.msra.mxu0 0.0
    %1211 = vmatprep.subr.mxu0 0.0
    %1212 = vmatpush1.msra.mxu0 0.0
    %1213 = vmatprep.subr.mxu0 0.0
    %1214 = vmatpush1.msra.mxu0 0.0
    %1215 = vmatprep.subr.mxu0 0.0
    %1216 = vmatpush1.msra.mxu0 0.0
    %1217 = vmatprep.subr.mxu0 0.0
    %1218 = vmatpush1.msra.mxu0 0.0
    %1219 = vmatprep.subr.mxu0 0.0
    %1220 = vmatpush1.msra.mxu0 0.0
    %1221 = vmatprep.subr.mxu0 0.0
    %1222 = vmatpush1.msra.mxu0 0.0
    %1223 = vmatprep.subr.mxu0 0.0
    %1224 = vmatpush1.msra.mxu0 0.0
    %1225 = vmatprep.subr.mxu0 0.0
    %1226 = vmatpush1.msra.mxu0 0.0
    %1227 = vmatprep.subr.mxu0 0.0
    %1228 = vmatpush1.msra.mxu0 0.0
    %1229 = vmatprep.subr.mxu0 0.0
    %1230 = vmatpush1.msra.mxu0 0.0
    %1231 = vmatprep.subr.mxu0 0.0
    %1232 = vmatpush1.msra.mxu0 0.0
    %1233 = vmatprep.subr.mxu0 0.0
    %1234 = vmatpush1.msra.mxu0 0.0
    %1235 = vmatprep.subr.mxu0 0.0
    %1236 = vmatpush1.msra.mxu0 0.0
    %1237 = vmatprep.subr.mxu0 0.0
    %1238 = vmatpush1.msra.mxu0 0.0
    %1239 = vmatprep.subr.mxu0 0.0
    %1240 = vmatpush1.msra.mxu0 0.0
    %1241 = vmatprep.subr.mxu0 0.0
    %1242 = vmatpush1.msra.mxu0 0.0
    %1243 = vmatprep.subr.mxu0 0.0
    %1244 = vmatpush1.msra.mxu0 0.0
    %1245 = vmatprep.subr.mxu0 0.0
    %1246 = vmatpush1.msra.mxu0 0.0
    %1247 = vmatprep.subr.mxu0 0.0
    %1248 = vmatpush1.msra.mxu0 0.0
    %1249 = vmatprep.subr.mxu0 0.0
    %1250 = vmatpush1.msra.mxu0 0.0
    %1251 = vmatprep.subr.mxu0 0.0
    %1252 = vmatpush1.msra.mxu0 0.0
    %1253 = vmatprep.subr.mxu0 0.0
    %1254 = vmatpush1.msra.mxu0 0.0
    %1255 = vmatprep.subr.mxu0 0.0
    %1256 = vmatpush1.msra.mxu0 0.0
    %1257 = vmatprep.subr.mxu0 0.0
    %1258 = vmatpush1.msra.mxu0 0.0
    %1259 = vmatprep.subr.mxu0 0.0
    %1260 = vmatpush1.msra.mxu0 0.0
    %1261 = vmatprep.subr.mxu0 0.0
    %1262 = vmatpush1.msra.mxu0 0.0
    %1263 = vmatprep.mubr.f32.mxu0 0.0
    %1264 = vmatmul.mubr.f32.gmra.mrb[0].mxu0 %v1194
    %v1265 = vpop.f32.mrb[0].mxu0
    %v1266 = vadd.f32 0.0, %v1265
    %v1267 = vpop.f32.mrb[0].mxu0
    %1268 = vmatprep.mubr.f32.mxu0 0.0
    %1269 = vmatmul.mubr.f32.gmra.mrb[0].mxu0 %v1197
    %v1270 = vpop.f32.mrb[0].mxu0
    %v1271 = vadd.f32 0.0, %v1270
    %v1272 = vpop.f32.mrb[0].mxu0
    %1273 = vdwg.mxu0
    %v1274 = vadd.f32 %v734, %v1266
    %v1275 = vadd.f32 %v735, %v1271
    %1276 = vrot.lane.b32.xlu0 %v191, 112
    %v1277 = vpop.permute.xlu0 %1276
    %1278 = vrot.lane.b32.xlu0 %v192, 112
    %v1279 = vpop.permute.xlu0 %1278
    %1280 = vrot.lane.b32.xlu0 %v193, 112
    %v1281 = vpop.permute.xlu0 %1280
    %1282 = vrot.lane.b32.xlu0 %v194, 112
    %v1283 = vpop.permute.xlu0 %1282
    %1288 = vmatprep.subr.mxu0 0.0
    %1289 = vmatpush1.msra.mxu0 %v1277
    %1290 = vmatprep.subr.mxu0 0.0
    %1291 = vmatpush1.msra.mxu0 %v1279
    %1292 = vmatprep.subr.mxu0 0.0
    %1293 = vmatpush1.msra.mxu0 %v1281
    %1294 = vmatprep.subr.mxu0 0.0
    %1295 = vmatpush1.msra.mxu0 %v1283
    %1296 = vmatprep.subr.mxu0 0.0
    %1297 = vmatpush1.msra.mxu0 0.0
    %1298 = vmatprep.subr.mxu0 0.0
    %1299 = vmatpush1.msra.mxu0 0.0
    %1300 = vmatprep.subr.mxu0 0.0
    %1301 = vmatpush1.msra.mxu0 0.0
    %1302 = vmatprep.subr.mxu0 0.0
    %1303 = vmatpush1.msra.mxu0 0.0
    %1304 = vmatprep.subr.mxu0 0.0
    %1305 = vmatpush1.msra.mxu0 0.0
    %1306 = vmatprep.subr.mxu0 0.0
    %1307 = vmatpush1.msra.mxu0 0.0
    %1308 = vmatprep.subr.mxu0 0.0
    %1309 = vmatpush1.msra.mxu0 0.0
    %1310 = vmatprep.subr.mxu0 0.0
    %1311 = vmatpush1.msra.mxu0 0.0
    %1312 = vmatprep.subr.mxu0 0.0
    %1313 = vmatpush1.msra.mxu0 0.0
    %1314 = vmatprep.subr.mxu0 0.0
    %1315 = vmatpush1.msra.mxu0 0.0
    %1316 = vmatprep.subr.mxu0 0.0
    %1317 = vmatpush1.msra.mxu0 0.0
    %1318 = vmatprep.subr.mxu0 0.0
    %1319 = vmatpush1.msra.mxu0 0.0
    %1320 = vmatprep.subr.mxu0 0.0
    %1321 = vmatpush1.msra.mxu0 0.0
    %1322 = vmatprep.subr.mxu0 0.0
    %1323 = vmatpush1.msra.mxu0 0.0
    %1324 = vmatprep.subr.mxu0 0.0
    %1325 = vmatpush1.msra.mxu0 0.0
    %1326 = vmatprep.subr.mxu0 0.0
    %1327 = vmatpush1.msra.mxu0 0.0
    %1328 = vmatprep.subr.mxu0 0.0
    %1329 = vmatpush1.msra.mxu0 0.0
    %1330 = vmatprep.subr.mxu0 0.0
    %1331 = vmatpush1.msra.mxu0 0.0
    %1332 = vmatprep.subr.mxu0 0.0
    %1333 = vmatpush1.msra.mxu0 0.0
    %1334 = vmatprep.subr.mxu0 0.0
    %1335 = vmatpush1.msra.mxu0 0.0
    %1336 = vmatprep.subr.mxu0 0.0
    %1337 = vmatpush1.msra.mxu0 0.0
    %1338 = vmatprep.subr.mxu0 0.0
    %1339 = vmatpush1.msra.mxu0 0.0
    %1340 = vmatprep.subr.mxu0 0.0
    %1341 = vmatpush1.msra.mxu0 0.0
    %1342 = vmatprep.subr.mxu0 0.0
    %1343 = vmatpush1.msra.mxu0 0.0
    %1344 = vmatprep.subr.mxu0 0.0
    %1345 = vmatpush1.msra.mxu0 0.0
    %1346 = vmatprep.subr.mxu0 0.0
    %1347 = vmatpush1.msra.mxu0 0.0
    %1348 = vmatprep.subr.mxu0 0.0
    %1349 = vmatpush1.msra.mxu0 0.0
    %1350 = vmatprep.subr.mxu0 0.0
    %1351 = vmatpush1.msra.mxu0 0.0
    %1352 = vmatprep.mubr.f32.mxu0 0.0
    %1353 = vmatmul.mubr.f32.gmra.mrb[0].mxu0 %v196
    %v1354 = vpop.f32.mrb[0].mxu0
    %v1355 = vadd.f32 0.0, %v1354
    %v1356 = vpop.f32.mrb[0].mxu0
    %1357 = vmatprep.mubr.f32.mxu0 0.0
    %1358 = vmatmul.mubr.f32.gmra.mrb[0].mxu0 %v199
    %v1359 = vpop.f32.mrb[0].mxu0
    %v1360 = vadd.f32 0.0, %v1359
    %v1361 = vpop.f32.mrb[0].mxu0
    %1362 = vdwg.mxu0
    %1363 = vrot.lane.b32.xlu0 %v191, 80
    %v1364 = vpop.permute.xlu0 %1363
    %1365 = vrot.lane.b32.xlu0 %v192, 80
    %v1366 = vpop.permute.xlu0 %1365
    %1367 = vrot.lane.b32.xlu0 %v193, 80
    %v1368 = vpop.permute.xlu0 %1367
    %1369 = vrot.lane.b32.xlu0 %v194, 80
    %v1370 = vpop.permute.xlu0 %1369
    %1375 = vmatprep.subr.mxu0 0.0
    %1376 = vmatpush1.msra.mxu0 %v1364
    %1377 = vmatprep.subr.mxu0 0.0
    %1378 = vmatpush1.msra.mxu0 %v1366
    %1379 = vmatprep.subr.mxu0 0.0
    %1380 = vmatpush1.msra.mxu0 %v1368
    %1381 = vmatprep.subr.mxu0 0.0
    %1382 = vmatpush1.msra.mxu0 %v1370
    %1383 = vmatprep.subr.mxu0 0.0
    %1384 = vmatpush1.msra.mxu0 0.0
    %1385 = vmatprep.subr.mxu0 0.0
    %1386 = vmatpush1.msra.mxu0 0.0
    %1387 = vmatprep.subr.mxu0 0.0
    %1388 = vmatpush1.msra.mxu0 0.0
    %1389 = vmatprep.subr.mxu0 0.0
    %1390 = vmatpush1.msra.mxu0 0.0
    %1391 = vmatprep.subr.mxu0 0.0
    %1392 = vmatpush1.msra.mxu0 0.0
    %1393 = vmatprep.subr.mxu0 0.0
    %1394 = vmatpush1.msra.mxu0 0.0
    %1395 = vmatprep.subr.mxu0 0.0
    %1396 = vmatpush1.msra.mxu0 0.0
    %1397 = vmatprep.subr.mxu0 0.0
    %1398 = vmatpush1.msra.mxu0 0.0
    %1399 = vmatprep.subr.mxu0 0.0
    %1400 = vmatpush1.msra.mxu0 0.0
    %1401 = vmatprep.subr.mxu0 0.0
    %1402 = vmatpush1.msra.mxu0 0.0
    %1403 = vmatprep.subr.mxu0 0.0
    %1404 = vmatpush1.msra.mxu0 0.0
    %1405 = vmatprep.subr.mxu0 0.0
    %1406 = vmatpush1.msra.mxu0 0.0
    %1407 = vmatprep.subr.mxu0 0.0
    %1408 = vmatpush1.msra.mxu0 0.0
    %1409 = vmatprep.subr.mxu0 0.0
    %1410 = vmatpush1.msra.mxu0 0.0
    %1411 = vmatprep.subr.mxu0 0.0
    %1412 = vmatpush1.msra.mxu0 0.0
    %1413 = vmatprep.subr.mxu0 0.0
    %1414 = vmatpush1.msra.mxu0 0.0
    %1415 = vmatprep.subr.mxu0 0.0
    %1416 = vmatpush1.msra.mxu0 0.0
    %1417 = vmatprep.subr.mxu0 0.0
    %1418 = vmatpush1.msra.mxu0 0.0
    %1419 = vmatprep.subr.mxu0 0.0
    %1420 = vmatpush1.msra.mxu0 0.0
    %1421 = vmatprep.subr.mxu0 0.0
    %1422 = vmatpush1.msra.mxu0 0.0
    %1423 = vmatprep.subr.mxu0 0.0
    %1424 = vmatpush1.msra.mxu0 0.0
    %1425 = vmatprep.subr.mxu0 0.0
    %1426 = vmatpush1.msra.mxu0 0.0
    %1427 = vmatprep.subr.mxu0 0.0
    %1428 = vmatpush1.msra.mxu0 0.0
    %1429 = vmatprep.subr.mxu0 0.0
    %1430 = vmatpush1.msra.mxu0 0.0
    %1431 = vmatprep.subr.mxu0 0.0
    %1432 = vmatpush1.msra.mxu0 0.0
    %1433 = vmatprep.subr.mxu0 0.0
    %1434 = vmatpush1.msra.mxu0 0.0
    %1435 = vmatprep.subr.mxu0 0.0
    %1436 = vmatpush1.msra.mxu0 0.0
    %1437 = vmatprep.subr.mxu0 0.0
    %1438 = vmatpush1.msra.mxu0 0.0
    %1439 = vmatprep.mubr.f32.mxu0 0.0
    %1440 = vmatmul.mubr.f32.gmra.mrb[0].mxu0 %v196
    %v1441 = vpop.f32.mrb[0].mxu0
    %v1442 = vadd.f32 0.0, %v1441
    %v1443 = vpop.f32.mrb[0].mxu0
    %1444 = vmatprep.mubr.f32.mxu0 0.0
    %1445 = vmatmul.mubr.f32.gmra.mrb[0].mxu0 %v199
    %v1446 = vpop.f32.mrb[0].mxu0
    %v1447 = vadd.f32 0.0, %v1446
    %v1448 = vpop.f32.mrb[0].mxu0
    %1449 = vdwg.mxu0
    %1450 = vrot.lane.b32.xlu0 %v191, 48
    %v1451 = vpop.permute.xlu0 %1450
    %1452 = vrot.lane.b32.xlu0 %v192, 48
    %v1453 = vpop.permute.xlu0 %1452
    %1454 = vrot.lane.b32.xlu0 %v193, 48
    %v1455 = vpop.permute.xlu0 %1454
    %1456 = vrot.lane.b32.xlu0 %v194, 48
    %v1457 = vpop.permute.xlu0 %1456
    %1462 = vmatprep.subr.mxu0 0.0
    %1463 = vmatpush1.msra.mxu0 %v1451
    %1464 = vmatprep.subr.mxu0 0.0
    %1465 = vmatpush1.msra.mxu0 %v1453
    %1466 = vmatprep.subr.mxu0 0.0
    %1467 = vmatpush1.msra.mxu0 %v1455
    %1468 = vmatprep.subr.mxu0 0.0
    %1469 = vmatpush1.msra.mxu0 %v1457
    %1470 = vmatprep.subr.mxu0 0.0
    %1471 = vmatpush1.msra.mxu0 0.0
    %1472 = vmatprep.subr.mxu0 0.0
    %1473 = vmatpush1.msra.mxu0 0.0
    %1474 = vmatprep.subr.mxu0 0.0
    %1475 = vmatpush1.msra.mxu0 0.0
    %1476 = vmatprep.subr.mxu0 0.0
    %1477 = vmatpush1.msra.mxu0 0.0
    %1478 = vmatprep.subr.mxu0 0.0
    %1479 = vmatpush1.msra.mxu0 0.0
    %1480 = vmatprep.subr.mxu0 0.0
    %1481 = vmatpush1.msra.mxu0 0.0
    %1482 = vmatprep.subr.mxu0 0.0
    %1483 = vmatpush1.msra.mxu0 0.0
    %1484 = vmatprep.subr.mxu0 0.0
    %1485 = vmatpush1.msra.mxu0 0.0
    %1486 = vmatprep.subr.mxu0 0.0
    %1487 = vmatpush1.msra.mxu0 0.0
    %1488 = vmatprep.subr.mxu0 0.0
    %1489 = vmatpush1.msra.mxu0 0.0
    %1490 = vmatprep.subr.mxu0 0.0
    %1491 = vmatpush1.msra.mxu0 0.0
    %1492 = vmatprep.subr.mxu0 0.0
    %1493 = vmatpush1.msra.mxu0 0.0
    %1494 = vmatprep.subr.mxu0 0.0
    %1495 = vmatpush1.msra.mxu0 0.0
    %1496 = vmatprep.subr.mxu0 0.0
    %1497 = vmatpush1.msra.mxu0 0.0
    %1498 = vmatprep.subr.mxu0 0.0
    %1499 = vmatpush1.msra.mxu0 0.0
    %1500 = vmatprep.subr.mxu0 0.0
    %1501 = vmatpush1.msra.mxu0 0.0
    %1502 = vmatprep.subr.mxu0 0.0
    %1503 = vmatpush1.msra.mxu0 0.0
    %1504 = vmatprep.subr.mxu0 0.0
    %1505 = vmatpush1.msra.mxu0 0.0
    %1506 = vmatprep.subr.mxu0 0.0
    %1507 = vmatpush1.msra.mxu0 0.0
    %1508 = vmatprep.subr.mxu0 0.0
    %1509 = vmatpush1.msra.mxu0 0.0
    %1510 = vmatprep.subr.mxu0 0.0
    %1511 = vmatpush1.msra.mxu0 0.0
    %1512 = vmatprep.subr.mxu0 0.0
    %1513 = vmatpush1.msra.mxu0 0.0
    %1514 = vmatprep.subr.mxu0 0.0
    %1515 = vmatpush1.msra.mxu0 0.0
    %1516 = vmatprep.subr.mxu0 0.0
    %1517 = vmatpush1.msra.mxu0 0.0
    %1518 = vmatprep.subr.mxu0 0.0
    %1519 = vmatpush1.msra.mxu0 0.0
    %1520 = vmatprep.subr.mxu0 0.0
    %1521 = vmatpush1.msra.mxu0 0.0
    %1522 = vmatprep.subr.mxu0 0.0
    %1523 = vmatpush1.msra.mxu0 0.0
    %1524 = vmatprep.subr.mxu0 0.0
    %1525 = vmatpush1.msra.mxu0 0.0
    %1526 = vmatprep.mubr.f32.mxu0 0.0
    %1527 = vmatmul.mubr.f32.gmra.mrb[0].mxu0 %v196
    %v1528 = vpop.f32.mrb[0].mxu0
    %v1529 = vadd.f32 0.0, %v1528
    %v1530 = vpop.f32.mrb[0].mxu0
    %1531 = vmatprep.mubr.f32.mxu0 0.0
    %1532 = vmatmul.mubr.f32.gmra.mrb[0].mxu0 %v199
    %v1533 = vpop.f32.mrb[0].mxu0
    %v1534 = vadd.f32 0.0, %v1533
    %v1535 = vpop.f32.mrb[0].mxu0
    %1536 = vdwg.mxu0
    %v1538 = vsel %vm454, %v1355, 0
    %v1541 = vsel %vm454, %v1360, 0
    %v1544 = vsel %vm454, %v1442, 0
    %v1547 = vsel %vm454, %v1447, 0
    %1549 = vmatprep.subr.mxu0 0.0
    %1550 = vmatpush1.xpose.msra.mxu0 %v1544
    %1551 = vmatprep.subr.mxu0 0.0
    %1552 = vmatpush1.xpose.msra.mxu0 %v1547
    %1553 = vmatprep.subr.mxu0 0.0
    %1554 = vmatpush1.xpose.msra.mxu0 0.0
    %1555 = vmatprep.subr.mxu0 0.0
    %1556 = vmatpush1.xpose.msra.mxu0 0.0
    %1557 = vmatprep.subr.mxu0 0.0
    %1558 = vmatpush1.xpose.msra.mxu0 0.0
    %1559 = vmatprep.subr.mxu0 0.0
    %1560 = vmatpush1.xpose.msra.mxu0 0.0
    %1561 = vmatprep.subr.mxu0 0.0
    %1562 = vmatpush1.xpose.msra.mxu0 0.0
    %1563 = vmatprep.subr.mxu0 0.0
    %1564 = vmatpush1.xpose.msra.mxu0 0.0
    %1565 = vmatprep.subr.mxu0 0.0
    %1566 = vmatpush1.xpose.msra.mxu0 0.0
    %1567 = vmatprep.subr.mxu0 0.0
    %1568 = vmatpush1.xpose.msra.mxu0 0.0
    %1569 = vmatprep.subr.mxu0 0.0
    %1570 = vmatpush1.xpose.msra.mxu0 0.0
    %1571 = vmatprep.subr.mxu0 0.0
    %1572 = vmatpush1.xpose.msra.mxu0 0.0
    %1573 = vmatprep.subr.mxu0 0.0
    %1574 = vmatpush1.xpose.msra.mxu0 0.0
    %1575 = vmatprep.subr.mxu0 0.0
    %1576 = vmatpush1.xpose.msra.mxu0 0.0
    %1577 = vmatprep.subr.mxu0 0.0
    %1578 = vmatpush1.xpose.msra.mxu0 0.0
    %1579 = vmatprep.subr.mxu0 0.0
    %1580 = vmatpush1.xpose.msra.mxu0 0.0
    %1581 = vmatprep.subr.mxu0 0.0
    %1582 = vmatpush1.xpose.msra.mxu0 0.0
    %1583 = vmatprep.subr.mxu0 0.0
    %1584 = vmatpush1.xpose.msra.mxu0 0.0
    %1585 = vmatprep.subr.mxu0 0.0
    %1586 = vmatpush1.xpose.msra.mxu0 0.0
    %1587 = vmatprep.subr.mxu0 0.0
    %1588 = vmatpush1.xpose.msra.mxu0 0.0
    %1589 = vmatprep.subr.mxu0 0.0
    %1590 = vmatpush1.xpose.msra.mxu0 0.0
    %1591 = vmatprep.subr.mxu0 0.0
    %1592 = vmatpush1.xpose.msra.mxu0 0.0
    %1593 = vmatprep.subr.mxu0 0.0
    %1594 = vmatpush1.xpose.msra.mxu0 0.0
    %1595 = vmatprep.subr.mxu0 0.0
    %1596 = vmatpush1.xpose.msra.mxu0 0.0
    %1597 = vmatprep.subr.mxu0 0.0
    %1598 = vmatpush1.xpose.msra.mxu0 0.0
    %1599 = vmatprep.subr.mxu0 0.0
    %1600 = vmatpush1.xpose.msra.mxu0 0.0
    %1601 = vmatprep.subr.mxu0 0.0
    %1602 = vmatpush1.xpose.msra.mxu0 0.0
    %1603 = vmatprep.subr.mxu0 0.0
    %1604 = vmatpush1.xpose.msra.mxu0 0.0
    %1605 = vmatprep.subr.mxu0 0.0
    %1606 = vmatpush1.xpose.msra.mxu0 0.0
    %1607 = vmatprep.subr.mxu0 0.0
    %1608 = vmatpush1.xpose.msra.mxu0 0.0
    %1609 = vmatprep.subr.mxu0 0.0
    %1610 = vmatpush1.xpose.msra.mxu0 0.0
    %1611 = vmatprep.subr.mxu0 0.0
    %1612 = vmatpush1.xpose.msra.mxu0 0.0
    %1613 = vmatprep.mubr.f32.mxu0 0.0
    %1614 = vmatmul.mubr.f32.gmra.mrb[0].mxu0 %v1538
    %v1615 = vpop.f32.mrb[0].mxu0
    %v1616 = vadd.f32 %v142, %v1615
    %v1617 = vpop.f32.mrb[0].mxu0
    %1618 = vmatprep.mubr.f32.mxu0 0.0
    %1619 = vmatmul.mubr.f32.gmra.mrb[0].mxu0 %v1541
    %v1620 = vpop.f32.mrb[0].mxu0
    %v1621 = vadd.f32 %v143, %v1620
    %v1622 = vpop.f32.mrb[0].mxu0
    %1623 = vdwg.mxu0
    %v1624 = vsel %vm542, %v1616, -inf
    %1625 = vmax.xlane.f32.xlu0 %v1624
    %v1626 = vpop.xlane.xlu0 %1625
    %v1627 = vsel %vm546, %v1621, -inf
    %1628 = vmax.xlane.f32.xlu0 %v1627
    %v1629 = vpop.xlane.xlu0 %1628
    %v1630 = vsub.f32 %v1616, %v1626
    %v1631 = vsub.f32 %v1621, %v1629
    %v1632 = vmul.f32 %v1630, 1.442695
    %v1633 = vpow.pop %v1632
    %v1634 = vmul.f32 %v1631, 1.442695
    %v1635 = vpow.pop %v1634
    %v1636 = vsel %vm542, %v1633, 0.0
    %1637 = vadd.xlane.f32.xlu0 %v1636
    %v1638 = vpop.xlane.xlu0 %1637
    %v1639 = vsel %vm546, %v1635, 0.0
    %1640 = vadd.xlane.f32.xlu0 %v1639
    %v1641 = vpop.xlane.xlu0 %1640
    %v1642 = vrcp.pop %v1638
    %v1643 = vmul.f32 1.0, %v1642
    %v1644 = vrcp.pop %v1641
    %v1645 = vmul.f32 1.0, %v1644
    %v1646 = vmul.f32 %v1633, %v1643
    %v1647 = vmul.f32 %v1635, %v1645
    %v1649 = vsel %vm542, %v1646, 0
    %v1652 = vsel %vm542, %v1647, 0
    %v1655 = vsel %vm63, %v1534, 0
    %1657 = vmatprep.subr.mxu0 0.0
    %1658 = vmatpush1.msra.mxu0 %v1529
    %1659 = vmatprep.subr.mxu0 0.0
    %1660 = vmatpush1.msra.mxu0 %v1655
    %1661 = vmatprep.subr.mxu0 0.0
    %1662 = vmatpush1.msra.mxu0 0.0
    %1663 = vmatprep.subr.mxu0 0.0
    %1664 = vmatpush1.msra.mxu0 0.0
    %1665 = vmatprep.subr.mxu0 0.0
    %1666 = vmatpush1.msra.mxu0 0.0
    %1667 = vmatprep.subr.mxu0 0.0
    %1668 = vmatpush1.msra.mxu0 0.0
    %1669 = vmatprep.subr.mxu0 0.0
    %1670 = vmatpush1.msra.mxu0 0.0
    %1671 = vmatprep.subr.mxu0 0.0
    %1672 = vmatpush1.msra.mxu0 0.0
    %1673 = vmatprep.subr.mxu0 0.0
    %1674 = vmatpush1.msra.mxu0 0.0
    %1675 = vmatprep.subr.mxu0 0.0
    %1676 = vmatpush1.msra.mxu0 0.0
    %1677 = vmatprep.subr.mxu0 0.0
    %1678 = vmatpush1.msra.mxu0 0.0
    %1679 = vmatprep.subr.mxu0 0.0
    %1680 = vmatpush1.msra.mxu0 0.0
    %1681 = vmatprep.subr.mxu0 0.0
    %1682 = vmatpush1.msra.mxu0 0.0
    %1683 = vmatprep.subr.mxu0 0.0
    %1684 = vmatpush1.msra.mxu0 0.0
    %1685 = vmatprep.subr.mxu0 0.0
    %1686 = vmatpush1.msra.mxu0 0.0
    %1687 = vmatprep.subr.mxu0 0.0
    %1688 = vmatpush1.msra.mxu0 0.0
    %1689 = vmatprep.subr.mxu0 0.0
    %1690 = vmatpush1.msra.mxu0 0.0
    %1691 = vmatprep.subr.mxu0 0.0
    %1692 = vmatpush1.msra.mxu0 0.0
    %1693 = vmatprep.subr.mxu0 0.0
    %1694 = vmatpush1.msra.mxu0 0.0
    %1695 = vmatprep.subr.mxu0 0.0
    %1696 = vmatpush1.msra.mxu0 0.0
    %1697 = vmatprep.subr.mxu0 0.0
    %1698 = vmatpush1.msra.mxu0 0.0
    %1699 = vmatprep.subr.mxu0 0.0
    %1700 = vmatpush1.msra.mxu0 0.0
    %1701 = vmatprep.subr.mxu0 0.0
    %1702 = vmatpush1.msra.mxu0 0.0
    %1703 = vmatprep.subr.mxu0 0.0
    %1704 = vmatpush1.msra.mxu0 0.0
    %1705 = vmatprep.subr.mxu0 0.0
    %1706 = vmatpush1.msra.mxu0 0.0
    %1707 = vmatprep.subr.mxu0 0.0
    %1708 = vmatpush1.msra.mxu0 0.0
    %1709 = vmatprep.subr.mxu0 0.0
    %1710 = vmatpush1.msra.mxu0 0.0
    %1711 = vmatprep.subr.mxu0 0.0
    %1712 = vmatpush1.msra.mxu0 0.0
    %1713 = vmatprep.subr.mxu0 0.0
    %1714 = vmatpush1.msra.mxu0 0.0
    %1715 = vmatprep.subr.mxu0 0.0
    %1716 = vmatpush1.msra.mxu0 0.0
    %1717 = vmatprep.subr.mxu0 0.0
    %1718 = vmatpush1.msra.mxu0 0.0
    %1719 = vmatprep.subr.mxu0 0.0
    %1720 = vmatpush1.msra.mxu0 0.0
    %1721 = vmatprep.mubr.f32.mxu0 0.0
    %1722 = vmatmul.mubr.f32.gmra.mrb[0].mxu0 %v1649
    %v1723 = vpop.f32.mrb[0].mxu0
    %v1724 = vadd.f32 0.0, %v1723
    %v1725 = vpop.f32.mrb[0].mxu0
    %1726 = vmatprep.mubr.f32.mxu0 0.0
    %1727 = vmatmul.mubr.f32.gmra.mrb[0].mxu0 %v1652
    %v1728 = vpop.f32.mrb[0].mxu0
    %v1729 = vadd.f32 0.0, %v1728
    %v1730 = vpop.f32.mrb[0].mxu0
    %1731 = vdwg.mxu0
    %v1732 = vld [vmem:[%s7 + $0x10] sm:$0xff]
    %v1734 = vsel %vm454, %v1724, 0
    %v1737 = vsel %vm454, %v1729, 0
    %1739 = vmatprep.subr.mxu0 0.0
    %1740 = vmatpush1.msra.mxu0 %v1732
    %1741 = vmatprep.subr.mxu0 0.0
    %1742 = vmatpush1.msra.mxu0 0.0
    %1743 = vmatprep.subr.mxu0 0.0
    %1744 = vmatpush1.msra.mxu0 0.0
    %1745 = vmatprep.subr.mxu0 0.0
    %1746 = vmatpush1.msra.mxu0 0.0
    %1747 = vmatprep.subr.mxu0 0.0
    %1748 = vmatpush1.msra.mxu0 0.0
    %1749 = vmatprep.subr.mxu0 0.0
    %1750 = vmatpush1.msra.mxu0 0.0
    %1751 = vmatprep.subr.mxu0 0.0
    %1752 = vmatpush1.msra.mxu0 0.0
    %1753 = vmatprep.subr.mxu0 0.0
    %1754 = vmatpush1.msra.mxu0 0.0
    %1755 = vmatprep.subr.mxu0 0.0
    %1756 = vmatpush1.msra.mxu0 0.0
    %1757 = vmatprep.subr.mxu0 0.0
    %1758 = vmatpush1.msra.mxu0 0.0
    %1759 = vmatprep.subr.mxu0 0.0
    %1760 = vmatpush1.msra.mxu0 0.0
    %1761 = vmatprep.subr.mxu0 0.0
    %1762 = vmatpush1.msra.mxu0 0.0
    %1763 = vmatprep.subr.mxu0 0.0
    %1764 = vmatpush1.msra.mxu0 0.0
    %1765 = vmatprep.subr.mxu0 0.0
    %1766 = vmatpush1.msra.mxu0 0.0
    %1767 = vmatprep.subr.mxu0 0.0
    %1768 = vmatpush1.msra.mxu0 0.0
    %1769 = vmatprep.subr.mxu0 0.0
    %1770 = vmatpush1.msra.mxu0 0.0
    %1771 = vmatprep.subr.mxu0 0.0
    %1772 = vmatpush1.msra.mxu0 0.0
    %1773 = vmatprep.subr.mxu0 0.0
    %1774 = vmatpush1.msra.mxu0 0.0
    %1775 = vmatprep.subr.mxu0 0.0
    %1776 = vmatpush1.msra.mxu0 0.0
    %1777 = vmatprep.subr.mxu0 0.0
    %1778 = vmatpush1.msra.mxu0 0.0
    %1779 = vmatprep.subr.mxu0 0.0
    %1780 = vmatpush1.msra.mxu0 0.0
    %1781 = vmatprep.subr.mxu0 0.0
    %1782 = vmatpush1.msra.mxu0 0.0
    %1783 = vmatprep.subr.mxu0 0.0
    %1784 = vmatpush1.msra.mxu0 0.0
    %1785 = vmatprep.subr.mxu0 0.0
    %1786 = vmatpush1.msra.mxu0 0.0
    %1787 = vmatprep.subr.mxu0 0.0
    %1788 = vmatpush1.msra.mxu0 0.0
    %1789 = vmatprep.subr.mxu0 0.0
    %1790 = vmatpush1.msra.mxu0 0.0
    %1791 = vmatprep.subr.mxu0 0.0
    %1792 = vmatpush1.msra.mxu0 0.0
    %1793 = vmatprep.subr.mxu0 0.0
    %1794 = vmatpush1.msra.mxu0 0.0
    %1795 = vmatprep.subr.mxu0 0.0
    %1796 = vmatpush1.msra.mxu0 0.0
    %1797 = vmatprep.subr.mxu0 0.0
    %1798 = vmatpush1.msra.mxu0 0.0
    %1799 = vmatprep.subr.mxu0 0.0
    %1800 = vmatpush1.msra.mxu0 0.0
    %1801 = vmatprep.subr.mxu0 0.0
    %1802 = vmatpush1.msra.mxu0 0.0
    %1803 = vmatprep.mubr.f32.mxu0 0.0
    %1804 = vmatmul.mubr.f32.gmra.mrb[0].mxu0 %v1734
    %v1805 = vpop.f32.mrb[0].mxu0
    %v1806 = vadd.f32 0.0, %v1805
    %v1807 = vpop.f32.mrb[0].mxu0
    %1808 = vmatprep.mubr.f32.mxu0 0.0
    %1809 = vmatmul.mubr.f32.gmra.mrb[0].mxu0 %v1737
    %v1810 = vpop.f32.mrb[0].mxu0
    %v1811 = vadd.f32 0.0, %v1810
    %v1812 = vpop.f32.mrb[0].mxu0
    %1813 = vdwg.mxu0
    %v1814 = vadd.f32 %v1274, %v1806
    %v1815 = vadd.f32 %v1275, %v1811
    %1816 = vrot.lane.b32.xlu0 %v191, 104
    %v1817 = vpop.permute.xlu0 %1816
    %1818 = vrot.lane.b32.xlu0 %v192, 104
    %v1819 = vpop.permute.xlu0 %1818
    %1820 = vrot.lane.b32.xlu0 %v193, 104
    %v1821 = vpop.permute.xlu0 %1820
    %1822 = vrot.lane.b32.xlu0 %v194, 104
    %v1823 = vpop.permute.xlu0 %1822
    %1828 = vmatprep.subr.mxu0 0.0
    %1829 = vmatpush1.msra.mxu0 %v1817
    %1830 = vmatprep.subr.mxu0 0.0
    %1831 = vmatpush1.msra.mxu0 %v1819
    %1832 = vmatprep.subr.mxu0 0.0
    %1833 = vmatpush1.msra.mxu0 %v1821
    %1834 = vmatprep.subr.mxu0 0.0
    %1835 = vmatpush1.msra.mxu0 %v1823
    %1836 = vmatprep.subr.mxu0 0.0
    %1837 = vmatpush1.msra.mxu0 0.0
    %1838 = vmatprep.subr.mxu0 0.0
    %1839 = vmatpush1.msra.mxu0 0.0
    %1840 = vmatprep.subr.mxu0 0.0
    %1841 = vmatpush1.msra.mxu0 0.0
    %1842 = vmatprep.subr.mxu0 0.0
    %1843 = vmatpush1.msra.mxu0 0.0
    %1844 = vmatprep.subr.mxu0 0.0
    %1845 = vmatpush1.msra.mxu0 0.0
    %1846 = vmatprep.subr.mxu0 0.0
    %1847 = vmatpush1.msra.mxu0 0.0
    %1848 = vmatprep.subr.mxu0 0.0
    %1849 = vmatpush1.msra.mxu0 0.0
    %1850 = vmatprep.subr.mxu0 0.0
    %1851 = vmatpush1.msra.mxu0 0.0
    %1852 = vmatprep.subr.mxu0 0.0
    %1853 = vmatpush1.msra.mxu0 0.0
    %1854 = vmatprep.subr.mxu0 0.0
    %1855 = vmatpush1.msra.mxu0 0.0
    %1856 = vmatprep.subr.mxu0 0.0
    %1857 = vmatpush1.msra.mxu0 0.0
    %1858 = vmatprep.subr.mxu0 0.0
    %1859 = vmatpush1.msra.mxu0 0.0
    %1860 = vmatprep.subr.mxu0 0.0
    %1861 = vmatpush1.msra.mxu0 0.0
    %1862 = vmatprep.subr.mxu0 0.0
    %1863 = vmatpush1.msra.mxu0 0.0
    %1864 = vmatprep.subr.mxu0 0.0
    %1865 = vmatpush1.msra.mxu0 0.0
    %1866 = vmatprep.subr.mxu0 0.0
    %1867 = vmatpush1.msra.mxu0 0.0
    %1868 = vmatprep.subr.mxu0 0.0
    %1869 = vmatpush1.msra.mxu0 0.0
    %1870 = vmatprep.subr.mxu0 0.0
    %1871 = vmatpush1.msra.mxu0 0.0
    %1872 = vmatprep.subr.mxu0 0.0
    %1873 = vmatpush1.msra.mxu0 0.0
    %1874 = vmatprep.subr.mxu0 0.0
    %1875 = vmatpush1.msra.mxu0 0.0
    %1876 = vmatprep.subr.mxu0 0.0
    %1877 = vmatpush1.msra.mxu0 0.0
    %1878 = vmatprep.subr.mxu0 0.0
    %1879 = vmatpush1.msra.mxu0 0.0
    %1880 = vmatprep.subr.mxu0 0.0
    %1881 = vmatpush1.msra.mxu0 0.0
    %1882 = vmatprep.subr.mxu0 0.0
    %1883 = vmatpush1.msra.mxu0 0.0
    %1884 = vmatprep.subr.mxu0 0.0
    %1885 = vmatpush1.msra.mxu0 0.0
    %1886 = vmatprep.subr.mxu0 0.0
    %1887 = vmatpush1.msra.mxu0 0.0
    %1888 = vmatprep.subr.mxu0 0.0
    %1889 = vmatpush1.msra.mxu0 0.0
    %1890 = vmatprep.subr.mxu0 0.0
    %1891 = vmatpush1.msra.mxu0 0.0
    %1892 = vmatprep.mubr.f32.mxu0 0.0
    %1893 = vmatmul.mubr.f32.gmra.mrb[0].mxu0 %v196
    %v1894 = vpop.f32.mrb[0].mxu0
    %v1895 = vadd.f32 0.0, %v1894
    %v1896 = vpop.f32.mrb[0].mxu0
    %1897 = vmatprep.mubr.f32.mxu0 0.0
    %1898 = vmatmul.mubr.f32.gmra.mrb[0].mxu0 %v199
    %v1899 = vpop.f32.mrb[0].mxu0
    %v1900 = vadd.f32 0.0, %v1899
    %v1901 = vpop.f32.mrb[0].mxu0
    %1902 = vdwg.mxu0
    %1903 = vrot.lane.b32.xlu0 %v191, 72
    %v1904 = vpop.permute.xlu0 %1903
    %1905 = vrot.lane.b32.xlu0 %v192, 72
    %v1906 = vpop.permute.xlu0 %1905
    %1907 = vrot.lane.b32.xlu0 %v193, 72
    %v1908 = vpop.permute.xlu0 %1907
    %1909 = vrot.lane.b32.xlu0 %v194, 72
    %v1910 = vpop.permute.xlu0 %1909
    %1915 = vmatprep.subr.mxu0 0.0
    %1916 = vmatpush1.msra.mxu0 %v1904
    %1917 = vmatprep.subr.mxu0 0.0
    %1918 = vmatpush1.msra.mxu0 %v1906
    %1919 = vmatprep.subr.mxu0 0.0
    %1920 = vmatpush1.msra.mxu0 %v1908
    %1921 = vmatprep.subr.mxu0 0.0
    %1922 = vmatpush1.msra.mxu0 %v1910
    %1923 = vmatprep.subr.mxu0 0.0
    %1924 = vmatpush1.msra.mxu0 0.0
    %1925 = vmatprep.subr.mxu0 0.0
    %1926 = vmatpush1.msra.mxu0 0.0
    %1927 = vmatprep.subr.mxu0 0.0
    %1928 = vmatpush1.msra.mxu0 0.0
    %1929 = vmatprep.subr.mxu0 0.0
    %1930 = vmatpush1.msra.mxu0 0.0
    %1931 = vmatprep.subr.mxu0 0.0
    %1932 = vmatpush1.msra.mxu0 0.0
    %1933 = vmatprep.subr.mxu0 0.0
    %1934 = vmatpush1.msra.mxu0 0.0
    %1935 = vmatprep.subr.mxu0 0.0
    %1936 = vmatpush1.msra.mxu0 0.0
    %1937 = vmatprep.subr.mxu0 0.0
    %1938 = vmatpush1.msra.mxu0 0.0
    %1939 = vmatprep.subr.mxu0 0.0
    %1940 = vmatpush1.msra.mxu0 0.0
    %1941 = vmatprep.subr.mxu0 0.0
    %1942 = vmatpush1.msra.mxu0 0.0
    %1943 = vmatprep.subr.mxu0 0.0
    %1944 = vmatpush1.msra.mxu0 0.0
    %1945 = vmatprep.subr.mxu0 0.0
    %1946 = vmatpush1.msra.mxu0 0.0
    %1947 = vmatprep.subr.mxu0 0.0
    %1948 = vmatpush1.msra.mxu0 0.0
    %1949 = vmatprep.subr.mxu0 0.0
    %1950 = vmatpush1.msra.mxu0 0.0
    %1951 = vmatprep.subr.mxu0 0.0
    %1952 = vmatpush1.msra.mxu0 0.0
    %1953 = vmatprep.subr.mxu0 0.0
    %1954 = vmatpush1.msra.mxu0 0.0
    %1955 = vmatprep.subr.mxu0 0.0
    %1956 = vmatpush1.msra.mxu0 0.0
    %1957 = vmatprep.subr.mxu0 0.0
    %1958 = vmatpush1.msra.mxu0 0.0
    %1959 = vmatprep.subr.mxu0 0.0
    %1960 = vmatpush1.msra.mxu0 0.0
    %1961 = vmatprep.subr.mxu0 0.0
    %1962 = vmatpush1.msra.mxu0 0.0
    %1963 = vmatprep.subr.mxu0 0.0
    %1964 = vmatpush1.msra.mxu0 0.0
    %1965 = vmatprep.subr.mxu0 0.0
    %1966 = vmatpush1.msra.mxu0 0.0
    %1967 = vmatprep.subr.mxu0 0.0
    %1968 = vmatpush1.msra.mxu0 0.0
    %1969 = vmatprep.subr.mxu0 0.0
    %1970 = vmatpush1.msra.mxu0 0.0
    %1971 = vmatprep.subr.mxu0 0.0
    %1972 = vmatpush1.msra.mxu0 0.0
    %1973 = vmatprep.subr.mxu0 0.0
    %1974 = vmatpush1.msra.mxu0 0.0
    %1975 = vmatprep.subr.mxu0 0.0
    %1976 = vmatpush1.msra.mxu0 0.0
    %1977 = vmatprep.subr.mxu0 0.0
    %1978 = vmatpush1.msra.mxu0 0.0
    %1979 = vmatprep.mubr.f32.mxu0 0.0
    %1980 = vmatmul.mubr.f32.gmra.mrb[0].mxu0 %v196
    %v1981 = vpop.f32.mrb[0].mxu0
    %v1982 = vadd.f32 0.0, %v1981
    %v1983 = vpop.f32.mrb[0].mxu0
    %1984 = vmatprep.mubr.f32.mxu0 0.0
    %1985 = vmatmul.mubr.f32.gmra.mrb[0].mxu0 %v199
    %v1986 = vpop.f32.mrb[0].mxu0
    %v1987 = vadd.f32 0.0, %v1986
    %v1988 = vpop.f32.mrb[0].mxu0
    %1989 = vdwg.mxu0
    %1990 = vrot.lane.b32.xlu0 %v191, 40
    %v1991 = vpop.permute.xlu0 %1990
    %1992 = vrot.lane.b32.xlu0 %v192, 40
    %v1993 = vpop.permute.xlu0 %1992
    %1994 = vrot.lane.b32.xlu0 %v193, 40
    %v1995 = vpop.permute.xlu0 %1994
    %1996 = vrot.lane.b32.xlu0 %v194, 40
    %v1997 = vpop.permute.xlu0 %1996
    %2002 = vmatprep.subr.mxu0 0.0
    %2003 = vmatpush1.msra.mxu0 %v1991
    %2004 = vmatprep.subr.mxu0 0.0
    %2005 = vmatpush1.msra.mxu0 %v1993
    %2006 = vmatprep.subr.mxu0 0.0
    %2007 = vmatpush1.msra.mxu0 %v1995
    %2008 = vmatprep.subr.mxu0 0.0
    %2009 = vmatpush1.msra.mxu0 %v1997
    %2010 = vmatprep.subr.mxu0 0.0
    %2011 = vmatpush1.msra.mxu0 0.0
    %2012 = vmatprep.subr.mxu0 0.0
    %2013 = vmatpush1.msra.mxu0 0.0
    %2014 = vmatprep.subr.mxu0 0.0
    %2015 = vmatpush1.msra.mxu0 0.0
    %2016 = vmatprep.subr.mxu0 0.0
    %2017 = vmatpush1.msra.mxu0 0.0
    %2018 = vmatprep.subr.mxu0 0.0
    %2019 = vmatpush1.msra.mxu0 0.0
    %2020 = vmatprep.subr.mxu0 0.0
    %2021 = vmatpush1.msra.mxu0 0.0
    %2022 = vmatprep.subr.mxu0 0.0
    %2023 = vmatpush1.msra.mxu0 0.0
    %2024 = vmatprep.subr.mxu0 0.0
    %2025 = vmatpush1.msra.mxu0 0.0
    %2026 = vmatprep.subr.mxu0 0.0
    %2027 = vmatpush1.msra.mxu0 0.0
    %2028 = vmatprep.subr.mxu0 0.0
    %2029 = vmatpush1.msra.mxu0 0.0
    %2030 = vmatprep.subr.mxu0 0.0
    %2031 = vmatpush1.msra.mxu0 0.0
    %2032 = vmatprep.subr.mxu0 0.0
    %2033 = vmatpush1.msra.mxu0 0.0
    %2034 = vmatprep.subr.mxu0 0.0
    %2035 = vmatpush1.msra.mxu0 0.0
    %2036 = vmatprep.subr.mxu0 0.0
    %2037 = vmatpush1.msra.mxu0 0.0
    %2038 = vmatprep.subr.mxu0 0.0
    %2039 = vmatpush1.msra.mxu0 0.0
    %2040 = vmatprep.subr.mxu0 0.0
    %2041 = vmatpush1.msra.mxu0 0.0
    %2042 = vmatprep.subr.mxu0 0.0
    %2043 = vmatpush1.msra.mxu0 0.0
    %2044 = vmatprep.subr.mxu0 0.0
    %2045 = vmatpush1.msra.mxu0 0.0
    %2046 = vmatprep.subr.mxu0 0.0
    %2047 = vmatpush1.msra.mxu0 0.0
    %2048 = vmatprep.subr.mxu0 0.0
    %2049 = vmatpush1.msra.mxu0 0.0
    %2050 = vmatprep.subr.mxu0 0.0
    %2051 = vmatpush1.msra.mxu0 0.0
    %2052 = vmatprep.subr.mxu0 0.0
    %2053 = vmatpush1.msra.mxu0 0.0
    %2054 = vmatprep.subr.mxu0 0.0
    %2055 = vmatpush1.msra.mxu0 0.0
    %2056 = vmatprep.subr.mxu0 0.0
    %2057 = vmatpush1.msra.mxu0 0.0
    %2058 = vmatprep.subr.mxu0 0.0
    %2059 = vmatpush1.msra.mxu0 0.0
    %2060 = vmatprep.subr.mxu0 0.0
    %2061 = vmatpush1.msra.mxu0 0.0
    %2062 = vmatprep.subr.mxu0 0.0
    %2063 = vmatpush1.msra.mxu0 0.0
    %2064 = vmatprep.subr.mxu0 0.0
    %2065 = vmatpush1.msra.mxu0 0.0
    %2066 = vmatprep.mubr.f32.mxu0 0.0
    %2067 = vmatmul.mubr.f32.gmra.mrb[0].mxu0 %v196
    %v2068 = vpop.f32.mrb[0].mxu0
    %v2069 = vadd.f32 0.0, %v2068
    %v2070 = vpop.f32.mrb[0].mxu0
    %2071 = vmatprep.mubr.f32.mxu0 0.0
    %2072 = vmatmul.mubr.f32.gmra.mrb[0].mxu0 %v199
    %v2073 = vpop.f32.mrb[0].mxu0
    %v2074 = vadd.f32 0.0, %v2073
    %v2075 = vpop.f32.mrb[0].mxu0
    %2076 = vdwg.mxu0
    %v2078 = vsel %vm454, %v1895, 0
    %v2081 = vsel %vm454, %v1900, 0
    %v2084 = vsel %vm454, %v1982, 0
    %v2087 = vsel %vm454, %v1987, 0
    %2089 = vmatprep.subr.mxu0 0.0
    %2090 = vmatpush1.xpose.msra.mxu0 %v2084
    %2091 = vmatprep.subr.mxu0 0.0
    %2092 = vmatpush1.xpose.msra.mxu0 %v2087
    %2093 = vmatprep.subr.mxu0 0.0
    %2094 = vmatpush1.xpose.msra.mxu0 0.0
    %2095 = vmatprep.subr.mxu0 0.0
    %2096 = vmatpush1.xpose.msra.mxu0 0.0
    %2097 = vmatprep.subr.mxu0 0.0
    %2098 = vmatpush1.xpose.msra.mxu0 0.0
    %2099 = vmatprep.subr.mxu0 0.0
    %2100 = vmatpush1.xpose.msra.mxu0 0.0
    %2101 = vmatprep.subr.mxu0 0.0
    %2102 = vmatpush1.xpose.msra.mxu0 0.0
    %2103 = vmatprep.subr.mxu0 0.0
    %2104 = vmatpush1.xpose.msra.mxu0 0.0
    %2105 = vmatprep.subr.mxu0 0.0
    %2106 = vmatpush1.xpose.msra.mxu0 0.0
    %2107 = vmatprep.subr.mxu0 0.0
    %2108 = vmatpush1.xpose.msra.mxu0 0.0
    %2109 = vmatprep.subr.mxu0 0.0
    %2110 = vmatpush1.xpose.msra.mxu0 0.0
    %2111 = vmatprep.subr.mxu0 0.0
    %2112 = vmatpush1.xpose.msra.mxu0 0.0
    %2113 = vmatprep.subr.mxu0 0.0
    %2114 = vmatpush1.xpose.msra.mxu0 0.0
    %2115 = vmatprep.subr.mxu0 0.0
    %2116 = vmatpush1.xpose.msra.mxu0 0.0
    %2117 = vmatprep.subr.mxu0 0.0
    %2118 = vmatpush1.xpose.msra.mxu0 0.0
    %2119 = vmatprep.subr.mxu0 0.0
    %2120 = vmatpush1.xpose.msra.mxu0 0.0
    %2121 = vmatprep.subr.mxu0 0.0
    %2122 = vmatpush1.xpose.msra.mxu0 0.0
    %2123 = vmatprep.subr.mxu0 0.0
    %2124 = vmatpush1.xpose.msra.mxu0 0.0
    %2125 = vmatprep.subr.mxu0 0.0
    %2126 = vmatpush1.xpose.msra.mxu0 0.0
    %2127 = vmatprep.subr.mxu0 0.0
    %2128 = vmatpush1.xpose.msra.mxu0 0.0
    %2129 = vmatprep.subr.mxu0 0.0
    %2130 = vmatpush1.xpose.msra.mxu0 0.0
    %2131 = vmatprep.subr.mxu0 0.0
    %2132 = vmatpush1.xpose.msra.mxu0 0.0
    %2133 = vmatprep.subr.mxu0 0.0
    %2134 = vmatpush1.xpose.msra.mxu0 0.0
    %2135 = vmatprep.subr.mxu0 0.0
    %2136 = vmatpush1.xpose.msra.mxu0 0.0
    %2137 = vmatprep.subr.mxu0 0.0
    %2138 = vmatpush1.xpose.msra.mxu0 0.0
    %2139 = vmatprep.subr.mxu0 0.0
    %2140 = vmatpush1.xpose.msra.mxu0 0.0
    %2141 = vmatprep.subr.mxu0 0.0
    %2142 = vmatpush1.xpose.msra.mxu0 0.0
    %2143 = vmatprep.subr.mxu0 0.0
    %2144 = vmatpush1.xpose.msra.mxu0 0.0
    %2145 = vmatprep.subr.mxu0 0.0
    %2146 = vmatpush1.xpose.msra.mxu0 0.0
    %2147 = vmatprep.subr.mxu0 0.0
    %2148 = vmatpush1.xpose.msra.mxu0 0.0
    %2149 = vmatprep.subr.mxu0 0.0
    %2150 = vmatpush1.xpose.msra.mxu0 0.0
    %2151 = vmatprep.subr.mxu0 0.0
    %2152 = vmatpush1.xpose.msra.mxu0 0.0
    %2153 = vmatprep.mubr.f32.mxu0 0.0
    %2154 = vmatmul.mubr.f32.gmra.mrb[0].mxu0 %v2078
    %v2155 = vpop.f32.mrb[0].mxu0
    %v2156 = vadd.f32 %v142, %v2155
    %v2157 = vpop.f32.mrb[0].mxu0
    %2158 = vmatprep.mubr.f32.mxu0 0.0
    %2159 = vmatmul.mubr.f32.gmra.mrb[0].mxu0 %v2081
    %v2160 = vpop.f32.mrb[0].mxu0
    %v2161 = vadd.f32 %v143, %v2160
    %v2162 = vpop.f32.mrb[0].mxu0
    %2163 = vdwg.mxu0
    %v2164 = vsel %vm542, %v2156, -inf
    %2165 = vmax.xlane.f32.xlu0 %v2164
    %v2166 = vpop.xlane.xlu0 %2165
    %v2167 = vsel %vm546, %v2161, -inf
    %2168 = vmax.xlane.f32.xlu0 %v2167
    %v2169 = vpop.xlane.xlu0 %2168
    %v2170 = vsub.f32 %v2156, %v2166
    %v2171 = vsub.f32 %v2161, %v2169
    %v2172 = vmul.f32 %v2170, 1.442695
    %v2173 = vpow.pop %v2172
    %v2174 = vmul.f32 %v2171, 1.442695
    %v2175 = vpow.pop %v2174
    %v2176 = vsel %vm542, %v2173, 0.0
    %2177 = vadd.xlane.f32.xlu0 %v2176
    %v2178 = vpop.xlane.xlu0 %2177
    %v2179 = vsel %vm546, %v2175, 0.0
    %2180 = vadd.xlane.f32.xlu0 %v2179
    %v2181 = vpop.xlane.xlu0 %2180
    %v2182 = vrcp.pop %v2178
    %v2183 = vmul.f32 1.0, %v2182
    %v2184 = vrcp.pop %v2181
    %v2185 = vmul.f32 1.0, %v2184
    %v2186 = vmul.f32 %v2173, %v2183
    %v2187 = vmul.f32 %v2175, %v2185
    %v2189 = vsel %vm542, %v2186, 0
    %v2192 = vsel %vm542, %v2187, 0
    %v2195 = vsel %vm63, %v2074, 0
    %2197 = vmatprep.subr.mxu0 0.0
    %2198 = vmatpush1.msra.mxu0 %v2069
    %2199 = vmatprep.subr.mxu0 0.0
    %2200 = vmatpush1.msra.mxu0 %v2195
    %2201 = vmatprep.subr.mxu0 0.0
    %2202 = vmatpush1.msra.mxu0 0.0
    %2203 = vmatprep.subr.mxu0 0.0
    %2204 = vmatpush1.msra.mxu0 0.0
    %2205 = vmatprep.subr.mxu0 0.0
    %2206 = vmatpush1.msra.mxu0 0.0
    %2207 = vmatprep.subr.mxu0 0.0
    %2208 = vmatpush1.msra.mxu0 0.0
    %2209 = vmatprep.subr.mxu0 0.0
    %2210 = vmatpush1.msra.mxu0 0.0
    %2211 = vmatprep.subr.mxu0 0.0
    %2212 = vmatpush1.msra.mxu0 0.0
    %2213 = vmatprep.subr.mxu0 0.0
    %2214 = vmatpush1.msra.mxu0 0.0
    %2215 = vmatprep.subr.mxu0 0.0
    %2216 = vmatpush1.msra.mxu0 0.0
    %2217 = vmatprep.subr.mxu0 0.0
    %2218 = vmatpush1.msra.mxu0 0.0
    %2219 = vmatprep.subr.mxu0 0.0
    %2220 = vmatpush1.msra.mxu0 0.0
    %2221 = vmatprep.subr.mxu0 0.0
    %2222 = vmatpush1.msra.mxu0 0.0
    %2223 = vmatprep.subr.mxu0 0.0
    %2224 = vmatpush1.msra.mxu0 0.0
    %2225 = vmatprep.subr.mxu0 0.0
    %2226 = vmatpush1.msra.mxu0 0.0
    %2227 = vmatprep.subr.mxu0 0.0
    %2228 = vmatpush1.msra.mxu0 0.0
    %2229 = vmatprep.subr.mxu0 0.0
    %2230 = vmatpush1.msra.mxu0 0.0
    %2231 = vmatprep.subr.mxu0 0.0
    %2232 = vmatpush1.msra.mxu0 0.0
    %2233 = vmatprep.subr.mxu0 0.0
    %2234 = vmatpush1.msra.mxu0 0.0
    %2235 = vmatprep.subr.mxu0 0.0
    %2236 = vmatpush1.msra.mxu0 0.0
    %2237 = vmatprep.subr.mxu0 0.0
    %2238 = vmatpush1.msra.mxu0 0.0
    %2239 = vmatprep.subr.mxu0 0.0
    %2240 = vmatpush1.msra.mxu0 0.0
    %2241 = vmatprep.subr.mxu0 0.0
    %2242 = vmatpush1.msra.mxu0 0.0
    %2243 = vmatprep.subr.mxu0 0.0
    %2244 = vmatpush1.msra.mxu0 0.0
    %2245 = vmatprep.subr.mxu0 0.0
    %2246 = vmatpush1.msra.mxu0 0.0
    %2247 = vmatprep.subr.mxu0 0.0
    %2248 = vmatpush1.msra.mxu0 0.0
    %2249 = vmatprep.subr.mxu0 0.0
    %2250 = vmatpush1.msra.mxu0 0.0
    %2251 = vmatprep.subr.mxu0 0.0
    %2252 = vmatpush1.msra.mxu0 0.0
    %2253 = vmatprep.subr.mxu0 0.0
    %2254 = vmatpush1.msra.mxu0 0.0
    %2255 = vmatprep.subr.mxu0 0.0
    %2256 = vmatpush1.msra.mxu0 0.0
    %2257 = vmatprep.subr.mxu0 0.0
    %2258 = vmatpush1.msra.mxu0 0.0
    %2259 = vmatprep.subr.mxu0 0.0
    %2260 = vmatpush1.msra.mxu0 0.0
    %2261 = vmatprep.mubr.f32.mxu0 0.0
    %2262 = vmatmul.mubr.f32.gmra.mrb[0].mxu0 %v2189
    %v2263 = vpop.f32.mrb[0].mxu0
    %v2264 = vadd.f32 0.0, %v2263
    %v2265 = vpop.f32.mrb[0].mxu0
    %2266 = vmatprep.mubr.f32.mxu0 0.0
    %2267 = vmatmul.mubr.f32.gmra.mrb[0].mxu0 %v2192
    %v2268 = vpop.f32.mrb[0].mxu0
    %v2269 = vadd.f32 0.0, %v2268
    %v2270 = vpop.f32.mrb[0].mxu0
    %2271 = vdwg.mxu0
    %v2272 = vld [vmem:[%s7 + $0x18] sm:$0xff]
    %v2274 = vsel %vm454, %v2264, 0
    %v2277 = vsel %vm454, %v2269, 0
    %2279 = vmatprep.subr.mxu0 0.0
    %2280 = vmatpush1.msra.mxu0 %v2272
    %2281 = vmatprep.subr.mxu0 0.0
    %2282 = vmatpush1.msra.mxu0 0.0
    %2283 = vmatprep.subr.mxu0 0.0
    %2284 = vmatpush1.msra.mxu0 0.0
    %2285 = vmatprep.subr.mxu0 0.0
    %2286 = vmatpush1.msra.mxu0 0.0
    %2287 = vmatprep.subr.mxu0 0.0
    %2288 = vmatpush1.msra.mxu0 0.0
    %2289 = vmatprep.subr.mxu0 0.0
    %2290 = vmatpush1.msra.mxu0 0.0
    %2291 = vmatprep.subr.mxu0 0.0
    %2292 = vmatpush1.msra.mxu0 0.0
    %2293 = vmatprep.subr.mxu0 0.0
    %2294 = vmatpush1.msra.mxu0 0.0
    %2295 = vmatprep.subr.mxu0 0.0
    %2296 = vmatpush1.msra.mxu0 0.0
    %2297 = vmatprep.subr.mxu0 0.0
    %2298 = vmatpush1.msra.mxu0 0.0
    %2299 = vmatprep.subr.mxu0 0.0
    %2300 = vmatpush1.msra.mxu0 0.0
    %2301 = vmatprep.subr.mxu0 0.0
    %2302 = vmatpush1.msra.mxu0 0.0
    %2303 = vmatprep.subr.mxu0 0.0
    %2304 = vmatpush1.msra.mxu0 0.0
    %2305 = vmatprep.subr.mxu0 0.0
    %2306 = vmatpush1.msra.mxu0 0.0
    %2307 = vmatprep.subr.mxu0 0.0
    %2308 = vmatpush1.msra.mxu0 0.0
    %2309 = vmatprep.subr.mxu0 0.0
    %2310 = vmatpush1.msra.mxu0 0.0
    %2311 = vmatprep.subr.mxu0 0.0
    %2312 = vmatpush1.msra.mxu0 0.0
    %2313 = vmatprep.subr.mxu0 0.0
    %2314 = vmatpush1.msra.mxu0 0.0
    %2315 = vmatprep.subr.mxu0 0.0
    %2316 = vmatpush1.msra.mxu0 0.0
    %2317 = vmatprep.subr.mxu0 0.0
    %2318 = vmatpush1.msra.mxu0 0.0
    %2319 = vmatprep.subr.mxu0 0.0
    %2320 = vmatpush1.msra.mxu0 0.0
    %2321 = vmatprep.subr.mxu0 0.0
    %2322 = vmatpush1.msra.mxu0 0.0
    %2323 = vmatprep.subr.mxu0 0.0
    %2324 = vmatpush1.msra.mxu0 0.0
    %2325 = vmatprep.subr.mxu0 0.0
    %2326 = vmatpush1.msra.mxu0 0.0
    %2327 = vmatprep.subr.mxu0 0.0
    %2328 = vmatpush1.msra.mxu0 0.0
    %2329 = vmatprep.subr.mxu0 0.0
    %2330 = vmatpush1.msra.mxu0 0.0
    %2331 = vmatprep.subr.mxu0 0.0
    %2332 = vmatpush1.msra.mxu0 0.0
    %2333 = vmatprep.subr.mxu0 0.0
    %2334 = vmatpush1.msra.mxu0 0.0
    %2335 = vmatprep.subr.mxu0 0.0
    %2336 = vmatpush1.msra.mxu0 0.0
    %2337 = vmatprep.subr.mxu0 0.0
    %2338 = vmatpush1.msra.mxu0 0.0
    %2339 = vmatprep.subr.mxu0 0.0
    %2340 = vmatpush1.msra.mxu0 0.0
    %2341 = vmatprep.subr.mxu0 0.0
    %2342 = vmatpush1.msra.mxu0 0.0
    %2343 = vmatprep.mubr.f32.mxu0 0.0
    %2344 = vmatmul.mubr.f32.gmra.mrb[0].mxu0 %v2274
    %v2345 = vpop.f32.mrb[0].mxu0
    %v2346 = vadd.f32 0.0, %v2345
    %v2347 = vpop.f32.mrb[0].mxu0
    %2348 = vmatprep.mubr.f32.mxu0 0.0
    %2349 = vmatmul.mubr.f32.gmra.mrb[0].mxu0 %v2277
    %v2350 = vpop.f32.mrb[0].mxu0
    %v2351 = vadd.f32 0.0, %v2350
    %v2352 = vpop.f32.mrb[0].mxu0
    %2353 = vdwg.mxu0
    %v2354 = vadd.f32 %v1814, %v2346
    %v2355 = vadd.f32 %v1815, %v2351
    %v2356 = vld [vmem:[%s8] sm:$0x1]
    %v2358 = vlaneseq
    %v2359 = vshrl.u32 %v2358, 7
    %v2360 = vsub.s32 0, %v2359
    %v2361 = vrot.slane %v2356, %v2360
    %v2363 = vadd.f32 %v2354, %v2361
    %v2364 = vadd.f32 %v2355, %v2361
    %v2365 = vld [vmem:[%s9] sm:$0x1]
    %v2366 = vld [vmem:[%s10] sm:$0x1]
    %v2367 = vsel %vm146, %v2363, 0.0
    %2368 = vadd.xlane.f32.xlu0 %v2367
    %v2369 = vpop.xlane.xlu0 %2368
    %v2370 = vsel %vm150, %v2364, 0.0
    %2371 = vadd.xlane.f32.xlu0 %v2370
    %v2372 = vpop.xlane.xlu0 %2371
    %v2373 = vmul.f32 %v2369, %v154
    %v2374 = vmul.f32 %v2372, %v154
    %v2375 = vsub.f32 %v2363, %v2373
    %v2376 = vsub.f32 %v2364, %v2374
    %v2377 = vmul.f32 %v2375, %v2375
    %v2378 = vmul.f32 %v2376, %v2376
    %v2379 = vsel %vm146, %v2377, 0.0
    %2380 = vadd.xlane.f32.xlu0 %v2379
    %v2381 = vpop.xlane.xlu0 %2380
    %v2382 = vsel %vm150, %v2378, 0.0
    %2383 = vadd.xlane.f32.xlu0 %v2382
    %v2384 = vpop.xlane.xlu0 %2383
    %v2385 = vmul.f32 %v2381, %v154
    %v2386 = vmul.f32 %v2384, %v154
    %v2387 = vadd.f32 %v2385, 1e-05
    %v2388 = vadd.f32 %v2386, 1e-05
    %v2389 = vrsqrt.pop %v2387
    %v2390 = vrsqrt.pop %v2388
    %v2391 = vmul.f32 %v2375, %v2389
    %v2392 = vmul.f32 %v2376, %v2390
    %v2394 = vlaneseq
    %v2395 = vshrl.u32 %v2394, 7
    %v2396 = vsub.s32 0, %v2395
    %v2397 = vrot.slane %v2365, %v2396
    %v2399 = vmul.f32 %v2391, %v2397
    %v2400 = vmul.f32 %v2392, %v2397
    %v2402 = vlaneseq
    %v2403 = vshrl.u32 %v2402, 7
    %v2404 = vsub.s32 0, %v2403
    %v2405 = vrot.slane %v2366, %v2404
    %v2407 = vadd.f32 %v2399, %v2405
    %v2408 = vadd.f32 %v2400, %v2405
    %v2409 = vld [vmem:[%s11] sm:$0xff]
    %v2410 = vld [vmem:[%s11 + $0x8] sm:$0xff]
    %v2411 = vld [vmem:[%s11 + $0x10] sm:$0xff]
    %v2412 = vld [vmem:[%s11 + $0x18] sm:$0xff]
    %v2413 = vld [vmem:[%s12] sm:$0x1]
    %v2415 = vlaneseq
    %v2416 = vshrl.u32 %v2415, 7
    %v2417 = vsub.s32 0, %v2416
    %v2418 = vrot.slane %v2413, %v2417
    %v2421 = vsel %vm146, %v2407, 0
    %v2424 = vsel %vm146, %v2408, 0
    %2426 = vmatprep.subr.mxu0 0.0
    %2427 = vmatpush1.msra.mxu0 %v2409
    %2428 = vmatprep.subr.mxu0 0.0
    %2429 = vmatpush1.msra.mxu0 %v2410
    %2430 = vmatprep.subr.mxu0 0.0
    %2431 = vmatpush1.msra.mxu0 %v2411
    %2432 = vmatprep.subr.mxu0 0.0
    %2433 = vmatpush1.msra.mxu0 %v2412
    %2434 = vmatprep.subr.mxu0 0.0
    %2435 = vmatpush1.msra.mxu0 0.0
    %2436 = vmatprep.subr.mxu0 0.0
    %2437 = vmatpush1.msra.mxu0 0.0
    %2438 = vmatprep.subr.mxu0 0.0
    %2439 = vmatpush1.msra.mxu0 0.0
    %2440 = vmatprep.subr.mxu0 0.0
    %2441 = vmatpush1.msra.mxu0 0.0
    %2442 = vmatprep.subr.mxu0 0.0
    %2443 = vmatpush1.msra.mxu0 0.0
    %2444 = vmatprep.subr.mxu0 0.0
    %2445 = vmatpush1.msra.mxu0 0.0
    %2446 = vmatprep.subr.mxu0 0.0
    %2447 = vmatpush1.msra.mxu0 0.0
    %2448 = vmatprep.subr.mxu0 0.0
    %2449 = vmatpush1.msra.mxu0 0.0
    %2450 = vmatprep.subr.mxu0 0.0
    %2451 = vmatpush1.msra.mxu0 0.0
    %2452 = vmatprep.subr.mxu0 0.0
    %2453 = vmatpush1.msra.mxu0 0.0
    %2454 = vmatprep.subr.mxu0 0.0
    %2455 = vmatpush1.msra.mxu0 0.0
    %2456 = vmatprep.subr.mxu0 0.0
    %2457 = vmatpush1.msra.mxu0 0.0
    %2458 = vmatprep.subr.mxu0 0.0
    %2459 = vmatpush1.msra.mxu0 0.0
    %2460 = vmatprep.subr.mxu0 0.0
    %2461 = vmatpush1.msra.mxu0 0.0
    %2462 = vmatprep.subr.mxu0 0.0
    %2463 = vmatpush1.msra.mxu0 0.0
    %2464 = vmatprep.subr.mxu0 0.0
    %2465 = vmatpush1.msra.mxu0 0.0
    %2466 = vmatprep.subr.mxu0 0.0
    %2467 = vmatpush1.msra.mxu0 0.0
    %2468 = vmatprep.subr.mxu0 0.0
    %2469 = vmatpush1.msra.mxu0 0.0
    %2470 = vmatprep.subr.mxu0 0.0
    %2471 = vmatpush1.msra.mxu0 0.0
    %2472 = vmatprep.subr.mxu0 0.0
    %2473 = vmatpush1.msra.mxu0 0.0
    %2474 = vmatprep.subr.mxu0 0.0
    %2475 = vmatpush1.msra.mxu0 0.0
    %2476 = vmatprep.subr.mxu0 0.0
    %2477 = vmatpush1.msra.mxu0 0.0
    %2478 = vmatprep.subr.mxu0 0.0
    %2479 = vmatpush1.msra.mxu0 0.0
    %2480 = vmatprep.subr.mxu0 0.0
    %2481 = vmatpush1.msra.mxu0 0.0
    %2482 = vmatprep.subr.mxu0 0.0
    %2483 = vmatpush1.msra.mxu0 0.0
    %2484 = vmatprep.subr.mxu0 0.0
    %2485 = vmatpush1.msra.mxu0 0.0
    %2486 = vmatprep.subr.mxu0 0.0
    %2487 = vmatpush1.msra.mxu0 0.0
    %2488 = vmatprep.subr.mxu0 0.0
    %2489 = vmatpush1.msra.mxu0 0.0
    %2490 = vmatprep.mubr.f32.mxu0 0.0
    %2491 = vmatmul.mubr.f32.gmra.mrb[0].mxu0 %v2421
    %v2492 = vpop.f32.mrb[0].mxu0
    %v2493 = vadd.f32 %v2418, %v2492
    %v2494 = vpop.f32.mrb[0].mxu0
    %2495 = vmatprep.mubr.f32.mxu0 0.0
    %2496 = vmatmul.mubr.f32.gmra.mrb[0].mxu0 %v2424
    %v2497 = vpop.f32.mrb[0].mxu0
    %v2498 = vadd.f32 %v2418, %v2497
    %v2499 = vpop.f32.mrb[0].mxu0
    %2500 = vdwg.mxu0
    %v2501 = vmul.f32 %v2493, 0.5
    %v2502 = vmul.f32 %v2498, 0.5
    %v2503 = vmul.f32 %v2493, 0.70710677
    %v2504 = vmul.f32 %v2498, 0.70710677
    %v2505 = verf.f32.pop %v2503
    %v2506 = verf.f32.pop %v2504
    %v2507 = vadd.f32 %v2505, 1.0
    %v2508 = vadd.f32 %v2506, 1.0
    %v2509 = vmul.f32 %v2501, %v2507
    %v2510 = vmul.f32 %v2502, %v2508
    %v2511 = vld [vmem:[%s13] sm:$0xff]
    %v2512 = vld [vmem:[%s13 + $0x8] sm:$0xff]
    %v2513 = vld [vmem:[%s13 + $0x10] sm:$0xff]
    %v2514 = vld [vmem:[%s13 + $0x18] sm:$0xff]
    %v2515 = vld [vmem:[%s13 + $0x20] sm:$0xff]
    %v2516 = vld [vmem:[%s13 + $0x28] sm:$0xff]
    %v2517 = vld [vmem:[%s13 + $0x30] sm:$0xff]
    %v2518 = vld [vmem:[%s13 + $0x38] sm:$0xff]
    %v2519 = vld [vmem:[%s13 + $0x40] sm:$0xff]
    %v2520 = vld [vmem:[%s13 + $0x48] sm:$0xff]
    %v2521 = vld [vmem:[%s13 + $0x50] sm:$0xff]
    %v2522 = vld [vmem:[%s13 + $0x58] sm:$0xff]
    %v2523 = vld [vmem:[%s13 + $0x60] sm:$0xff]
    %v2524 = vld [vmem:[%s13 + $0x68] sm:$0xff]
    %v2525 = vld [vmem:[%s13 + $0x70] sm:$0xff]
    %v2526 = vld [vmem:[%s13 + $0x78] sm:$0xff]
    %2527 = vmatprep.subr.mxu0 0.0
    %2528 = vmatpush1.msra.mxu0 %v2511
    %2529 = vmatprep.subr.mxu0 0.0
    %2530 = vmatpush1.msra.mxu0 %v2512
    %2531 = vmatprep.subr.mxu0 0.0
    %2532 = vmatpush1.msra.mxu0 %v2513
    %2533 = vmatprep.subr.mxu0 0.0
    %2534 = vmatpush1.msra.mxu0 %v2514
    %2535 = vmatprep.subr.mxu0 0.0
    %2536 = vmatpush1.msra.mxu0 %v2515
    %2537 = vmatprep.subr.mxu0 0.0
    %2538 = vmatpush1.msra.mxu0 %v2516
    %2539 = vmatprep.subr.mxu0 0.0
    %2540 = vmatpush1.msra.mxu0 %v2517
    %2541 = vmatprep.subr.mxu0 0.0
    %2542 = vmatpush1.msra.mxu0 %v2518
    %2543 = vmatprep.subr.mxu0 0.0
    %2544 = vmatpush1.msra.mxu0 %v2519
    %2545 = vmatprep.subr.mxu0 0.0
    %2546 = vmatpush1.msra.mxu0 %v2520
    %2547 = vmatprep.subr.mxu0 0.0
    %2548 = vmatpush1.msra.mxu0 %v2521
    %2549 = vmatprep.subr.mxu0 0.0
    %2550 = vmatpush1.msra.mxu0 %v2522
    %2551 = vmatprep.subr.mxu0 0.0
    %2552 = vmatpush1.msra.mxu0 %v2523
    %2553 = vmatprep.subr.mxu0 0.0
    %2554 = vmatpush1.msra.mxu0 %v2524
    %2555 = vmatprep.subr.mxu0 0.0
    %2556 = vmatpush1.msra.mxu0 %v2525
    %2557 = vmatprep.subr.mxu0 0.0
    %2558 = vmatpush1.msra.mxu0 %v2526
    %2559 = vmatprep.subr.mxu0 0.0
    %2560 = vmatpush1.msra.mxu0 0.0
    %2561 = vmatprep.subr.mxu0 0.0
    %2562 = vmatpush1.msra.mxu0 0.0
    %2563 = vmatprep.subr.mxu0 0.0
    %2564 = vmatpush1.msra.mxu0 0.0
    %2565 = vmatprep.subr.mxu0 0.0
    %2566 = vmatpush1.msra.mxu0 0.0
    %2567 = vmatprep.subr.mxu0 0.0
    %2568 = vmatpush1.msra.mxu0 0.0
    %2569 = vmatprep.subr.mxu0 0.0
    %2570 = vmatpush1.msra.mxu0 0.0
    %2571 = vmatprep.subr.mxu0 0.0
    %2572 = vmatpush1.msra.mxu0 0.0
    %2573 = vmatprep.subr.mxu0 0.0
    %2574 = vmatpush1.msra.mxu0 0.0
    %2575 = vmatprep.subr.mxu0 0.0
    %2576 = vmatpush1.msra.mxu0 0.0
    %2577 = vmatprep.subr.mxu0 0.0
    %2578 = vmatpush1.msra.mxu0 0.0
    %2579 = vmatprep.subr.mxu0 0.0
    %2580 = vmatpush1.msra.mxu0 0.0
    %2581 = vmatprep.subr.mxu0 0.0
    %2582 = vmatpush1.msra.mxu0 0.0
    %2583 = vmatprep.subr.mxu0 0.0
    %2584 = vmatpush1.msra.mxu0 0.0
    %2585 = vmatprep.subr.mxu0 0.0
    %2586 = vmatpush1.msra.mxu0 0.0
    %2587 = vmatprep.subr.mxu0 0.0
    %2588 = vmatpush1.msra.mxu0 0.0
    %2589 = vmatprep.subr.mxu0 0.0
    %2590 = vmatpush1.msra.mxu0 0.0
    %2591 = vmatprep.mubr.f32.mxu0 0.0
    %2592 = vmatmul.mubr.f32.gmra.mrb[0].mxu0 %v2509
    %v2593 = vpop.f32.mrb[0].mxu0
    %v2594 = vadd.f32 0.0, %v2593
    %v2595 = vpop.f32.mrb[0].mxu0
    %2596 = vmatprep.mubr.f32.mxu0 0.0
    %2597 = vmatmul.mubr.f32.gmra.mrb[0].mxu0 %v2510
    %v2598 = vpop.f32.mrb[0].mxu0
    %v2599 = vadd.f32 0.0, %v2598
    %v2600 = vpop.f32.mrb[0].mxu0
    %2601 = vdwg.mxu0
    %v2602 = vadd.f32 %v2363, %v2594
    %v2603 = vadd.f32 %v2364, %v2599
    %v2604 = vld [vmem:[%s14] sm:$0x1]
    %v2606 = vlaneseq
    %v2607 = vshrl.u32 %v2606, 7
    %v2608 = vsub.s32 0, %v2607
    %v2609 = vrot.slane %v2604, %v2608
    %v2611 = vadd.f32 %v2602, %v2609
    %v2612 = vadd.f32 %v2603, %v2609
    %s2613 = scalar_lea.vmem %s4, 1
    %v2614 = vld [vmem:[%s2613] sm:$0x1]
    %s2615 = scalar_lea.vmem %s5, 1
    %v2616 = vld [vmem:[%s2615] sm:$0x1]
    %v2617 = vsel %vm146, %v2611, 0.0
    %2618 = vadd.xlane.f32.xlu0 %v2617
    %v2619 = vpop.xlane.xlu0 %2618
    %v2620 = vsel %vm150, %v2612, 0.0
    %2621 = vadd.xlane.f32.xlu0 %v2620
    %v2622 = vpop.xlane.xlu0 %2621
    %v2623 = vmul.f32 %v2619, %v154
    %v2624 = vmul.f32 %v2622, %v154
    %v2625 = vsub.f32 %v2611, %v2623
    %v2626 = vsub.f32 %v2612, %v2624
    %v2627 = vmul.f32 %v2625, %v2625
    %v2628 = vmul.f32 %v2626, %v2626
    %v2629 = vsel %vm146, %v2627, 0.0
    %2630 = vadd.xlane.f32.xlu0 %v2629
    %v2631 = vpop.xlane.xlu0 %2630
    %v2632 = vsel %vm150, %v2628, 0.0
    %2633 = vadd.xlane.f32.xlu0 %v2632
    %v2634 = vpop.xlane.xlu0 %2633
    %v2635 = vmul.f32 %v2631, %v154
    %v2636 = vmul.f32 %v2634, %v154
    %v2637 = vadd.f32 %v2635, 1e-05
    %v2638 = vadd.f32 %v2636, 1e-05
    %v2639 = vrsqrt.pop %v2637
    %v2640 = vrsqrt.pop %v2638
    %v2641 = vmul.f32 %v2625, %v2639
    %v2642 = vmul.f32 %v2626, %v2640
    %v2644 = vlaneseq
    %v2645 = vshrl.u32 %v2644, 7
    %v2646 = vsub.s32 0, %v2645
    %v2647 = vrot.slane %v2614, %v2646
    %v2649 = vmul.f32 %v2641, %v2647
    %v2650 = vmul.f32 %v2642, %v2647
    %v2652 = vlaneseq
    %v2653 = vshrl.u32 %v2652, 7
    %v2654 = vsub.s32 0, %v2653
    %v2655 = vrot.slane %v2616, %v2654
    %v2657 = vadd.f32 %v2649, %v2655
    %v2658 = vadd.f32 %v2650, %v2655
    %s2659 = scalar_lea.vmem %s6, 32
    %v2660 = vld [vmem:[%s2659] sm:$0xff]
    %v2661 = vld [vmem:[%s2659 + $0x8] sm:$0xff]
    %v2662 = vld [vmem:[%s2659 + $0x10] sm:$0xff]
    %v2663 = vld [vmem:[%s2659 + $0x18] sm:$0xff]
    %v2665 = vsel %vm146, %v2657, 0
    %v2668 = vsel %vm146, %v2658, 0
    %2670 = vmatprep.subr.mxu0 0.0
    %2671 = vmatpush1.msra.mxu0 %v2660
    %2672 = vmatprep.subr.mxu0 0.0
    %2673 = vmatpush1.msra.mxu0 %v2661
    %2674 = vmatprep.subr.mxu0 0.0
    %2675 = vmatpush1.msra.mxu0 %v2662
    %2676 = vmatprep.subr.mxu0 0.0
    %2677 = vmatpush1.msra.mxu0 %v2663
    %2678 = vmatprep.subr.mxu0 0.0
    %2679 = vmatpush1.msra.mxu0 0.0
    %2680 = vmatprep.subr.mxu0 0.0
    %2681 = vmatpush1.msra.mxu0 0.0
    %2682 = vmatprep.subr.mxu0 0.0
    %2683 = vmatpush1.msra.mxu0 0.0
    %2684 = vmatprep.subr.mxu0 0.0
    %2685 = vmatpush1.msra.mxu0 0.0
    %2686 = vmatprep.subr.mxu0 0.0
    %2687 = vmatpush1.msra.mxu0 0.0
    %2688 = vmatprep.subr.mxu0 0.0
    %2689 = vmatpush1.msra.mxu0 0.0
    %2690 = vmatprep.subr.mxu0 0.0
    %2691 = vmatpush1.msra.mxu0 0.0
    %2692 = vmatprep.subr.mxu0 0.0
    %2693 = vmatpush1.msra.mxu0 0.0
    %2694 = vmatprep.subr.mxu0 0.0
    %2695 = vmatpush1.msra.mxu0 0.0
    %2696 = vmatprep.subr.mxu0 0.0
    %2697 = vmatpush1.msra.mxu0 0.0
    %2698 = vmatprep.subr.mxu0 0.0
    %2699 = vmatpush1.msra.mxu0 0.0
    %2700 = vmatprep.subr.mxu0 0.0
    %2701 = vmatpush1.msra.mxu0 0.0
    %2702 = vmatprep.subr.mxu0 0.0
    %2703 = vmatpush1.msra.mxu0 0.0
    %2704 = vmatprep.subr.mxu0 0.0
    %2705 = vmatpush1.msra.mxu0 0.0
    %2706 = vmatprep.subr.mxu0 0.0
    %2707 = vmatpush1.msra.mxu0 0.0
    %2708 = vmatprep.subr.mxu0 0.0
    %2709 = vmatpush1.msra.mxu0 0.0
    %2710 = vmatprep.subr.mxu0 0.0
    %2711 = vmatpush1.msra.mxu0 0.0
    %2712 = vmatprep.subr.mxu0 0.0
    %2713 = vmatpush1.msra.mxu0 0.0
    %2714 = vmatprep.subr.mxu0 0.0
    %2715 = vmatpush1.msra.mxu0 0.0
    %2716 = vmatprep.subr.mxu0 0.0
    %2717 = vmatpush1.msra.mxu0 0.0
    %2718 = vmatprep.subr.mxu0 0.0
    %2719 = vmatpush1.msra.mxu0 0.0
    %2720 = vmatprep.subr.mxu0 0.0
    %2721 = vmatpush1.msra.mxu0 0.0
    %2722 = vmatprep.subr.mxu0 0.0
    %2723 = vmatpush1.msra.mxu0 0.0
    %2724 = vmatprep.subr.mxu0 0.0
    %2725 = vmatpush1.msra.mxu0 0.0
    %2726 = vmatprep.subr.mxu0 0.0
    %2727 = vmatpush1.msra.mxu0 0.0
    %2728 = vmatprep.subr.mxu0 0.0
    %2729 = vmatpush1.msra.mxu0 0.0
    %2730 = vmatprep.subr.mxu0 0.0
    %2731 = vmatpush1.msra.mxu0 0.0
    %2732 = vmatprep.subr.mxu0 0.0
    %2733 = vmatpush1.msra.mxu0 0.0
    %2734 = vmatprep.mubr.f32.mxu0 0.0
    %2735 = vmatmul.mubr.f32.gmra.mrb[0].mxu0 %v2665
    %v2736 = vpop.f32.mrb[0].mxu0
    %v2737 = vadd.f32 0.0, %v2736
    %v2738 = vpop.f32.mrb[0].mxu0
    %2739 = vmatprep.mubr.f32.mxu0 0.0
    %2740 = vmatmul.mubr.f32.gmra.mrb[0].mxu0 %v2668
    %v2741 = vpop.f32.mrb[0].mxu0
    %v2742 = vadd.f32 0.0, %v2741
    %v2743 = vpop.f32.mrb[0].mxu0
    %2744 = vdwg.mxu0
    %2749 = vrot.lane.b32.xlu0 %v2660, 96
    %v2750 = vpop.permute.xlu0 %2749
    %2751 = vrot.lane.b32.xlu0 %v2661, 96
    %v2752 = vpop.permute.xlu0 %2751
    %2753 = vrot.lane.b32.xlu0 %v2662, 96
    %v2754 = vpop.permute.xlu0 %2753
    %2755 = vrot.lane.b32.xlu0 %v2663, 96
    %v2756 = vpop.permute.xlu0 %2755
    %2761 = vmatprep.subr.mxu0 0.0
    %2762 = vmatpush1.msra.mxu0 %v2750
    %2763 = vmatprep.subr.mxu0 0.0
    %2764 = vmatpush1.msra.mxu0 %v2752
    %2765 = vmatprep.subr.mxu0 0.0
    %2766 = vmatpush1.msra.mxu0 %v2754
    %2767 = vmatprep.subr.mxu0 0.0
    %2768 = vmatpush1.msra.mxu0 %v2756
    %2769 = vmatprep.subr.mxu0 0.0
    %2770 = vmatpush1.msra.mxu0 0.0
    %2771 = vmatprep.subr.mxu0 0.0
    %2772 = vmatpush1.msra.mxu0 0.0
    %2773 = vmatprep.subr.mxu0 0.0
    %2774 = vmatpush1.msra.mxu0 0.0
    %2775 = vmatprep.subr.mxu0 0.0
    %2776 = vmatpush1.msra.mxu0 0.0
    %2777 = vmatprep.subr.mxu0 0.0
    %2778 = vmatpush1.msra.mxu0 0.0
    %2779 = vmatprep.subr.mxu0 0.0
    %2780 = vmatpush1.msra.mxu0 0.0
    %2781 = vmatprep.subr.mxu0 0.0
    %2782 = vmatpush1.msra.mxu0 0.0
    %2783 = vmatprep.subr.mxu0 0.0
    %2784 = vmatpush1.msra.mxu0 0.0
    %2785 = vmatprep.subr.mxu0 0.0
    %2786 = vmatpush1.msra.mxu0 0.0
    %2787 = vmatprep.subr.mxu0 0.0
    %2788 = vmatpush1.msra.mxu0 0.0
    %2789 = vmatprep.subr.mxu0 0.0
    %2790 = vmatpush1.msra.mxu0 0.0
    %2791 = vmatprep.subr.mxu0 0.0
    %2792 = vmatpush1.msra.mxu0 0.0
    %2793 = vmatprep.subr.mxu0 0.0
    %2794 = vmatpush1.msra.mxu0 0.0
    %2795 = vmatprep.subr.mxu0 0.0
    %2796 = vmatpush1.msra.mxu0 0.0
    %2797 = vmatprep.subr.mxu0 0.0
    %2798 = vmatpush1.msra.mxu0 0.0
    %2799 = vmatprep.subr.mxu0 0.0
    %2800 = vmatpush1.msra.mxu0 0.0
    %2801 = vmatprep.subr.mxu0 0.0
    %2802 = vmatpush1.msra.mxu0 0.0
    %2803 = vmatprep.subr.mxu0 0.0
    %2804 = vmatpush1.msra.mxu0 0.0
    %2805 = vmatprep.subr.mxu0 0.0
    %2806 = vmatpush1.msra.mxu0 0.0
    %2807 = vmatprep.subr.mxu0 0.0
    %2808 = vmatpush1.msra.mxu0 0.0
    %2809 = vmatprep.subr.mxu0 0.0
    %2810 = vmatpush1.msra.mxu0 0.0
    %2811 = vmatprep.subr.mxu0 0.0
    %2812 = vmatpush1.msra.mxu0 0.0
    %2813 = vmatprep.subr.mxu0 0.0
    %2814 = vmatpush1.msra.mxu0 0.0
    %2815 = vmatprep.subr.mxu0 0.0
    %2816 = vmatpush1.msra.mxu0 0.0
    %2817 = vmatprep.subr.mxu0 0.0
    %2818 = vmatpush1.msra.mxu0 0.0
    %2819 = vmatprep.subr.mxu0 0.0
    %2820 = vmatpush1.msra.mxu0 0.0
    %2821 = vmatprep.subr.mxu0 0.0
    %2822 = vmatpush1.msra.mxu0 0.0
    %2823 = vmatprep.subr.mxu0 0.0
    %2824 = vmatpush1.msra.mxu0 0.0
    %2825 = vmatprep.mubr.f32.mxu0 0.0
    %2826 = vmatmul.mubr.f32.gmra.mrb[0].mxu0 %v2665
    %v2827 = vpop.f32.mrb[0].mxu0
    %v2828 = vadd.f32 0.0, %v2827
    %v2829 = vpop.f32.mrb[0].mxu0
    %2830 = vmatprep.mubr.f32.mxu0 0.0
    %2831 = vmatmul.mubr.f32.gmra.mrb[0].mxu0 %v2668
    %v2832 = vpop.f32.mrb[0].mxu0
    %v2833 = vadd.f32 0.0, %v2832
    %v2834 = vpop.f32.mrb[0].mxu0
    %2835 = vdwg.mxu0
    %2836 = vrot.lane.b32.xlu0 %v2660, 64
    %v2837 = vpop.permute.xlu0 %2836
    %2838 = vrot.lane.b32.xlu0 %v2661, 64
    %v2839 = vpop.permute.xlu0 %2838
    %2840 = vrot.lane.b32.xlu0 %v2662, 64
    %v2841 = vpop.permute.xlu0 %2840
    %2842 = vrot.lane.b32.xlu0 %v2663, 64
    %v2843 = vpop.permute.xlu0 %2842
    %2848 = vmatprep.subr.mxu0 0.0
    %2849 = vmatpush1.msra.mxu0 %v2837
    %2850 = vmatprep.subr.mxu0 0.0
    %2851 = vmatpush1.msra.mxu0 %v2839
    %2852 = vmatprep.subr.mxu0 0.0
    %2853 = vmatpush1.msra.mxu0 %v2841
    %2854 = vmatprep.subr.mxu0 0.0
    %2855 = vmatpush1.msra.mxu0 %v2843
    %2856 = vmatprep.subr.mxu0 0.0
    %2857 = vmatpush1.msra.mxu0 0.0
    %2858 = vmatprep.subr.mxu0 0.0
    %2859 = vmatpush1.msra.mxu0 0.0
    %2860 = vmatprep.subr.mxu0 0.0
    %2861 = vmatpush1.msra.mxu0 0.0
    %2862 = vmatprep.subr.mxu0 0.0
    %2863 = vmatpush1.msra.mxu0 0.0
    %2864 = vmatprep.subr.mxu0 0.0
    %2865 = vmatpush1.msra.mxu0 0.0
    %2866 = vmatprep.subr.mxu0 0.0
    %2867 = vmatpush1.msra.mxu0 0.0
    %2868 = vmatprep.subr.mxu0 0.0
    %2869 = vmatpush1.msra.mxu0 0.0
    %2870 = vmatprep.subr.mxu0 0.0
    %2871 = vmatpush1.msra.mxu0 0.0
    %2872 = vmatprep.subr.mxu0 0.0
    %2873 = vmatpush1.msra.mxu0 0.0
    %2874 = vmatprep.subr.mxu0 0.0
    %2875 = vmatpush1.msra.mxu0 0.0
    %2876 = vmatprep.subr.mxu0 0.0
    %2877 = vmatpush1.msra.mxu0 0.0
    %2878 = vmatprep.subr.mxu0 0.0
    %2879 = vmatpush1.msra.mxu0 0.0
    %2880 = vmatprep.subr.mxu0 0.0
    %2881 = vmatpush1.msra.mxu0 0.0
    %2882 = vmatprep.subr.mxu0 0.0
    %2883 = vmatpush1.msra.mxu0 0.0
    %2884 = vmatprep.subr.mxu0 0.0
    %2885 = vmatpush1.msra.mxu0 0.0
    %2886 = vmatprep.subr.mxu0 0.0
    %2887 = vmatpush1.msra.mxu0 0.0
    %2888 = vmatprep.subr.mxu0 0.0
    %2889 = vmatpush1.msra.mxu0 0.0
    %2890 = vmatprep.subr.mxu0 0.0
    %2891 = vmatpush1.msra.mxu0 0.0
    %2892 = vmatprep.subr.mxu0 0.0
    %2893 = vmatpush1.msra.mxu0 0.0
    %2894 = vmatprep.subr.mxu0 0.0
    %2895 = vmatpush1.msra.mxu0 0.0
    %2896 = vmatprep.subr.mxu0 0.0
    %2897 = vmatpush1.msra.mxu0 0.0
    %2898 = vmatprep.subr.mxu0 0.0
    %2899 = vmatpush1.msra.mxu0 0.0
    %2900 = vmatprep.subr.mxu0 0.0
    %2901 = vmatpush1.msra.mxu0 0.0
    %2902 = vmatprep.subr.mxu0 0.0
    %2903 = vmatpush1.msra.mxu0 0.0
    %2904 = vmatprep.subr.mxu0 0.0
    %2905 = vmatpush1.msra.mxu0 0.0
    %2906 = vmatprep.subr.mxu0 0.0
    %2907 = vmatpush1.msra.mxu0 0.0
    %2908 = vmatprep.subr.mxu0 0.0
    %2909 = vmatpush1.msra.mxu0 0.0
    %2910 = vmatprep.subr.mxu0 0.0
    %2911 = vmatpush1.msra.mxu0 0.0
    %2912 = vmatprep.mubr.f32.mxu0 0.0
    %2913 = vmatmul.mubr.f32.gmra.mrb[0].mxu0 %v2665
    %v2914 = vpop.f32.mrb[0].mxu0
    %v2915 = vadd.f32 0.0, %v2914
    %v2916 = vpop.f32.mrb[0].mxu0
    %2917 = vmatprep.mubr.f32.mxu0 0.0
    %2918 = vmatmul.mubr.f32.gmra.mrb[0].mxu0 %v2668
    %v2919 = vpop.f32.mrb[0].mxu0
    %v2920 = vadd.f32 0.0, %v2919
    %v2921 = vpop.f32.mrb[0].mxu0
    %2922 = vdwg.mxu0
    %v2924 = vsel %vm454, %v2737, 0
    %v2927 = vsel %vm454, %v2742, 0
    %v2930 = vsel %vm454, %v2828, 0
    %v2933 = vsel %vm454, %v2833, 0
    %2935 = vmatprep.subr.mxu0 0.0
    %2936 = vmatpush1.xpose.msra.mxu0 %v2930
    %2937 = vmatprep.subr.mxu0 0.0
    %2938 = vmatpush1.xpose.msra.mxu0 %v2933
    %2939 = vmatprep.subr.mxu0 0.0
    %2940 = vmatpush1.xpose.msra.mxu0 0.0
    %2941 = vmatprep.subr.mxu0 0.0
    %2942 = vmatpush1.xpose.msra.mxu0 0.0
    %2943 = vmatprep.subr.mxu0 0.0
    %2944 = vmatpush1.xpose.msra.mxu0 0.0
    %2945 = vmatprep.subr.mxu0 0.0
    %2946 = vmatpush1.xpose.msra.mxu0 0.0
    %2947 = vmatprep.subr.mxu0 0.0
    %2948 = vmatpush1.xpose.msra.mxu0 0.0
    %2949 = vmatprep.subr.mxu0 0.0
    %2950 = vmatpush1.xpose.msra.mxu0 0.0
    %2951 = vmatprep.subr.mxu0 0.0
    %2952 = vmatpush1.xpose.msra.mxu0 0.0
    %2953 = vmatprep.subr.mxu0 0.0
    %2954 = vmatpush1.xpose.msra.mxu0 0.0
    %2955 = vmatprep.subr.mxu0 0.0
    %2956 = vmatpush1.xpose.msra.mxu0 0.0
    %2957 = vmatprep.subr.mxu0 0.0
    %2958 = vmatpush1.xpose.msra.mxu0 0.0
    %2959 = vmatprep.subr.mxu0 0.0
    %2960 = vmatpush1.xpose.msra.mxu0 0.0
    %2961 = vmatprep.subr.mxu0 0.0
    %2962 = vmatpush1.xpose.msra.mxu0 0.0
    %2963 = vmatprep.subr.mxu0 0.0
    %2964 = vmatpush1.xpose.msra.mxu0 0.0
    %2965 = vmatprep.subr.mxu0 0.0
    %2966 = vmatpush1.xpose.msra.mxu0 0.0
    %2967 = vmatprep.subr.mxu0 0.0
    %2968 = vmatpush1.xpose.msra.mxu0 0.0
    %2969 = vmatprep.subr.mxu0 0.0
    %2970 = vmatpush1.xpose.msra.mxu0 0.0
    %2971 = vmatprep.subr.mxu0 0.0
    %2972 = vmatpush1.xpose.msra.mxu0 0.0
    %2973 = vmatprep.subr.mxu0 0.0
    %2974 = vmatpush1.xpose.msra.mxu0 0.0
    %2975 = vmatprep.subr.mxu0 0.0
    %2976 = vmatpush1.xpose.msra.mxu0 0.0
    %2977 = vmatprep.subr.mxu0 0.0
    %2978 = vmatpush1.xpose.msra.mxu0 0.0
    %2979 = vmatprep.subr.mxu0 0.0
    %2980 = vmatpush1.xpose.msra.mxu0 0.0
    %2981 = vmatprep.subr.mxu0 0.0
    %2982 = vmatpush1.xpose.msra.mxu0 0.0
    %2983 = vmatprep.subr.mxu0 0.0
    %2984 = vmatpush1.xpose.msra.mxu0 0.0
    %2985 = vmatprep.subr.mxu0 0.0
    %2986 = vmatpush1.xpose.msra.mxu0 0.0
    %2987 = vmatprep.subr.mxu0 0.0
    %2988 = vmatpush1.xpose.msra.mxu0 0.0
    %2989 = vmatprep.subr.mxu0 0.0
    %2990 = vmatpush1.xpose.msra.mxu0 0.0
    %2991 = vmatprep.subr.mxu0 0.0
    %2992 = vmatpush1.xpose.msra.mxu0 0.0
    %2993 = vmatprep.subr.mxu0 0.0
    %2994 = vmatpush1.xpose.msra.mxu0 0.0
    %2995 = vmatprep.subr.mxu0 0.0
    %2996 = vmatpush1.xpose.msra.mxu0 0.0
    %2997 = vmatprep.subr.mxu0 0.0
    %2998 = vmatpush1.xpose.msra.mxu0 0.0
    %2999 = vmatprep.mubr.f32.mxu0 0.0
    %3000 = vmatmul.mubr.f32.gmra.mrb[0].mxu0 %v2924
    %v3001 = vpop.f32.mrb[0].mxu0
    %v3002 = vadd.f32 %v142, %v3001
    %v3003 = vpop.f32.mrb[0].mxu0
    %3004 = vmatprep.mubr.f32.mxu0 0.0
    %3005 = vmatmul.mubr.f32.gmra.mrb[0].mxu0 %v2927
    %v3006 = vpop.f32.mrb[0].mxu0
    %v3007 = vadd.f32 %v143, %v3006
    %v3008 = vpop.f32.mrb[0].mxu0
    %3009 = vdwg.mxu0
    %v3010 = vsel %vm542, %v3002, -inf
    %3011 = vmax.xlane.f32.xlu0 %v3010
    %v3012 = vpop.xlane.xlu0 %3011
    %v3013 = vsel %vm546, %v3007, -inf
    %3014 = vmax.xlane.f32.xlu0 %v3013
    %v3015 = vpop.xlane.xlu0 %3014
    %v3016 = vsub.f32 %v3002, %v3012
    %v3017 = vsub.f32 %v3007, %v3015
    %v3018 = vmul.f32 %v3016, 1.442695
    %v3019 = vpow.pop %v3018
    %v3020 = vmul.f32 %v3017, 1.442695
    %v3021 = vpow.pop %v3020
    %v3022 = vsel %vm542, %v3019, 0.0
    %3023 = vadd.xlane.f32.xlu0 %v3022
    %v3024 = vpop.xlane.xlu0 %3023
    %v3025 = vsel %vm546, %v3021, 0.0
    %3026 = vadd.xlane.f32.xlu0 %v3025
    %v3027 = vpop.xlane.xlu0 %3026
    %v3028 = vrcp.pop %v3024
    %v3029 = vmul.f32 1.0, %v3028
    %v3030 = vrcp.pop %v3027
    %v3031 = vmul.f32 1.0, %v3030
    %v3032 = vmul.f32 %v3019, %v3029
    %v3033 = vmul.f32 %v3021, %v3031
    %v3035 = vsel %vm542, %v3032, 0
    %v3038 = vsel %vm542, %v3033, 0
    %v3041 = vsel %vm63, %v2920, 0
    %3043 = vmatprep.subr.mxu0 0.0
    %3044 = vmatpush1.msra.mxu0 %v2915
    %3045 = vmatprep.subr.mxu0 0.0
    %3046 = vmatpush1.msra.mxu0 %v3041
    %3047 = vmatprep.subr.mxu0 0.0
    %3048 = vmatpush1.msra.mxu0 0.0
    %3049 = vmatprep.subr.mxu0 0.0
    %3050 = vmatpush1.msra.mxu0 0.0
    %3051 = vmatprep.subr.mxu0 0.0
    %3052 = vmatpush1.msra.mxu0 0.0
    %3053 = vmatprep.subr.mxu0 0.0
    %3054 = vmatpush1.msra.mxu0 0.0
    %3055 = vmatprep.subr.mxu0 0.0
    %3056 = vmatpush1.msra.mxu0 0.0
    %3057 = vmatprep.subr.mxu0 0.0
    %3058 = vmatpush1.msra.mxu0 0.0
    %3059 = vmatprep.subr.mxu0 0.0
    %3060 = vmatpush1.msra.mxu0 0.0
    %3061 = vmatprep.subr.mxu0 0.0
    %3062 = vmatpush1.msra.mxu0 0.0
    %3063 = vmatprep.subr.mxu0 0.0
    %3064 = vmatpush1.msra.mxu0 0.0
    %3065 = vmatprep.subr.mxu0 0.0
    %3066 = vmatpush1.msra.mxu0 0.0
    %3067 = vmatprep.subr.mxu0 0.0
    %3068 = vmatpush1.msra.mxu0 0.0
    %3069 = vmatprep.subr.mxu0 0.0
    %3070 = vmatpush1.msra.mxu0 0.0
    %3071 = vmatprep.subr.mxu0 0.0
    %3072 = vmatpush1.msra.mxu0 0.0
    %3073 = vmatprep.subr.mxu0 0.0
    %3074 = vmatpush1.msra.mxu0 0.0
    %3075 = vmatprep.subr.mxu0 0.0
    %3076 = vmatpush1.msra.mxu0 0.0
    %3077 = vmatprep.subr.mxu0 0.0
    %3078 = vmatpush1.msra.mxu0 0.0
    %3079 = vmatprep.subr.mxu0 0.0
    %3080 = vmatpush1.msra.mxu0 0.0
    %3081 = vmatprep.subr.mxu0 0.0
    %3082 = vmatpush1.msra.mxu0 0.0
    %3083 = vmatprep.subr.mxu0 0.0
    %3084 = vmatpush1.msra.mxu0 0.0
    %3085 = vmatprep.subr.mxu0 0.0
    %3086 = vmatpush1.msra.mxu0 0.0
    %3087 = vmatprep.subr.mxu0 0.0
    %3088 = vmatpush1.msra.mxu0 0.0
    %3089 = vmatprep.subr.mxu0 0.0
    %3090 = vmatpush1.msra.mxu0 0.0
    %3091 = vmatprep.subr.mxu0 0.0
    %3092 = vmatpush1.msra.mxu0 0.0
    %3093 = vmatprep.subr.mxu0 0.0
    %3094 = vmatpush1.msra.mxu0 0.0
    %3095 = vmatprep.subr.mxu0 0.0
    %3096 = vmatpush1.msra.mxu0 0.0
    %3097 = vmatprep.subr.mxu0 0.0
    %3098 = vmatpush1.msra.mxu0 0.0
    %3099 = vmatprep.subr.mxu0 0.0
    %3100 = vmatpush1.msra.mxu0 0.0
    %3101 = vmatprep.subr.mxu0 0.0
    %3102 = vmatpush1.msra.mxu0 0.0
    %3103 = vmatprep.subr.mxu0 0.0
    %3104 = vmatpush1.msra.mxu0 0.0
    %3105 = vmatprep.subr.mxu0 0.0
    %3106 = vmatpush1.msra.mxu0 0.0
    %3107 = vmatprep.mubr.f32.mxu0 0.0
    %3108 = vmatmul.mubr.f32.gmra.mrb[0].mxu0 %v3035
    %v3109 = vpop.f32.mrb[0].mxu0
    %v3110 = vadd.f32 0.0, %v3109
    %v3111 = vpop.f32.mrb[0].mxu0
    %3112 = vmatprep.mubr.f32.mxu0 0.0
    %3113 = vmatmul.mubr.f32.gmra.mrb[0].mxu0 %v3038
    %v3114 = vpop.f32.mrb[0].mxu0
    %v3115 = vadd.f32 0.0, %v3114
    %v3116 = vpop.f32.mrb[0].mxu0
    %3117 = vdwg.mxu0
    %s3118 = scalar_lea.vmem %s7, 32
    %v3119 = vld [vmem:[%s3118] sm:$0xff]
    %v3121 = vsel %vm454, %v3110, 0
    %v3124 = vsel %vm454, %v3115, 0
    %3126 = vmatprep.subr.mxu0 0.0
    %3127 = vmatpush1.msra.mxu0 %v3119
    %3128 = vmatprep.subr.mxu0 0.0
    %3129 = vmatpush1.msra.mxu0 0.0
    %3130 = vmatprep.subr.mxu0 0.0
    %3131 = vmatpush1.msra.mxu0 0.0
    %3132 = vmatprep.subr.mxu0 0.0
    %3133 = vmatpush1.msra.mxu0 0.0
    %3134 = vmatprep.subr.mxu0 0.0
    %3135 = vmatpush1.msra.mxu0 0.0
    %3136 = vmatprep.subr.mxu0 0.0
    %3137 = vmatpush1.msra.mxu0 0.0
    %3138 = vmatprep.subr.mxu0 0.0
    %3139 = vmatpush1.msra.mxu0 0.0
    %3140 = vmatprep.subr.mxu0 0.0
    %3141 = vmatpush1.msra.mxu0 0.0
    %3142 = vmatprep.subr.mxu0 0.0
    %3143 = vmatpush1.msra.mxu0 0.0
    %3144 = vmatprep.subr.mxu0 0.0
    %3145 = vmatpush1.msra.mxu0 0.0
    %3146 = vmatprep.subr.mxu0 0.0
    %3147 = vmatpush1.msra.mxu0 0.0
    %3148 = vmatprep.subr.mxu0 0.0
    %3149 = vmatpush1.msra.mxu0 0.0
    %3150 = vmatprep.subr.mxu0 0.0
    %3151 = vmatpush1.msra.mxu0 0.0
    %3152 = vmatprep.subr.mxu0 0.0
    %3153 = vmatpush1.msra.mxu0 0.0
    %3154 = vmatprep.subr.mxu0 0.0
    %3155 = vmatpush1.msra.mxu0 0.0
    %3156 = vmatprep.subr.mxu0 0.0
    %3157 = vmatpush1.msra.mxu0 0.0
    %3158 = vmatprep.subr.mxu0 0.0
    %3159 = vmatpush1.msra.mxu0 0.0
    %3160 = vmatprep.subr.mxu0 0.0
    %3161 = vmatpush1.msra.mxu0 0.0
    %3162 = vmatprep.subr.mxu0 0.0
    %3163 = vmatpush1.msra.mxu0 0.0
    %3164 = vmatprep.subr.mxu0 0.0
    %3165 = vmatpush1.msra.mxu0 0.0
    %3166 = vmatprep.subr.mxu0 0.0
    %3167 = vmatpush1.msra.mxu0 0.0
    %3168 = vmatprep.subr.mxu0 0.0
    %3169 = vmatpush1.msra.mxu0 0.0
    %3170 = vmatprep.subr.mxu0 0.0
    %3171 = vmatpush1.msra.mxu0 0.0
    %3172 = vmatprep.subr.mxu0 0.0
    %3173 = vmatpush1.msra.mxu0 0.0
    %3174 = vmatprep.subr.mxu0 0.0
    %3175 = vmatpush1.msra.mxu0 0.0
    %3176 = vmatprep.subr.mxu0 0.0
    %3177 = vmatpush1.msra.mxu0 0.0
    %3178 = vmatprep.subr.mxu0 0.0
    %3179 = vmatpush1.msra.mxu0 0.0
    %3180 = vmatprep.subr.mxu0 0.0
    %3181 = vmatpush1.msra.mxu0 0.0
    %3182 = vmatprep.subr.mxu0 0.0
    %3183 = vmatpush1.msra.mxu0 0.0
    %3184 = vmatprep.subr.mxu0 0.0
    %3185 = vmatpush1.msra.mxu0 0.0
    %3186 = vmatprep.subr.mxu0 0.0
    %3187 = vmatpush1.msra.mxu0 0.0
    %3188 = vmatprep.subr.mxu0 0.0
    %3189 = vmatpush1.msra.mxu0 0.0
    %3190 = vmatprep.mubr.f32.mxu0 0.0
    %3191 = vmatmul.mubr.f32.gmra.mrb[0].mxu0 %v3121
    %v3192 = vpop.f32.mrb[0].mxu0
    %v3193 = vadd.f32 0.0, %v3192
    %v3194 = vpop.f32.mrb[0].mxu0
    %3195 = vmatprep.mubr.f32.mxu0 0.0
    %3196 = vmatmul.mubr.f32.gmra.mrb[0].mxu0 %v3124
    %v3197 = vpop.f32.mrb[0].mxu0
    %v3198 = vadd.f32 0.0, %v3197
    %v3199 = vpop.f32.mrb[0].mxu0
    %3200 = vdwg.mxu0
    %v3201 = vadd.f32 %v2611, %v3193
    %v3202 = vadd.f32 %v2612, %v3198
    %3203 = vrot.lane.b32.xlu0 %v2660, 120
    %v3204 = vpop.permute.xlu0 %3203
    %3205 = vrot.lane.b32.xlu0 %v2661, 120
    %v3206 = vpop.permute.xlu0 %3205
    %3207 = vrot.lane.b32.xlu0 %v2662, 120
    %v3208 = vpop.permute.xlu0 %3207
    %3209 = vrot.lane.b32.xlu0 %v2663, 120
    %v3210 = vpop.permute.xlu0 %3209
    %3215 = vmatprep.subr.mxu0 0.0
    %3216 = vmatpush1.msra.mxu0 %v3204
    %3217 = vmatprep.subr.mxu0 0.0
    %3218 = vmatpush1.msra.mxu0 %v3206
    %3219 = vmatprep.subr.mxu0 0.0
    %3220 = vmatpush1.msra.mxu0 %v3208
    %3221 = vmatprep.subr.mxu0 0.0
    %3222 = vmatpush1.msra.mxu0 %v3210
    %3223 = vmatprep.subr.mxu0 0.0
    %3224 = vmatpush1.msra.mxu0 0.0
    %3225 = vmatprep.subr.mxu0 0.0
    %3226 = vmatpush1.msra.mxu0 0.0
    %3227 = vmatprep.subr.mxu0 0.0
    %3228 = vmatpush1.msra.mxu0 0.0
    %3229 = vmatprep.subr.mxu0 0.0
    %3230 = vmatpush1.msra.mxu0 0.0
    %3231 = vmatprep.subr.mxu0 0.0
    %3232 = vmatpush1.msra.mxu0 0.0
    %3233 = vmatprep.subr.mxu0 0.0
    %3234 = vmatpush1.msra.mxu0 0.0
    %3235 = vmatprep.subr.mxu0 0.0
    %3236 = vmatpush1.msra.mxu0 0.0
    %3237 = vmatprep.subr.mxu0 0.0
    %3238 = vmatpush1.msra.mxu0 0.0
    %3239 = vmatprep.subr.mxu0 0.0
    %3240 = vmatpush1.msra.mxu0 0.0
    %3241 = vmatprep.subr.mxu0 0.0
    %3242 = vmatpush1.msra.mxu0 0.0
    %3243 = vmatprep.subr.mxu0 0.0
    %3244 = vmatpush1.msra.mxu0 0.0
    %3245 = vmatprep.subr.mxu0 0.0
    %3246 = vmatpush1.msra.mxu0 0.0
    %3247 = vmatprep.subr.mxu0 0.0
    %3248 = vmatpush1.msra.mxu0 0.0
    %3249 = vmatprep.subr.mxu0 0.0
    %3250 = vmatpush1.msra.mxu0 0.0
    %3251 = vmatprep.subr.mxu0 0.0
    %3252 = vmatpush1.msra.mxu0 0.0
    %3253 = vmatprep.subr.mxu0 0.0
    %3254 = vmatpush1.msra.mxu0 0.0
    %3255 = vmatprep.subr.mxu0 0.0
    %3256 = vmatpush1.msra.mxu0 0.0
    %3257 = vmatprep.subr.mxu0 0.0
    %3258 = vmatpush1.msra.mxu0 0.0
    %3259 = vmatprep.subr.mxu0 0.0
    %3260 = vmatpush1.msra.mxu0 0.0
    %3261 = vmatprep.subr.mxu0 0.0
    %3262 = vmatpush1.msra.mxu0 0.0
    %3263 = vmatprep.subr.mxu0 0.0
    %3264 = vmatpush1.msra.mxu0 0.0
    %3265 = vmatprep.subr.mxu0 0.0
    %3266 = vmatpush1.msra.mxu0 0.0
    %3267 = vmatprep.subr.mxu0 0.0
    %3268 = vmatpush1.msra.mxu0 0.0
    %3269 = vmatprep.subr.mxu0 0.0
    %3270 = vmatpush1.msra.mxu0 0.0
    %3271 = vmatprep.subr.mxu0 0.0
    %3272 = vmatpush1.msra.mxu0 0.0
    %3273 = vmatprep.subr.mxu0 0.0
    %3274 = vmatpush1.msra.mxu0 0.0
    %3275 = vmatprep.subr.mxu0 0.0
    %3276 = vmatpush1.msra.mxu0 0.0
    %3277 = vmatprep.subr.mxu0 0.0
    %3278 = vmatpush1.msra.mxu0 0.0
    %3279 = vmatprep.mubr.f32.mxu0 0.0
    %3280 = vmatmul.mubr.f32.gmra.mrb[0].mxu0 %v2665
    %v3281 = vpop.f32.mrb[0].mxu0
    %v3282 = vadd.f32 0.0, %v3281
    %v3283 = vpop.f32.mrb[0].mxu0
    %3284 = vmatprep.mubr.f32.mxu0 0.0
    %3285 = vmatmul.mubr.f32.gmra.mrb[0].mxu0 %v2668
    %v3286 = vpop.f32.mrb[0].mxu0
    %v3287 = vadd.f32 0.0, %v3286
    %v3288 = vpop.f32.mrb[0].mxu0
    %3289 = vdwg.mxu0
    %3290 = vrot.lane.b32.xlu0 %v2660, 88
    %v3291 = vpop.permute.xlu0 %3290
    %3292 = vrot.lane.b32.xlu0 %v2661, 88
    %v3293 = vpop.permute.xlu0 %3292
    %3294 = vrot.lane.b32.xlu0 %v2662, 88
    %v3295 = vpop.permute.xlu0 %3294
    %3296 = vrot.lane.b32.xlu0 %v2663, 88
    %v3297 = vpop.permute.xlu0 %3296
    %3302 = vmatprep.subr.mxu0 0.0
    %3303 = vmatpush1.msra.mxu0 %v3291
    %3304 = vmatprep.subr.mxu0 0.0
    %3305 = vmatpush1.msra.mxu0 %v3293
    %3306 = vmatprep.subr.mxu0 0.0
    %3307 = vmatpush1.msra.mxu0 %v3295
    %3308 = vmatprep.subr.mxu0 0.0
    %3309 = vmatpush1.msra.mxu0 %v3297
    %3310 = vmatprep.subr.mxu0 0.0
    %3311 = vmatpush1.msra.mxu0 0.0
    %3312 = vmatprep.subr.mxu0 0.0
    %3313 = vmatpush1.msra.mxu0 0.0
    %3314 = vmatprep.subr.mxu0 0.0
    %3315 = vmatpush1.msra.mxu0 0.0
    %3316 = vmatprep.subr.mxu0 0.0
    %3317 = vmatpush1.msra.mxu0 0.0
    %3318 = vmatprep.subr.mxu0 0.0
    %3319 = vmatpush1.msra.mxu0 0.0
    %3320 = vmatprep.subr.mxu0 0.0
    %3321 = vmatpush1.msra.mxu0 0.0
    %3322 = vmatprep.subr.mxu0 0.0
    %3323 = vmatpush1.msra.mxu0 0.0
    %3324 = vmatprep.subr.mxu0 0.0
    %3325 = vmatpush1.msra.mxu0 0.0
    %3326 = vmatprep.subr.mxu0 0.0
    %3327 = vmatpush1.msra.mxu0 0.0
    %3328 = vmatprep.subr.mxu0 0.0
    %3329 = vmatpush1.msra.mxu0 0.0
    %3330 = vmatprep.subr.mxu0 0.0
    %3331 = vmatpush1.msra.mxu0 0.0
    %3332 = vmatprep.subr.mxu0 0.0
    %3333 = vmatpush1.msra.mxu0 0.0
    %3334 = vmatprep.subr.mxu0 0.0
    %3335 = vmatpush1.msra.mxu0 0.0
    %3336 = vmatprep.subr.mxu0 0.0
    %3337 = vmatpush1.msra.mxu0 0.0
    %3338 = vmatprep.subr.mxu0 0.0
    %3339 = vmatpush1.msra.mxu0 0.0
    %3340 = vmatprep.subr.mxu0 0.0
    %3341 = vmatpush1.msra.mxu0 0.0
    %3342 = vmatprep.subr.mxu0 0.0
    %3343 = vmatpush1.msra.mxu0 0.0
    %3344 = vmatprep.subr.mxu0 0.0
    %3345 = vmatpush1.msra.mxu0 0.0
    %3346 = vmatprep.subr.mxu0 0.0
    %3347 = vmatpush1.msra.mxu0 0.0
    %3348 = vmatprep.subr.mxu0 0.0
    %3349 = vmatpush1.msra.mxu0 0.0
    %3350 = vmatprep.subr.mxu0 0.0
    %3351 = vmatpush1.msra.mxu0 0.0
    %3352 = vmatprep.subr.mxu0 0.0
    %3353 = vmatpush1.msra.mxu0 0.0
    %3354 = vmatprep.subr.mxu0 0.0
    %3355 = vmatpush1.msra.mxu0 0.0
    %3356 = vmatprep.subr.mxu0 0.0
    %3357 = vmatpush1.msra.mxu0 0.0
    %3358 = vmatprep.subr.mxu0 0.0
    %3359 = vmatpush1.msra.mxu0 0.0
    %3360 = vmatprep.subr.mxu0 0.0
    %3361 = vmatpush1.msra.mxu0 0.0
    %3362 = vmatprep.subr.mxu0 0.0
    %3363 = vmatpush1.msra.mxu0 0.0
    %3364 = vmatprep.subr.mxu0 0.0
    %3365 = vmatpush1.msra.mxu0 0.0
    %3366 = vmatprep.mubr.f32.mxu0 0.0
    %3367 = vmatmul.mubr.f32.gmra.mrb[0].mxu0 %v2665
    %v3368 = vpop.f32.mrb[0].mxu0
    %v3369 = vadd.f32 0.0, %v3368
    %v3370 = vpop.f32.mrb[0].mxu0
    %3371 = vmatprep.mubr.f32.mxu0 0.0
    %3372 = vmatmul.mubr.f32.gmra.mrb[0].mxu0 %v2668
    %v3373 = vpop.f32.mrb[0].mxu0
    %v3374 = vadd.f32 0.0, %v3373
    %v3375 = vpop.f32.mrb[0].mxu0
    %3376 = vdwg.mxu0
    %3377 = vrot.lane.b32.xlu0 %v2660, 56
    %v3378 = vpop.permute.xlu0 %3377
    %3379 = vrot.lane.b32.xlu0 %v2661, 56
    %v3380 = vpop.permute.xlu0 %3379
    %3381 = vrot.lane.b32.xlu0 %v2662, 56
    %v3382 = vpop.permute.xlu0 %3381
    %3383 = vrot.lane.b32.xlu0 %v2663, 56
    %v3384 = vpop.permute.xlu0 %3383
    %3389 = vmatprep.subr.mxu0 0.0
    %3390 = vmatpush1.msra.mxu0 %v3378
    %3391 = vmatprep.subr.mxu0 0.0
    %3392 = vmatpush1.msra.mxu0 %v3380
    %3393 = vmatprep.subr.mxu0 0.0
    %3394 = vmatpush1.msra.mxu0 %v3382
    %3395 = vmatprep.subr.mxu0 0.0
    %3396 = vmatpush1.msra.mxu0 %v3384
    %3397 = vmatprep.subr.mxu0 0.0
    %3398 = vmatpush1.msra.mxu0 0.0
    %3399 = vmatprep.subr.mxu0 0.0
    %3400 = vmatpush1.msra.mxu0 0.0
    %3401 = vmatprep.subr.mxu0 0.0
    %3402 = vmatpush1.msra.mxu0 0.0
    %3403 = vmatprep.subr.mxu0 0.0
    %3404 = vmatpush1.msra.mxu0 0.0
    %3405 = vmatprep.subr.mxu0 0.0
    %3406 = vmatpush1.msra.mxu0 0.0
    %3407 = vmatprep.subr.mxu0 0.0
    %3408 = vmatpush1.msra.mxu0 0.0
    %3409 = vmatprep.subr.mxu0 0.0
    %3410 = vmatpush1.msra.mxu0 0.0
    %3411 = vmatprep.subr.mxu0 0.0
    %3412 = vmatpush1.msra.mxu0 0.0
    %3413 = vmatprep.subr.mxu0 0.0
    %3414 = vmatpush1.msra.mxu0 0.0
    %3415 = vmatprep.subr.mxu0 0.0
    %3416 = vmatpush1.msra.mxu0 0.0
    %3417 = vmatprep.subr.mxu0 0.0
    %3418 = vmatpush1.msra.mxu0 0.0
    %3419 = vmatprep.subr.mxu0 0.0
    %3420 = vmatpush1.msra.mxu0 0.0
    %3421 = vmatprep.subr.mxu0 0.0
    %3422 = vmatpush1.msra.mxu0 0.0
    %3423 = vmatprep.subr.mxu0 0.0
    %3424 = vmatpush1.msra.mxu0 0.0
    %3425 = vmatprep.subr.mxu0 0.0
    %3426 = vmatpush1.msra.mxu0 0.0
    %3427 = vmatprep.subr.mxu0 0.0
    %3428 = vmatpush1.msra.mxu0 0.0
    %3429 = vmatprep.subr.mxu0 0.0
    %3430 = vmatpush1.msra.mxu0 0.0
    %3431 = vmatprep.subr.mxu0 0.0
    %3432 = vmatpush1.msra.mxu0 0.0
    %3433 = vmatprep.subr.mxu0 0.0
    %3434 = vmatpush1.msra.mxu0 0.0
    %3435 = vmatprep.subr.mxu0 0.0
    %3436 = vmatpush1.msra.mxu0 0.0
    %3437 = vmatprep.subr.mxu0 0.0
    %3438 = vmatpush1.msra.mxu0 0.0
    %3439 = vmatprep.subr.mxu0 0.0
    %3440 = vmatpush1.msra.mxu0 0.0
    %3441 = vmatprep.subr.mxu0 0.0
    %3442 = vmatpush1.msra.mxu0 0.0
    %3443 = vmatprep.subr.mxu0 0.0
    %3444 = vmatpush1.msra.mxu0 0.0
    %3445 = vmatprep.subr.mxu0 0.0
    %3446 = vmatpush1.msra.mxu0 0.0
    %3447 = vmatprep.subr.mxu0 0.0
    %3448 = vmatpush1.msra.mxu0 0.0
    %3449 = vmatprep.subr.mxu0 0.0
    %3450 = vmatpush1.msra.mxu0 0.0
    %3451 = vmatprep.subr.mxu0 0.0
    %3452 = vmatpush1.msra.mxu0 0.0
    %3453 = vmatprep.mubr.f32.mxu0 0.0
    %3454 = vmatmul.mubr.f32.gmra.mrb[0].mxu0 %v2665
    %v3455 = vpop.f32.mrb[0].mxu0
    %v3456 = vadd.f32 0.0, %v3455
    %v3457 = vpop.f32.mrb[0].mxu0
    %3458 = vmatprep.mubr.f32.mxu0 0.0
    %3459 = vmatmul.mubr.f32.gmra.mrb[0].mxu0 %v2668
    %v3460 = vpop.f32.mrb[0].mxu0
    %v3461 = vadd.f32 0.0, %v3460
    %v3462 = vpop.f32.mrb[0].mxu0
    %3463 = vdwg.mxu0
    %v3465 = vsel %vm454, %v3282, 0
    %v3468 = vsel %vm454, %v3287, 0
    %v3471 = vsel %vm454, %v3369, 0
    %v3474 = vsel %vm454, %v3374, 0
    %3476 = vmatprep.subr.mxu0 0.0
    %3477 = vmatpush1.xpose.msra.mxu0 %v3471
    %3478 = vmatprep.subr.mxu0 0.0
    %3479 = vmatpush1.xpose.msra.mxu0 %v3474
    %3480 = vmatprep.subr.mxu0 0.0
    %3481 = vmatpush1.xpose.msra.mxu0 0.0
    %3482 = vmatprep.subr.mxu0 0.0
    %3483 = vmatpush1.xpose.msra.mxu0 0.0
    %3484 = vmatprep.subr.mxu0 0.0
    %3485 = vmatpush1.xpose.msra.mxu0 0.0
    %3486 = vmatprep.subr.mxu0 0.0
    %3487 = vmatpush1.xpose.msra.mxu0 0.0
    %3488 = vmatprep.subr.mxu0 0.0
    %3489 = vmatpush1.xpose.msra.mxu0 0.0
    %3490 = vmatprep.subr.mxu0 0.0
    %3491 = vmatpush1.xpose.msra.mxu0 0.0
    %3492 = vmatprep.subr.mxu0 0.0
    %3493 = vmatpush1.xpose.msra.mxu0 0.0
    %3494 = vmatprep.subr.mxu0 0.0
    %3495 = vmatpush1.xpose.msra.mxu0 0.0
    %3496 = vmatprep.subr.mxu0 0.0
    %3497 = vmatpush1.xpose.msra.mxu0 0.0
    %3498 = vmatprep.subr.mxu0 0.0
    %3499 = vmatpush1.xpose.msra.mxu0 0.0
    %3500 = vmatprep.subr.mxu0 0.0
    %3501 = vmatpush1.xpose.msra.mxu0 0.0
    %3502 = vmatprep.subr.mxu0 0.0
    %3503 = vmatpush1.xpose.msra.mxu0 0.0
    %3504 = vmatprep.subr.mxu0 0.0
    %3505 = vmatpush1.xpose.msra.mxu0 0.0
    %3506 = vmatprep.subr.mxu0 0.0
    %3507 = vmatpush1.xpose.msra.mxu0 0.0
    %3508 = vmatprep.subr.mxu0 0.0
    %3509 = vmatpush1.xpose.msra.mxu0 0.0
    %3510 = vmatprep.subr.mxu0 0.0
    %3511 = vmatpush1.xpose.msra.mxu0 0.0
    %3512 = vmatprep.subr.mxu0 0.0
    %3513 = vmatpush1.xpose.msra.mxu0 0.0
    %3514 = vmatprep.subr.mxu0 0.0
    %3515 = vmatpush1.xpose.msra.mxu0 0.0
    %3516 = vmatprep.subr.mxu0 0.0
    %3517 = vmatpush1.xpose.msra.mxu0 0.0
    %3518 = vmatprep.subr.mxu0 0.0
    %3519 = vmatpush1.xpose.msra.mxu0 0.0
    %3520 = vmatprep.subr.mxu0 0.0
    %3521 = vmatpush1.xpose.msra.mxu0 0.0
    %3522 = vmatprep.subr.mxu0 0.0
    %3523 = vmatpush1.xpose.msra.mxu0 0.0
    %3524 = vmatprep.subr.mxu0 0.0
    %3525 = vmatpush1.xpose.msra.mxu0 0.0
    %3526 = vmatprep.subr.mxu0 0.0
    %3527 = vmatpush1.xpose.msra.mxu0 0.0
    %3528 = vmatprep.subr.mxu0 0.0
    %3529 = vmatpush1.xpose.msra.mxu0 0.0
    %3530 = vmatprep.subr.mxu0 0.0
    %3531 = vmatpush1.xpose.msra.mxu0 0.0
    %3532 = vmatprep.subr.mxu0 0.0
    %3533 = vmatpush1.xpose.msra.mxu0 0.0
    %3534 = vmatprep.subr.mxu0 0.0
    %3535 = vmatpush1.xpose.msra.mxu0 0.0
    %3536 = vmatprep.subr.mxu0 0.0
    %3537 = vmatpush1.xpose.msra.mxu0 0.0
    %3538 = vmatprep.subr.mxu0 0.0
    %3539 = vmatpush1.xpose.msra.mxu0 0.0
    %3540 = vmatprep.mubr.f32.mxu0 0.0
    %3541 = vmatmul.mubr.f32.gmra.mrb[0].mxu0 %v3465
    %v3542 = vpop.f32.mrb[0].mxu0
    %v3543 = vadd.f32 %v142, %v3542
    %v3544 = vpop.f32.mrb[0].mxu0
    %3545 = vmatprep.mubr.f32.mxu0 0.0
    %3546 = vmatmul.mubr.f32.gmra.mrb[0].mxu0 %v3468
    %v3547 = vpop.f32.mrb[0].mxu0
    %v3548 = vadd.f32 %v143, %v3547
    %v3549 = vpop.f32.mrb[0].mxu0
    %3550 = vdwg.mxu0
    %v3551 = vsel %vm542, %v3543, -inf
    %3552 = vmax.xlane.f32.xlu0 %v3551
    %v3553 = vpop.xlane.xlu0 %3552
    %v3554 = vsel %vm546, %v3548, -inf
    %3555 = vmax.xlane.f32.xlu0 %v3554
    %v3556 = vpop.xlane.xlu0 %3555
    %v3557 = vsub.f32 %v3543, %v3553
    %v3558 = vsub.f32 %v3548, %v3556
    %v3559 = vmul.f32 %v3557, 1.442695
    %v3560 = vpow.pop %v3559
    %v3561 = vmul.f32 %v3558, 1.442695
    %v3562 = vpow.pop %v3561
    %v3563 = vsel %vm542, %v3560, 0.0
    %3564 = vadd.xlane.f32.xlu0 %v3563
    %v3565 = vpop.xlane.xlu0 %3564
    %v3566 = vsel %vm546, %v3562, 0.0
    %3567 = vadd.xlane.f32.xlu0 %v3566
    %v3568 = vpop.xlane.xlu0 %3567
    %v3569 = vrcp.pop %v3565
    %v3570 = vmul.f32 1.0, %v3569
    %v3571 = vrcp.pop %v3568
    %v3572 = vmul.f32 1.0, %v3571
    %v3573 = vmul.f32 %v3560, %v3570
    %v3574 = vmul.f32 %v3562, %v3572
    %v3576 = vsel %vm542, %v3573, 0
    %v3579 = vsel %vm542, %v3574, 0
    %v3582 = vsel %vm63, %v3461, 0
    %3584 = vmatprep.subr.mxu0 0.0
    %3585 = vmatpush1.msra.mxu0 %v3456
    %3586 = vmatprep.subr.mxu0 0.0
    %3587 = vmatpush1.msra.mxu0 %v3582
    %3588 = vmatprep.subr.mxu0 0.0
    %3589 = vmatpush1.msra.mxu0 0.0
    %3590 = vmatprep.subr.mxu0 0.0
    %3591 = vmatpush1.msra.mxu0 0.0
    %3592 = vmatprep.subr.mxu0 0.0
    %3593 = vmatpush1.msra.mxu0 0.0
    %3594 = vmatprep.subr.mxu0 0.0
    %3595 = vmatpush1.msra.mxu0 0.0
    %3596 = vmatprep.subr.mxu0 0.0
    %3597 = vmatpush1.msra.mxu0 0.0
    %3598 = vmatprep.subr.mxu0 0.0
    %3599 = vmatpush1.msra.mxu0 0.0
    %3600 = vmatprep.subr.mxu0 0.0
    %3601 = vmatpush1.msra.mxu0 0.0
    %3602 = vmatprep.subr.mxu0 0.0
    %3603 = vmatpush1.msra.mxu0 0.0
    %3604 = vmatprep.subr.mxu0 0.0
    %3605 = vmatpush1.msra.mxu0 0.0
    %3606 = vmatprep.subr.mxu0 0.0
    %3607 = vmatpush1.msra.mxu0 0.0
    %3608 = vmatprep.subr.mxu0 0.0
    %3609 = vmatpush1.msra.mxu0 0.0
    %3610 = vmatprep.subr.mxu0 0.0
    %3611 = vmatpush1.msra.mxu0 0.0
    %3612 = vmatprep.subr.mxu0 0.0
    %3613 = vmatpush1.msra.mxu0 0.0
    %3614 = vmatprep.subr.mxu0 0.0
    %3615 = vmatpush1.msra.mxu0 0.0
    %3616 = vmatprep.subr.mxu0 0.0
    %3617 = vmatpush1.msra.mxu0 0.0
    %3618 = vmatprep.subr.mxu0 0.0
    %3619 = vmatpush1.msra.mxu0 0.0
    %3620 = vmatprep.subr.mxu0 0.0
    %3621 = vmatpush1.msra.mxu0 0.0
    %3622 = vmatprep.subr.mxu0 0.0
    %3623 = vmatpush1.msra.mxu0 0.0
    %3624 = vmatprep.subr.mxu0 0.0
    %3625 = vmatpush1.msra.mxu0 0.0
    %3626 = vmatprep.subr.mxu0 0.0
    %3627 = vmatpush1.msra.mxu0 0.0
    %3628 = vmatprep.subr.mxu0 0.0
    %3629 = vmatpush1.msra.mxu0 0.0
    %3630 = vmatprep.subr.mxu0 0.0
    %3631 = vmatpush1.msra.mxu0 0.0
    %3632 = vmatprep.subr.mxu0 0.0
    %3633 = vmatpush1.msra.mxu0 0.0
    %3634 = vmatprep.subr.mxu0 0.0
    %3635 = vmatpush1.msra.mxu0 0.0
    %3636 = vmatprep.subr.mxu0 0.0
    %3637 = vmatpush1.msra.mxu0 0.0
    %3638 = vmatprep.subr.mxu0 0.0
    %3639 = vmatpush1.msra.mxu0 0.0
    %3640 = vmatprep.subr.mxu0 0.0
    %3641 = vmatpush1.msra.mxu0 0.0
    %3642 = vmatprep.subr.mxu0 0.0
    %3643 = vmatpush1.msra.mxu0 0.0
    %3644 = vmatprep.subr.mxu0 0.0
    %3645 = vmatpush1.msra.mxu0 0.0
    %3646 = vmatprep.subr.mxu0 0.0
    %3647 = vmatpush1.msra.mxu0 0.0
    %3648 = vmatprep.mubr.f32.mxu0 0.0
    %3649 = vmatmul.mubr.f32.gmra.mrb[0].mxu0 %v3576
    %v3650 = vpop.f32.mrb[0].mxu0
    %v3651 = vadd.f32 0.0, %v3650
    %v3652 = vpop.f32.mrb[0].mxu0
    %3653 = vmatprep.mubr.f32.mxu0 0.0
    %3654 = vmatmul.mubr.f32.gmra.mrb[0].mxu0 %v3579
    %v3655 = vpop.f32.mrb[0].mxu0
    %v3656 = vadd.f32 0.0, %v3655
    %v3657 = vpop.f32.mrb[0].mxu0
    %3658 = vdwg.mxu0
    %v3659 = vld [vmem:[%s3118 + $0x8] sm:$0xff]
    %v3661 = vsel %vm454, %v3651, 0
    %v3664 = vsel %vm454, %v3656, 0
    %3666 = vmatprep.subr.mxu0 0.0
    %3667 = vmatpush1.msra.mxu0 %v3659
    %3668 = vmatprep.subr.mxu0 0.0
    %3669 = vmatpush1.msra.mxu0 0.0
    %3670 = vmatprep.subr.mxu0 0.0
    %3671 = vmatpush1.msra.mxu0 0.0
    %3672 = vmatprep.subr.mxu0 0.0
    %3673 = vmatpush1.msra.mxu0 0.0
    %3674 = vmatprep.subr.mxu0 0.0
    %3675 = vmatpush1.msra.mxu0 0.0
    %3676 = vmatprep.subr.mxu0 0.0
    %3677 = vmatpush1.msra.mxu0 0.0
    %3678 = vmatprep.subr.mxu0 0.0
    %3679 = vmatpush1.msra.mxu0 0.0
    %3680 = vmatprep.subr.mxu0 0.0
    %3681 = vmatpush1.msra.mxu0 0.0
    %3682 = vmatprep.subr.mxu0 0.0
    %3683 = vmatpush1.msra.mxu0 0.0
    %3684 = vmatprep.subr.mxu0 0.0
    %3685 = vmatpush1.msra.mxu0 0.0
    %3686 = vmatprep.subr.mxu0 0.0
    %3687 = vmatpush1.msra.mxu0 0.0
    %3688 = vmatprep.subr.mxu0 0.0
    %3689 = vmatpush1.msra.mxu0 0.0
    %3690 = vmatprep.subr.mxu0 0.0
    %3691 = vmatpush1.msra.mxu0 0.0
    %3692 = vmatprep.subr.mxu0 0.0
    %3693 = vmatpush1.msra.mxu0 0.0
    %3694 = vmatprep.subr.mxu0 0.0
    %3695 = vmatpush1.msra.mxu0 0.0
    %3696 = vmatprep.subr.mxu0 0.0
    %3697 = vmatpush1.msra.mxu0 0.0
    %3698 = vmatprep.subr.mxu0 0.0
    %3699 = vmatpush1.msra.mxu0 0.0
    %3700 = vmatprep.subr.mxu0 0.0
    %3701 = vmatpush1.msra.mxu0 0.0
    %3702 = vmatprep.subr.mxu0 0.0
    %3703 = vmatpush1.msra.mxu0 0.0
    %3704 = vmatprep.subr.mxu0 0.0
    %3705 = vmatpush1.msra.mxu0 0.0
    %3706 = vmatprep.subr.mxu0 0.0
    %3707 = vmatpush1.msra.mxu0 0.0
    %3708 = vmatprep.subr.mxu0 0.0
    %3709 = vmatpush1.msra.mxu0 0.0
    %3710 = vmatprep.subr.mxu0 0.0
    %3711 = vmatpush1.msra.mxu0 0.0
    %3712 = vmatprep.subr.mxu0 0.0
    %3713 = vmatpush1.msra.mxu0 0.0
    %3714 = vmatprep.subr.mxu0 0.0
    %3715 = vmatpush1.msra.mxu0 0.0
    %3716 = vmatprep.subr.mxu0 0.0
    %3717 = vmatpush1.msra.mxu0 0.0
    %3718 = vmatprep.subr.mxu0 0.0
    %3719 = vmatpush1.msra.mxu0 0.0
    %3720 = vmatprep.subr.mxu0 0.0
    %3721 = vmatpush1.msra.mxu0 0.0
    %3722 = vmatprep.subr.mxu0 0.0
    %3723 = vmatpush1.msra.mxu0 0.0
    %3724 = vmatprep.subr.mxu0 0.0
    %3725 = vmatpush1.msra.mxu0 0.0
    %3726 = vmatprep.subr.mxu0 0.0
    %3727 = vmatpush1.msra.mxu0 0.0
    %3728 = vmatprep.subr.mxu0 0.0
    %3729 = vmatpush1.msra.mxu0 0.0
    %3730 = vmatprep.mubr.f32.mxu0 0.0
    %3731 = vmatmul.mubr.f32.gmra.mrb[0].mxu0 %v3661
    %v3732 = vpop.f32.mrb[0].mxu0
    %v3733 = vadd.f32 0.0, %v3732
    %v3734 = vpop.f32.mrb[0].mxu0
    %3735 = vmatprep.mubr.f32.mxu0 0.0
    %3736 = vmatmul.mubr.f32.gmra.mrb[0].mxu0 %v3664
    %v3737 = vpop.f32.mrb[0].mxu0
    %v3738 = vadd.f32 0.0, %v3737
    %v3739 = vpop.f32.mrb[0].mxu0
    %3740 = vdwg.mxu0
    %v3741 = vadd.f32 %v3201, %v3733
    %v3742 = vadd.f32 %v3202, %v3738
    %3743 = vrot.lane.b32.xlu0 %v2660, 112
    %v3744 = vpop.permute.xlu0 %3743
    %3745 = vrot.lane.b32.xlu0 %v2661, 112
    %v3746 = vpop.permute.xlu0 %3745
    %3747 = vrot.lane.b32.xlu0 %v2662, 112
    %v3748 = vpop.permute.xlu0 %3747
    %3749 = vrot.lane.b32.xlu0 %v2663, 112
    %v3750 = vpop.permute.xlu0 %3749
    %3755 = vmatprep.subr.mxu0 0.0
    %3756 = vmatpush1.msra.mxu0 %v3744
    %3757 = vmatprep.subr.mxu0 0.0
    %3758 = vmatpush1.msra.mxu0 %v3746
    %3759 = vmatprep.subr.mxu0 0.0
    %3760 = vmatpush1.msra.mxu0 %v3748
    %3761 = vmatprep.subr.mxu0 0.0
    %3762 = vmatpush1.msra.mxu0 %v3750
    %3763 = vmatprep.subr.mxu0 0.0
    %3764 = vmatpush1.msra.mxu0 0.0
    %3765 = vmatprep.subr.mxu0 0.0
    %3766 = vmatpush1.msra.mxu0 0.0
    %3767 = vmatprep.subr.mxu0 0.0
    %3768 = vmatpush1.msra.mxu0 0.0
    %3769 = vmatprep.subr.mxu0 0.0
    %3770 = vmatpush1.msra.mxu0 0.0
    %3771 = vmatprep.subr.mxu0 0.0
    %3772 = vmatpush1.msra.mxu0 0.0
    %3773 = vmatprep.subr.mxu0 0.0
    %3774 = vmatpush1.msra.mxu0 0.0
    %3775 = vmatprep.subr.mxu0 0.0
    %3776 = vmatpush1.msra.mxu0 0.0
    %3777 = vmatprep.subr.mxu0 0.0
    %3778 = vmatpush1.msra.mxu0 0.0
    %3779 = vmatprep.subr.mxu0 0.0
    %3780 = vmatpush1.msra.mxu0 0.0
    %3781 = vmatprep.subr.mxu0 0.0
    %3782 = vmatpush1.msra.mxu0 0.0
    %3783 = vmatprep.subr.mxu0 0.0
    %3784 = vmatpush1.msra.mxu0 0.0
    %3785 = vmatprep.subr.mxu0 0.0
    %3786 = vmatpush1.msra.mxu0 0.0
    %3787 = vmatprep.subr.mxu0 0.0
    %3788 = vmatpush1.msra.mxu0 0.0
    %3789 = vmatprep.subr.mxu0 0.0
    %3790 = vmatpush1.msra.mxu0 0.0
    %3791 = vmatprep.subr.mxu0 0.0
    %3792 = vmatpush1.msra.mxu0 0.0
    %3793 = vmatprep.subr.mxu0 0.0
    %3794 = vmatpush1.msra.mxu0 0.0
    %3795 = vmatprep.subr.mxu0 0.0
    %3796 = vmatpush1.msra.mxu0 0.0
    %3797 = vmatprep.subr.mxu0 0.0
    %3798 = vmatpush1.msra.mxu0 0.0
    %3799 = vmatprep.subr.mxu0 0.0
    %3800 = vmatpush1.msra.mxu0 0.0
    %3801 = vmatprep.subr.mxu0 0.0
    %3802 = vmatpush1.msra.mxu0 0.0
    %3803 = vmatprep.subr.mxu0 0.0
    %3804 = vmatpush1.msra.mxu0 0.0
    %3805 = vmatprep.subr.mxu0 0.0
    %3806 = vmatpush1.msra.mxu0 0.0
    %3807 = vmatprep.subr.mxu0 0.0
    %3808 = vmatpush1.msra.mxu0 0.0
    %3809 = vmatprep.subr.mxu0 0.0
    %3810 = vmatpush1.msra.mxu0 0.0
    %3811 = vmatprep.subr.mxu0 0.0
    %3812 = vmatpush1.msra.mxu0 0.0
    %3813 = vmatprep.subr.mxu0 0.0
    %3814 = vmatpush1.msra.mxu0 0.0
    %3815 = vmatprep.subr.mxu0 0.0
    %3816 = vmatpush1.msra.mxu0 0.0
    %3817 = vmatprep.subr.mxu0 0.0
    %3818 = vmatpush1.msra.mxu0 0.0
    %3819 = vmatprep.mubr.f32.mxu0 0.0
    %3820 = vmatmul.mubr.f32.gmra.mrb[0].mxu0 %v2665
    %v3821 = vpop.f32.mrb[0].mxu0
    %v3822 = vadd.f32 0.0, %v3821
    %v3823 = vpop.f32.mrb[0].mxu0
    %3824 = vmatprep.mubr.f32.mxu0 0.0
    %3825 = vmatmul.mubr.f32.gmra.mrb[0].mxu0 %v2668
    %v3826 = vpop.f32.mrb[0].mxu0
    %v3827 = vadd.f32 0.0, %v3826
    %v3828 = vpop.f32.mrb[0].mxu0
    %3829 = vdwg.mxu0
    %3830 = vrot.lane.b32.xlu0 %v2660, 80
    %v3831 = vpop.permute.xlu0 %3830
    %3832 = vrot.lane.b32.xlu0 %v2661, 80
    %v3833 = vpop.permute.xlu0 %3832
    %3834 = vrot.lane.b32.xlu0 %v2662, 80
    %v3835 = vpop.permute.xlu0 %3834
    %3836 = vrot.lane.b32.xlu0 %v2663, 80
    %v3837 = vpop.permute.xlu0 %3836
    %3842 = vmatprep.subr.mxu0 0.0
    %3843 = vmatpush1.msra.mxu0 %v3831
    %3844 = vmatprep.subr.mxu0 0.0
    %3845 = vmatpush1.msra.mxu0 %v3833
    %3846 = vmatprep.subr.mxu0 0.0
    %3847 = vmatpush1.msra.mxu0 %v3835
    %3848 = vmatprep.subr.mxu0 0.0
    %3849 = vmatpush1.msra.mxu0 %v3837
    %3850 = vmatprep.subr.mxu0 0.0
    %3851 = vmatpush1.msra.mxu0 0.0
    %3852 = vmatprep.subr.mxu0 0.0
    %3853 = vmatpush1.msra.mxu0 0.0
    %3854 = vmatprep.subr.mxu0 0.0
    %3855 = vmatpush1.msra.mxu0 0.0
    %3856 = vmatprep.subr.mxu0 0.0
    %3857 = vmatpush1.msra.mxu0 0.0
    %3858 = vmatprep.subr.mxu0 0.0
    %3859 = vmatpush1.msra.mxu0 0.0
    %3860 = vmatprep.subr.mxu0 0.0
    %3861 = vmatpush1.msra.mxu0 0.0
    %3862 = vmatprep.subr.mxu0 0.0
    %3863 = vmatpush1.msra.mxu0 0.0
    %3864 = vmatprep.subr.mxu0 0.0
    %3865 = vmatpush1.msra.mxu0 0.0
    %3866 = vmatprep.subr.mxu0 0.0
    %3867 = vmatpush1.msra.mxu0 0.0
    %3868 = vmatprep.subr.mxu0 0.0
    %3869 = vmatpush1.msra.mxu0 0.0
    %3870 = vmatprep.subr.mxu0 0.0
    %3871 = vmatpush1.msra.mxu0 0.0
    %3872 = vmatprep.subr.mxu0 0.0
    %3873 = vmatpush1.msra.mxu0 0.0
    %3874 = vmatprep.subr.mxu0 0.0
    %3875 = vmatpush1.msra.mxu0 0.0
    %3876 = vmatprep.subr.mxu0 0.0
    %3877 = vmatpush1.msra.mxu0 0.0
    %3878 = vmatprep.subr.mxu0 0.0
    %3879 = vmatpush1.msra.mxu0 0.0
    %3880 = vmatprep.subr.mxu0 0.0
    %3881 = vmatpush1.msra.mxu0 0.0
    %3882 = vmatprep.subr.mxu0 0.0
    %3883 = vmatpush1.msra.mxu0 0.0
    %3884 = vmatprep.subr.mxu0 0.0
    %3885 = vmatpush1.msra.mxu0 0.0
    %3886 = vmatprep.subr.mxu0 0.0
    %3887 = vmatpush1.msra.mxu0 0.0
    %3888 = vmatprep.subr.mxu0 0.0
    %3889 = vmatpush1.msra.mxu0 0.0
    %3890 = vmatprep.subr.mxu0 0.0
    %3891 = vmatpush1.msra.mxu0 0.0
    %3892 = vmatprep.subr.mxu0 0.0
    %3893 = vmatpush1.msra.mxu0 0.0
    %3894 = vmatprep.subr.mxu0 0.0
    %3895 = vmatpush1.msra.mxu0 0.0
    %3896 = vmatprep.subr.mxu0 0.0
    %3897 = vmatpush1.msra.mxu0 0.0
    %3898 = vmatprep.subr.mxu0 0.0
    %3899 = vmatpush1.msra.mxu0 0.0
    %3900 = vmatprep.subr.mxu0 0.0
    %3901 = vmatpush1.msra.mxu0 0.0
    %3902 = vmatprep.subr.mxu0 0.0
    %3903 = vmatpush1.msra.mxu0 0.0
    %3904 = vmatprep.subr.mxu0 0.0
    %3905 = vmatpush1.msra.mxu0 0.0
    %3906 = vmatprep.mubr.f32.mxu0 0.0
    %3907 = vmatmul.mubr.f32.gmra.mrb[0].mxu0 %v2665
    %v3908 = vpop.f32.mrb[0].mxu0
    %v3909 = vadd.f32 0.0, %v3908
    %v3910 = vpop.f32.mrb[0].mxu0
    %3911 = vmatprep.mubr.f32.mxu0 0.0
    %3912 = vmatmul.mubr.f32.gmra.mrb[0].mxu0 %v2668
    %v3913 = vpop.f32.mrb[0].mxu0
    %v3914 = vadd.f32 0.0, %v3913
    %v3915 = vpop.f32.mrb[0].mxu0
    %3916 = vdwg.mxu0
    %3917 = vrot.lane.b32.xlu0 %v2660, 48
    %v3918 = vpop.permute.xlu0 %3917
    %3919 = vrot.lane.b32.xlu0 %v2661, 48
    %v3920 = vpop.permute.xlu0 %3919
    %3921 = vrot.lane.b32.xlu0 %v2662, 48
    %v3922 = vpop.permute.xlu0 %3921
    %3923 = vrot.lane.b32.xlu0 %v2663, 48
    %v3924 = vpop.permute.xlu0 %3923
    %3929 = vmatprep.subr.mxu0 0.0
    %3930 = vmatpush1.msra.mxu0 %v3918
    %3931 = vmatprep.subr.mxu0 0.0
    %3932 = vmatpush1.msra.mxu0 %v3920
    %3933 = vmatprep.subr.mxu0 0.0
    %3934 = vmatpush1.msra.mxu0 %v3922
    %3935 = vmatprep.subr.mxu0 0.0
    %3936 = vmatpush1.msra.mxu0 %v3924
    %3937 = vmatprep.subr.mxu0 0.0
    %3938 = vmatpush1.msra.mxu0 0.0
    %3939 = vmatprep.subr.mxu0 0.0
    %3940 = vmatpush1.msra.mxu0 0.0
    %3941 = vmatprep.subr.mxu0 0.0
    %3942 = vmatpush1.msra.mxu0 0.0
    %3943 = vmatprep.subr.mxu0 0.0
    %3944 = vmatpush1.msra.mxu0 0.0
    %3945 = vmatprep.subr.mxu0 0.0
    %3946 = vmatpush1.msra.mxu0 0.0
    %3947 = vmatprep.subr.mxu0 0.0
    %3948 = vmatpush1.msra.mxu0 0.0
    %3949 = vmatprep.subr.mxu0 0.0
    %3950 = vmatpush1.msra.mxu0 0.0
    %3951 = vmatprep.subr.mxu0 0.0
    %3952 = vmatpush1.msra.mxu0 0.0
    %3953 = vmatprep.subr.mxu0 0.0
    %3954 = vmatpush1.msra.mxu0 0.0
    %3955 = vmatprep.subr.mxu0 0.0
    %3956 = vmatpush1.msra.mxu0 0.0
    %3957 = vmatprep.subr.mxu0 0.0
    %3958 = vmatpush1.msra.mxu0 0.0
    %3959 = vmatprep.subr.mxu0 0.0
    %3960 = vmatpush1.msra.mxu0 0.0
    %3961 = vmatprep.subr.mxu0 0.0
    %3962 = vmatpush1.msra.mxu0 0.0
    %3963 = vmatprep.subr.mxu0 0.0
    %3964 = vmatpush1.msra.mxu0 0.0
    %3965 = vmatprep.subr.mxu0 0.0
    %3966 = vmatpush1.msra.mxu0 0.0
    %3967 = vmatprep.subr.mxu0 0.0
    %3968 = vmatpush1.msra.mxu0 0.0
    %3969 = vmatprep.subr.mxu0 0.0
    %3970 = vmatpush1.msra.mxu0 0.0
    %3971 = vmatprep.subr.mxu0 0.0
    %3972 = vmatpush1.msra.mxu0 0.0
    %3973 = vmatprep.subr.mxu0 0.0
    %3974 = vmatpush1.msra.mxu0 0.0
    %3975 = vmatprep.subr.mxu0 0.0
    %3976 = vmatpush1.msra.mxu0 0.0
    %3977 = vmatprep.subr.mxu0 0.0
    %3978 = vmatpush1.msra.mxu0 0.0
    %3979 = vmatprep.subr.mxu0 0.0
    %3980 = vmatpush1.msra.mxu0 0.0
    %3981 = vmatprep.subr.mxu0 0.0
    %3982 = vmatpush1.msra.mxu0 0.0
    %3983 = vmatprep.subr.mxu0 0.0
    %3984 = vmatpush1.msra.mxu0 0.0
    %3985 = vmatprep.subr.mxu0 0.0
    %3986 = vmatpush1.msra.mxu0 0.0
    %3987 = vmatprep.subr.mxu0 0.0
    %3988 = vmatpush1.msra.mxu0 0.0
    %3989 = vmatprep.subr.mxu0 0.0
    %3990 = vmatpush1.msra.mxu0 0.0
    %3991 = vmatprep.subr.mxu0 0.0
    %3992 = vmatpush1.msra.mxu0 0.0
    %3993 = vmatprep.mubr.f32.mxu0 0.0
    %3994 = vmatmul.mubr.f32.gmra.mrb[0].mxu0 %v2665
    %v3995 = vpop.f32.mrb[0].mxu0
    %v3996 = vadd.f32 0.0, %v3995
    %v3997 = vpop.f32.mrb[0].mxu0
    %3998 = vmatprep.mubr.f32.mxu0 0.0
    %3999 = vmatmul.mubr.f32.gmra.mrb[0].mxu0 %v2668
    %v4000 = vpop.f32.mrb[0].mxu0
    %v4001 = vadd.f32 0.0, %v4000
    %v4002 = vpop.f32.mrb[0].mxu0
    %4003 = vdwg.mxu0
    %v4005 = vsel %vm454, %v3822, 0
    %v4008 = vsel %vm454, %v3827, 0
    %v4011 = vsel %vm454, %v3909, 0
    %v4014 = vsel %vm454, %v3914, 0
    %4016 = vmatprep.subr.mxu0 0.0
    %4017 = vmatpush1.xpose.msra.mxu0 %v4011
    %4018 = vmatprep.subr.mxu0 0.0
    %4019 = vmatpush1.xpose.msra.mxu0 %v4014
    %4020 = vmatprep.subr.mxu0 0.0
    %4021 = vmatpush1.xpose.msra.mxu0 0.0
    %4022 = vmatprep.subr.mxu0 0.0
    %4023 = vmatpush1.xpose.msra.mxu0 0.0
    %4024 = vmatprep.subr.mxu0 0.0
    %4025 = vmatpush1.xpose.msra.mxu0 0.0
    %4026 = vmatprep.subr.mxu0 0.0
    %4027 = vmatpush1.xpose.msra.mxu0 0.0
    %4028 = vmatprep.subr.mxu0 0.0
    %4029 = vmatpush1.xpose.msra.mxu0 0.0
    %4030 = vmatprep.subr.mxu0 0.0
    %4031 = vmatpush1.xpose.msra.mxu0 0.0
    %4032 = vmatprep.subr.mxu0 0.0
    %4033 = vmatpush1.xpose.msra.mxu0 0.0
    %4034 = vmatprep.subr.mxu0 0.0
    %4035 = vmatpush1.xpose.msra.mxu0 0.0
    %4036 = vmatprep.subr.mxu0 0.0
    %4037 = vmatpush1.xpose.msra.mxu0 0.0
    %4038 = vmatprep.subr.mxu0 0.0
    %4039 = vmatpush1.xpose.msra.mxu0 0.0
    %4040 = vmatprep.subr.mxu0 0.0
    %4041 = vmatpush1.xpose.msra.mxu0 0.0
    %4042 = vmatprep.subr.mxu0 0.0
    %4043 = vmatpush1.xpose.msra.mxu0 0.0
    %4044 = vmatprep.subr.mxu0 0.0
    %4045 = vmatpush1.xpose.msra.mxu0 0.0
    %4046 = vmatprep.subr.mxu0 0.0
    %4047 = vmatpush1.xpose.msra.mxu0 0.0
    %4048 = vmatprep.subr.mxu0 0.0
    %4049 = vmatpush1.xpose.msra.mxu0 0.0
    %4050 = vmatprep.subr.mxu0 0.0
    %4051 = vmatpush1.xpose.msra.mxu0 0.0
    %4052 = vmatprep.subr.mxu0 0.0
    %4053 = vmatpush1.xpose.msra.mxu0 0.0
    %4054 = vmatprep.subr.mxu0 0.0
    %4055 = vmatpush1.xpose.msra.mxu0 0.0
    %4056 = vmatprep.subr.mxu0 0.0
    %4057 = vmatpush1.xpose.msra.mxu0 0.0
    %4058 = vmatprep.subr.mxu0 0.0
    %4059 = vmatpush1.xpose.msra.mxu0 0.0
    %4060 = vmatprep.subr.mxu0 0.0
    %4061 = vmatpush1.xpose.msra.mxu0 0.0
    %4062 = vmatprep.subr.mxu0 0.0
    %4063 = vmatpush1.xpose.msra.mxu0 0.0
    %4064 = vmatprep.subr.mxu0 0.0
    %4065 = vmatpush1.xpose.msra.mxu0 0.0
    %4066 = vmatprep.subr.mxu0 0.0
    %4067 = vmatpush1.xpose.msra.mxu0 0.0
    %4068 = vmatprep.subr.mxu0 0.0
    %4069 = vmatpush1.xpose.msra.mxu0 0.0
    %4070 = vmatprep.subr.mxu0 0.0
    %4071 = vmatpush1.xpose.msra.mxu0 0.0
    %4072 = vmatprep.subr.mxu0 0.0
    %4073 = vmatpush1.xpose.msra.mxu0 0.0
    %4074 = vmatprep.subr.mxu0 0.0
    %4075 = vmatpush1.xpose.msra.mxu0 0.0
    %4076 = vmatprep.subr.mxu0 0.0
    %4077 = vmatpush1.xpose.msra.mxu0 0.0
    %4078 = vmatprep.subr.mxu0 0.0
    %4079 = vmatpush1.xpose.msra.mxu0 0.0
    %4080 = vmatprep.mubr.f32.mxu0 0.0
    %4081 = vmatmul.mubr.f32.gmra.mrb[0].mxu0 %v4005
    %v4082 = vpop.f32.mrb[0].mxu0
    %v4083 = vadd.f32 %v142, %v4082
    %v4084 = vpop.f32.mrb[0].mxu0
    %4085 = vmatprep.mubr.f32.mxu0 0.0
    %4086 = vmatmul.mubr.f32.gmra.mrb[0].mxu0 %v4008
    %v4087 = vpop.f32.mrb[0].mxu0
    %v4088 = vadd.f32 %v143, %v4087
    %v4089 = vpop.f32.mrb[0].mxu0
    %4090 = vdwg.mxu0
    %v4091 = vsel %vm542, %v4083, -inf
    %4092 = vmax.xlane.f32.xlu0 %v4091
    %v4093 = vpop.xlane.xlu0 %4092
    %v4094 = vsel %vm546, %v4088, -inf
    %4095 = vmax.xlane.f32.xlu0 %v4094
    %v4096 = vpop.xlane.xlu0 %4095
    %v4097 = vsub.f32 %v4083, %v4093
    %v4098 = vsub.f32 %v4088, %v4096
    %v4099 = vmul.f32 %v4097, 1.442695
    %v4100 = vpow.pop %v4099
    %v4101 = vmul.f32 %v4098, 1.442695
    %v4102 = vpow.pop %v4101
    %v4103 = vsel %vm542, %v4100, 0.0
    %4104 = vadd.xlane.f32.xlu0 %v4103
    %v4105 = vpop.xlane.xlu0 %4104
    %v4106 = vsel %vm546, %v4102, 0.0
    %4107 = vadd.xlane.f32.xlu0 %v4106
    %v4108 = vpop.xlane.xlu0 %4107
    %v4109 = vrcp.pop %v4105
    %v4110 = vmul.f32 1.0, %v4109
    %v4111 = vrcp.pop %v4108
    %v4112 = vmul.f32 1.0, %v4111
    %v4113 = vmul.f32 %v4100, %v4110
    %v4114 = vmul.f32 %v4102, %v4112
    %v4116 = vsel %vm542, %v4113, 0
    %v4119 = vsel %vm542, %v4114, 0
    %v4122 = vsel %vm63, %v4001, 0
    %4124 = vmatprep.subr.mxu0 0.0
    %4125 = vmatpush1.msra.mxu0 %v3996
    %4126 = vmatprep.subr.mxu0 0.0
    %4127 = vmatpush1.msra.mxu0 %v4122
    %4128 = vmatprep.subr.mxu0 0.0
    %4129 = vmatpush1.msra.mxu0 0.0
    %4130 = vmatprep.subr.mxu0 0.0
    %4131 = vmatpush1.msra.mxu0 0.0
    %4132 = vmatprep.subr.mxu0 0.0
    %4133 = vmatpush1.msra.mxu0 0.0
    %4134 = vmatprep.subr.mxu0 0.0
    %4135 = vmatpush1.msra.mxu0 0.0
    %4136 = vmatprep.subr.mxu0 0.0
    %4137 = vmatpush1.msra.mxu0 0.0
    %4138 = vmatprep.subr.mxu0 0.0
    %4139 = vmatpush1.msra.mxu0 0.0
    %4140 = vmatprep.subr.mxu0 0.0
    %4141 = vmatpush1.msra.mxu0 0.0
    %4142 = vmatprep.subr.mxu0 0.0
    %4143 = vmatpush1.msra.mxu0 0.0
    %4144 = vmatprep.subr.mxu0 0.0
    %4145 = vmatpush1.msra.mxu0 0.0
    %4146 = vmatprep.subr.mxu0 0.0
    %4147 = vmatpush1.msra.mxu0 0.0
    %4148 = vmatprep.subr.mxu0 0.0
    %4149 = vmatpush1.msra.mxu0 0.0
    %4150 = vmatprep.subr.mxu0 0.0
    %4151 = vmatpush1.msra.mxu0 0.0
    %4152 = vmatprep.subr.mxu0 0.0
    %4153 = vmatpush1.msra.mxu0 0.0
    %4154 = vmatprep.subr.mxu0 0.0
    %4155 = vmatpush1.msra.mxu0 0.0
    %4156 = vmatprep.subr.mxu0 0.0
    %4157 = vmatpush1.msra.mxu0 0.0
    %4158 = vmatprep.subr.mxu0 0.0
    %4159 = vmatpush1.msra.mxu0 0.0
    %4160 = vmatprep.subr.mxu0 0.0
    %4161 = vmatpush1.msra.mxu0 0.0
    %4162 = vmatprep.subr.mxu0 0.0
    %4163 = vmatpush1.msra.mxu0 0.0
    %4164 = vmatprep.subr.mxu0 0.0
    %4165 = vmatpush1.msra.mxu0 0.0
    %4166 = vmatprep.subr.mxu0 0.0
    %4167 = vmatpush1.msra.mxu0 0.0
    %4168 = vmatprep.subr.mxu0 0.0
    %4169 = vmatpush1.msra.mxu0 0.0
    %4170 = vmatprep.subr.mxu0 0.0
    %4171 = vmatpush1.msra.mxu0 0.0
    %4172 = vmatprep.subr.mxu0 0.0
    %4173 = vmatpush1.msra.mxu0 0.0
    %4174 = vmatprep.subr.mxu0 0.0
    %4175 = vmatpush1.msra.mxu0 0.0
    %4176 = vmatprep.subr.mxu0 0.0
    %4177 = vmatpush1.msra.mxu0 0.0
    %4178 = vmatprep.subr.mxu0 0.0
    %4179 = vmatpush1.msra.mxu0 0.0
    %4180 = vmatprep.subr.mxu0 0.0
    %4181 = vmatpush1.msra.mxu0 0.0
    %4182 = vmatprep.subr.mxu0 0.0
    %4183 = vmatpush1.msra.mxu0 0.0
    %4184 = vmatprep.subr.mxu0 0.0
    %4185 = vmatpush1.msra.mxu0 0.0
    %4186 = vmatprep.subr.mxu0 0.0
    %4187 = vmatpush1.msra.mxu0 0.0
    %4188 = vmatprep.mubr.f32.mxu0 0.0
    %4189 = vmatmul.mubr.f32.gmra.mrb[0].mxu0 %v4116
    %v4190 = vpop.f32.mrb[0].mxu0
    %v4191 = vadd.f32 0.0, %v4190
    %v4192 = vpop.f32.mrb[0].mxu0
    %4193 = vmatprep.mubr.f32.mxu0 0.0
    %4194 = vmatmul.mubr.f32.gmra.mrb[0].mxu0 %v4119
    %v4195 = vpop.f32.mrb[0].mxu0
    %v4196 = vadd.f32 0.0, %v4195
    %v4197 = vpop.f32.mrb[0].mxu0
    %4198 = vdwg.mxu0
    %v4199 = vld [vmem:[%s3118 + $0x10] sm:$0xff]
    %v4201 = vsel %vm454, %v4191, 0
    %v4204 = vsel %vm454, %v4196, 0
    %4206 = vmatprep.subr.mxu0 0.0
    %4207 = vmatpush1.msra.mxu0 %v4199
    %4208 = vmatprep.subr.mxu0 0.0
    %4209 = vmatpush1.msra.mxu0 0.0
    %4210 = vmatprep.subr.mxu0 0.0
    %4211 = vmatpush1.msra.mxu0 0.0
    %4212 = vmatprep.subr.mxu0 0.0
    %4213 = vmatpush1.msra.mxu0 0.0
    %4214 = vmatprep.subr.mxu0 0.0
    %4215 = vmatpush1.msra.mxu0 0.0
    %4216 = vmatprep.subr.mxu0 0.0
    %4217 = vmatpush1.msra.mxu0 0.0
    %4218 = vmatprep.subr.mxu0 0.0
    %4219 = vmatpush1.msra.mxu0 0.0
    %4220 = vmatprep.subr.mxu0 0.0
    %4221 = vmatpush1.msra.mxu0 0.0
    %4222 = vmatprep.subr.mxu0 0.0
    %4223 = vmatpush1.msra.mxu0 0.0
    %4224 = vmatprep.subr.mxu0 0.0
    %4225 = vmatpush1.msra.mxu0 0.0
    %4226 = vmatprep.subr.mxu0 0.0
    %4227 = vmatpush1.msra.mxu0 0.0
    %4228 = vmatprep.subr.mxu0 0.0
    %4229 = vmatpush1.msra.mxu0 0.0
    %4230 = vmatprep.subr.mxu0 0.0
    %4231 = vmatpush1.msra.mxu0 0.0
    %4232 = vmatprep.subr.mxu0 0.0
    %4233 = vmatpush1.msra.mxu0 0.0
    %4234 = vmatprep.subr.mxu0 0.0
    %4235 = vmatpush1.msra.mxu0 0.0
    %4236 = vmatprep.subr.mxu0 0.0
    %4237 = vmatpush1.msra.mxu0 0.0
    %4238 = vmatprep.subr.mxu0 0.0
    %4239 = vmatpush1.msra.mxu0 0.0
    %4240 = vmatprep.subr.mxu0 0.0
    %4241 = vmatpush1.msra.mxu0 0.0
    %4242 = vmatprep.subr.mxu0 0.0
    %4243 = vmatpush1.msra.mxu0 0.0
    %4244 = vmatprep.subr.mxu0 0.0
    %4245 = vmatpush1.msra.mxu0 0.0
    %4246 = vmatprep.subr.mxu0 0.0
    %4247 = vmatpush1.msra.mxu0 0.0
    %4248 = vmatprep.subr.mxu0 0.0
    %4249 = vmatpush1.msra.mxu0 0.0
    %4250 = vmatprep.subr.mxu0 0.0
    %4251 = vmatpush1.msra.mxu0 0.0
    %4252 = vmatprep.subr.mxu0 0.0
    %4253 = vmatpush1.msra.mxu0 0.0
    %4254 = vmatprep.subr.mxu0 0.0
    %4255 = vmatpush1.msra.mxu0 0.0
    %4256 = vmatprep.subr.mxu0 0.0
    %4257 = vmatpush1.msra.mxu0 0.0
    %4258 = vmatprep.subr.mxu0 0.0
    %4259 = vmatpush1.msra.mxu0 0.0
    %4260 = vmatprep.subr.mxu0 0.0
    %4261 = vmatpush1.msra.mxu0 0.0
    %4262 = vmatprep.subr.mxu0 0.0
    %4263 = vmatpush1.msra.mxu0 0.0
    %4264 = vmatprep.subr.mxu0 0.0
    %4265 = vmatpush1.msra.mxu0 0.0
    %4266 = vmatprep.subr.mxu0 0.0
    %4267 = vmatpush1.msra.mxu0 0.0
    %4268 = vmatprep.subr.mxu0 0.0
    %4269 = vmatpush1.msra.mxu0 0.0
    %4270 = vmatprep.mubr.f32.mxu0 0.0
    %4271 = vmatmul.mubr.f32.gmra.mrb[0].mxu0 %v4201
    %v4272 = vpop.f32.mrb[0].mxu0
    %v4273 = vadd.f32 0.0, %v4272
    %v4274 = vpop.f32.mrb[0].mxu0
    %4275 = vmatprep.mubr.f32.mxu0 0.0
    %4276 = vmatmul.mubr.f32.gmra.mrb[0].mxu0 %v4204
    %v4277 = vpop.f32.mrb[0].mxu0
    %v4278 = vadd.f32 0.0, %v4277
    %v4279 = vpop.f32.mrb[0].mxu0
    %4280 = vdwg.mxu0
    %v4281 = vadd.f32 %v3741, %v4273
    %v4282 = vadd.f32 %v3742, %v4278
    %4283 = vrot.lane.b32.xlu0 %v2660, 104
    %v4284 = vpop.permute.xlu0 %4283
    %4285 = vrot.lane.b32.xlu0 %v2661, 104
    %v4286 = vpop.permute.xlu0 %4285
    %4287 = vrot.lane.b32.xlu0 %v2662, 104
    %v4288 = vpop.permute.xlu0 %4287
    %4289 = vrot.lane.b32.xlu0 %v2663, 104
    %v4290 = vpop.permute.xlu0 %4289
    %4295 = vmatprep.subr.mxu0 0.0
    %4296 = vmatpush1.msra.mxu0 %v4284
    %4297 = vmatprep.subr.mxu0 0.0
    %4298 = vmatpush1.msra.mxu0 %v4286
    %4299 = vmatprep.subr.mxu0 0.0
    %4300 = vmatpush1.msra.mxu0 %v4288
    %4301 = vmatprep.subr.mxu0 0.0
    %4302 = vmatpush1.msra.mxu0 %v4290
    %4303 = vmatprep.subr.mxu0 0.0
    %4304 = vmatpush1.msra.mxu0 0.0
    %4305 = vmatprep.subr.mxu0 0.0
    %4306 = vmatpush1.msra.mxu0 0.0
    %4307 = vmatprep.subr.mxu0 0.0
    %4308 = vmatpush1.msra.mxu0 0.0
    %4309 = vmatprep.subr.mxu0 0.0
    %4310 = vmatpush1.msra.mxu0 0.0
    %4311 = vmatprep.subr.mxu0 0.0
    %4312 = vmatpush1.msra.mxu0 0.0
    %4313 = vmatprep.subr.mxu0 0.0
    %4314 = vmatpush1.msra.mxu0 0.0
    %4315 = vmatprep.subr.mxu0 0.0
    %4316 = vmatpush1.msra.mxu0 0.0
    %4317 = vmatprep.subr.mxu0 0.0
    %4318 = vmatpush1.msra.mxu0 0.0
    %4319 = vmatprep.subr.mxu0 0.0
    %4320 = vmatpush1.msra.mxu0 0.0
    %4321 = vmatprep.subr.mxu0 0.0
    %4322 = vmatpush1.msra.mxu0 0.0
    %4323 = vmatprep.subr.mxu0 0.0
    %4324 = vmatpush1.msra.mxu0 0.0
    %4325 = vmatprep.subr.mxu0 0.0
    %4326 = vmatpush1.msra.mxu0 0.0
    %4327 = vmatprep.subr.mxu0 0.0
    %4328 = vmatpush1.msra.mxu0 0.0
    %4329 = vmatprep.subr.mxu0 0.0
    %4330 = vmatpush1.msra.mxu0 0.0
    %4331 = vmatprep.subr.mxu0 0.0
    %4332 = vmatpush1.msra.mxu0 0.0
    %4333 = vmatprep.subr.mxu0 0.0
    %4334 = vmatpush1.msra.mxu0 0.0
    %4335 = vmatprep.subr.mxu0 0.0
    %4336 = vmatpush1.msra.mxu0 0.0
    %4337 = vmatprep.subr.mxu0 0.0
    %4338 = vmatpush1.msra.mxu0 0.0
    %4339 = vmatprep.subr.mxu0 0.0
    %4340 = vmatpush1.msra.mxu0 0.0
    %4341 = vmatprep.subr.mxu0 0.0
    %4342 = vmatpush1.msra.mxu0 0.0
    %4343 = vmatprep.subr.mxu0 0.0
    %4344 = vmatpush1.msra.mxu0 0.0
    %4345 = vmatprep.subr.mxu0 0.0
    %4346 = vmatpush1.msra.mxu0 0.0
    %4347 = vmatprep.subr.mxu0 0.0
    %4348 = vmatpush1.msra.mxu0 0.0
    %4349 = vmatprep.subr.mxu0 0.0
    %4350 = vmatpush1.msra.mxu0 0.0
    %4351 = vmatprep.subr.mxu0 0.0
    %4352 = vmatpush1.msra.mxu0 0.0
    %4353 = vmatprep.subr.mxu0 0.0
    %4354 = vmatpush1.msra.mxu0 0.0
    %4355 = vmatprep.subr.mxu0 0.0
    %4356 = vmatpush1.msra.mxu0 0.0
    %4357 = vmatprep.subr.mxu0 0.0
    %4358 = vmatpush1.msra.mxu0 0.0
    %4359 = vmatprep.mubr.f32.mxu0 0.0
    %4360 = vmatmul.mubr.f32.gmra.mrb[0].mxu0 %v2665
    %v4361 = vpop.f32.mrb[0].mxu0
    %v4362 = vadd.f32 0.0, %v4361
    %v4363 = vpop.f32.mrb[0].mxu0
    %4364 = vmatprep.mubr.f32.mxu0 0.0
    %4365 = vmatmul.mubr.f32.gmra.mrb[0].mxu0 %v2668
    %v4366 = vpop.f32.mrb[0].mxu0
    %v4367 = vadd.f32 0.0, %v4366
    %v4368 = vpop.f32.mrb[0].mxu0
    %4369 = vdwg.mxu0
    %4370 = vrot.lane.b32.xlu0 %v2660, 72
    %v4371 = vpop.permute.xlu0 %4370
    %4372 = vrot.lane.b32.xlu0 %v2661, 72
    %v4373 = vpop.permute.xlu0 %4372
    %4374 = vrot.lane.b32.xlu0 %v2662, 72
    %v4375 = vpop.permute.xlu0 %4374
    %4376 = vrot.lane.b32.xlu0 %v2663, 72
    %v4377 = vpop.permute.xlu0 %4376
    %4382 = vmatprep.subr.mxu0 0.0
    %4383 = vmatpush1.msra.mxu0 %v4371
    %4384 = vmatprep.subr.mxu0 0.0
    %4385 = vmatpush1.msra.mxu0 %v4373
    %4386 = vmatprep.subr.mxu0 0.0
    %4387 = vmatpush1.msra.mxu0 %v4375
    %4388 = vmatprep.subr.mxu0 0.0
    %4389 = vmatpush1.msra.mxu0 %v4377
    %4390 = vmatprep.subr.mxu0 0.0
    %4391 = vmatpush1.msra.mxu0 0.0
    %4392 = vmatprep.subr.mxu0 0.0
    %4393 = vmatpush1.msra.mxu0 0.0
    %4394 = vmatprep.subr.mxu0 0.0
    %4395 = vmatpush1.msra.mxu0 0.0
    %4396 = vmatprep.subr.mxu0 0.0
    %4397 = vmatpush1.msra.mxu0 0.0
    %4398 = vmatprep.subr.mxu0 0.0
    %4399 = vmatpush1.msra.mxu0 0.0
    %4400 = vmatprep.subr.mxu0 0.0
    %4401 = vmatpush1.msra.mxu0 0.0
    %4402 = vmatprep.subr.mxu0 0.0
    %4403 = vmatpush1.msra.mxu0 0.0
    %4404 = vmatprep.subr.mxu0 0.0
    %4405 = vmatpush1.msra.mxu0 0.0
    %4406 = vmatprep.subr.mxu0 0.0
    %4407 = vmatpush1.msra.mxu0 0.0
    %4408 = vmatprep.subr.mxu0 0.0
    %4409 = vmatpush1.msra.mxu0 0.0
    %4410 = vmatprep.subr.mxu0 0.0
    %4411 = vmatpush1.msra.mxu0 0.0
    %4412 = vmatprep.subr.mxu0 0.0
    %4413 = vmatpush1.msra.mxu0 0.0
    %4414 = vmatprep.subr.mxu0 0.0
    %4415 = vmatpush1.msra.mxu0 0.0
    %4416 = vmatprep.subr.mxu0 0.0
    %4417 = vmatpush1.msra.mxu0 0.0
    %4418 = vmatprep.subr.mxu0 0.0
    %4419 = vmatpush1.msra.mxu0 0.0
    %4420 = vmatprep.subr.mxu0 0.0
    %4421 = vmatpush1.msra.mxu0 0.0
    %4422 = vmatprep.subr.mxu0 0.0
    %4423 = vmatpush1.msra.mxu0 0.0
    %4424 = vmatprep.subr.mxu0 0.0
    %4425 = vmatpush1.msra.mxu0 0.0
    %4426 = vmatprep.subr.mxu0 0.0
    %4427 = vmatpush1.msra.mxu0 0.0
    %4428 = vmatprep.subr.mxu0 0.0
    %4429 = vmatpush1.msra.mxu0 0.0
    %4430 = vmatprep.subr.mxu0 0.0
    %4431 = vmatpush1.msra.mxu0 0.0
    %4432 = vmatprep.subr.mxu0 0.0
    %4433 = vmatpush1.msra.mxu0 0.0
    %4434 = vmatprep.subr.mxu0 0.0
    %4435 = vmatpush1.msra.mxu0 0.0
    %4436 = vmatprep.subr.mxu0 0.0
    %4437 = vmatpush1.msra.mxu0 0.0
    %4438 = vmatprep.subr.mxu0 0.0
    %4439 = vmatpush1.msra.mxu0 0.0
    %4440 = vmatprep.subr.mxu0 0.0
    %4441 = vmatpush1.msra.mxu0 0.0
    %4442 = vmatprep.subr.mxu0 0.0
    %4443 = vmatpush1.msra.mxu0 0.0
    %4444 = vmatprep.subr.mxu0 0.0
    %4445 = vmatpush1.msra.mxu0 0.0
    %4446 = vmatprep.mubr.f32.mxu0 0.0
    %4447 = vmatmul.mubr.f32.gmra.mrb[0].mxu0 %v2665
    %v4448 = vpop.f32.mrb[0].mxu0
    %v4449 = vadd.f32 0.0, %v4448
    %v4450 = vpop.f32.mrb[0].mxu0
    %4451 = vmatprep.mubr.f32.mxu0 0.0
    %4452 = vmatmul.mubr.f32.gmra.mrb[0].mxu0 %v2668
    %v4453 = vpop.f32.mrb[0].mxu0
    %v4454 = vadd.f32 0.0, %v4453
    %v4455 = vpop.f32.mrb[0].mxu0
    %4456 = vdwg.mxu0
    %4457 = vrot.lane.b32.xlu0 %v2660, 40
    %v4458 = vpop.permute.xlu0 %4457
    %4459 = vrot.lane.b32.xlu0 %v2661, 40
    %v4460 = vpop.permute.xlu0 %4459
    %4461 = vrot.lane.b32.xlu0 %v2662, 40
    %v4462 = vpop.permute.xlu0 %4461
    %4463 = vrot.lane.b32.xlu0 %v2663, 40
    %v4464 = vpop.permute.xlu0 %4463
    %4469 = vmatprep.subr.mxu0 0.0
    %4470 = vmatpush1.msra.mxu0 %v4458
    %4471 = vmatprep.subr.mxu0 0.0
    %4472 = vmatpush1.msra.mxu0 %v4460
    %4473 = vmatprep.subr.mxu0 0.0
    %4474 = vmatpush1.msra.mxu0 %v4462
    %4475 = vmatprep.subr.mxu0 0.0
    %4476 = vmatpush1.msra.mxu0 %v4464
    %4477 = vmatprep.subr.mxu0 0.0
    %4478 = vmatpush1.msra.mxu0 0.0
    %4479 = vmatprep.subr.mxu0 0.0
    %4480 = vmatpush1.msra.mxu0 0.0
    %4481 = vmatprep.subr.mxu0 0.0
    %4482 = vmatpush1.msra.mxu0 0.0
    %4483 = vmatprep.subr.mxu0 0.0
    %4484 = vmatpush1.msra.mxu0 0.0
    %4485 = vmatprep.subr.mxu0 0.0
    %4486 = vmatpush1.msra.mxu0 0.0
    %4487 = vmatprep.subr.mxu0 0.0
    %4488 = vmatpush1.msra.mxu0 0.0
    %4489 = vmatprep.subr.mxu0 0.0
    %4490 = vmatpush1.msra.mxu0 0.0
    %4491 = vmatprep.subr.mxu0 0.0
    %4492 = vmatpush1.msra.mxu0 0.0
    %4493 = vmatprep.subr.mxu0 0.0
    %4494 = vmatpush1.msra.mxu0 0.0
    %4495 = vmatprep.subr.mxu0 0.0
    %4496 = vmatpush1.msra.mxu0 0.0
    %4497 = vmatprep.subr.mxu0 0.0
    %4498 = vmatpush1.msra.mxu0 0.0
    %4499 = vmatprep.subr.mxu0 0.0
    %4500 = vmatpush1.msra.mxu0 0.0
    %4501 = vmatprep.subr.mxu0 0.0
    %4502 = vmatpush1.msra.mxu0 0.0
    %4503 = vmatprep.subr.mxu0 0.0
    %4504 = vmatpush1.msra.mxu0 0.0
    %4505 = vmatprep.subr.mxu0 0.0
    %4506 = vmatpush1.msra.mxu0 0.0
    %4507 = vmatprep.subr.mxu0 0.0
    %4508 = vmatpush1.msra.mxu0 0.0
    %4509 = vmatprep.subr.mxu0 0.0
    %4510 = vmatpush1.msra.mxu0 0.0
    %4511 = vmatprep.subr.mxu0 0.0
    %4512 = vmatpush1.msra.mxu0 0.0
    %4513 = vmatprep.subr.mxu0 0.0
    %4514 = vmatpush1.msra.mxu0 0.0
    %4515 = vmatprep.subr.mxu0 0.0
    %4516 = vmatpush1.msra.mxu0 0.0
    %4517 = vmatprep.subr.mxu0 0.0
    %4518 = vmatpush1.msra.mxu0 0.0
    %4519 = vmatprep.subr.mxu0 0.0
    %4520 = vmatpush1.msra.mxu0 0.0
    %4521 = vmatprep.subr.mxu0 0.0
    %4522 = vmatpush1.msra.mxu0 0.0
    %4523 = vmatprep.subr.mxu0 0.0
    %4524 = vmatpush1.msra.mxu0 0.0
    %4525 = vmatprep.subr.mxu0 0.0
    %4526 = vmatpush1.msra.mxu0 0.0
    %4527 = vmatprep.subr.mxu0 0.0
    %4528 = vmatpush1.msra.mxu0 0.0
    %4529 = vmatprep.subr.mxu0 0.0
    %4530 = vmatpush1.msra.mxu0 0.0
    %4531 = vmatprep.subr.mxu0 0.0
    %4532 = vmatpush1.msra.mxu0 0.0
    %4533 = vmatprep.mubr.f32.mxu0 0.0
    %4534 = vmatmul.mubr.f32.gmra.mrb[0].mxu0 %v2665
    %v4535 = vpop.f32.mrb[0].mxu0
    %v4536 = vadd.f32 0.0, %v4535
    %v4537 = vpop.f32.mrb[0].mxu0
    %4538 = vmatprep.mubr.f32.mxu0 0.0
    %4539 = vmatmul.mubr.f32.gmra.mrb[0].mxu0 %v2668
    %v4540 = vpop.f32.mrb[0].mxu0
    %v4541 = vadd.f32 0.0, %v4540
    %v4542 = vpop.f32.mrb[0].mxu0
    %4543 = vdwg.mxu0
    %v4545 = vsel %vm454, %v4362, 0
    %v4548 = vsel %vm454, %v4367, 0
    %v4551 = vsel %vm454, %v4449, 0
    %v4554 = vsel %vm454, %v4454, 0
    %4556 = vmatprep.subr.mxu0 0.0
    %4557 = vmatpush1.xpose.msra.mxu0 %v4551
    %4558 = vmatprep.subr.mxu0 0.0
    %4559 = vmatpush1.xpose.msra.mxu0 %v4554
    %4560 = vmatprep.subr.mxu0 0.0
    %4561 = vmatpush1.xpose.msra.mxu0 0.0
    %4562 = vmatprep.subr.mxu0 0.0
    %4563 = vmatpush1.xpose.msra.mxu0 0.0
    %4564 = vmatprep.subr.mxu0 0.0
    %4565 = vmatpush1.xpose.msra.mxu0 0.0
    %4566 = vmatprep.subr.mxu0 0.0
    %4567 = vmatpush1.xpose.msra.mxu0 0.0
    %4568 = vmatprep.subr.mxu0 0.0
    %4569 = vmatpush1.xpose.msra.mxu0 0.0
    %4570 = vmatprep.subr.mxu0 0.0
    %4571 = vmatpush1.xpose.msra.mxu0 0.0
    %4572 = vmatprep.subr.mxu0 0.0
    %4573 = vmatpush1.xpose.msra.mxu0 0.0
    %4574 = vmatprep.subr.mxu0 0.0
    %4575 = vmatpush1.xpose.msra.mxu0 0.0
    %4576 = vmatprep.subr.mxu0 0.0
    %4577 = vmatpush1.xpose.msra.mxu0 0.0
    %4578 = vmatprep.subr.mxu0 0.0
    %4579 = vmatpush1.xpose.msra.mxu0 0.0
    %4580 = vmatprep.subr.mxu0 0.0
    %4581 = vmatpush1.xpose.msra.mxu0 0.0
    %4582 = vmatprep.subr.mxu0 0.0
    %4583 = vmatpush1.xpose.msra.mxu0 0.0
    %4584 = vmatprep.subr.mxu0 0.0
    %4585 = vmatpush1.xpose.msra.mxu0 0.0
    %4586 = vmatprep.subr.mxu0 0.0
    %4587 = vmatpush1.xpose.msra.mxu0 0.0
    %4588 = vmatprep.subr.mxu0 0.0
    %4589 = vmatpush1.xpose.msra.mxu0 0.0
    %4590 = vmatprep.subr.mxu0 0.0
    %4591 = vmatpush1.xpose.msra.mxu0 0.0
    %4592 = vmatprep.subr.mxu0 0.0
    %4593 = vmatpush1.xpose.msra.mxu0 0.0
    %4594 = vmatprep.subr.mxu0 0.0
    %4595 = vmatpush1.xpose.msra.mxu0 0.0
    %4596 = vmatprep.subr.mxu0 0.0
    %4597 = vmatpush1.xpose.msra.mxu0 0.0
    %4598 = vmatprep.subr.mxu0 0.0
    %4599 = vmatpush1.xpose.msra.mxu0 0.0
    %4600 = vmatprep.subr.mxu0 0.0
    %4601 = vmatpush1.xpose.msra.mxu0 0.0
    %4602 = vmatprep.subr.mxu0 0.0
    %4603 = vmatpush1.xpose.msra.mxu0 0.0
    %4604 = vmatprep.subr.mxu0 0.0
    %4605 = vmatpush1.xpose.msra.mxu0 0.0
    %4606 = vmatprep.subr.mxu0 0.0
    %4607 = vmatpush1.xpose.msra.mxu0 0.0
    %4608 = vmatprep.subr.mxu0 0.0
    %4609 = vmatpush1.xpose.msra.mxu0 0.0
    %4610 = vmatprep.subr.mxu0 0.0
    %4611 = vmatpush1.xpose.msra.mxu0 0.0
    %4612 = vmatprep.subr.mxu0 0.0
    %4613 = vmatpush1.xpose.msra.mxu0 0.0
    %4614 = vmatprep.subr.mxu0 0.0
    %4615 = vmatpush1.xpose.msra.mxu0 0.0
    %4616 = vmatprep.subr.mxu0 0.0
    %4617 = vmatpush1.xpose.msra.mxu0 0.0
    %4618 = vmatprep.subr.mxu0 0.0
    %4619 = vmatpush1.xpose.msra.mxu0 0.0
    %4620 = vmatprep.mubr.f32.mxu0 0.0
    %4621 = vmatmul.mubr.f32.gmra.mrb[0].mxu0 %v4545
    %v4622 = vpop.f32.mrb[0].mxu0
    %v4623 = vadd.f32 %v142, %v4622
    %v4624 = vpop.f32.mrb[0].mxu0
    %4625 = vmatprep.mubr.f32.mxu0 0.0
    %4626 = vmatmul.mubr.f32.gmra.mrb[0].mxu0 %v4548
    %v4627 = vpop.f32.mrb[0].mxu0
    %v4628 = vadd.f32 %v143, %v4627
    %v4629 = vpop.f32.mrb[0].mxu0
    %4630 = vdwg.mxu0
    %v4631 = vsel %vm542, %v4623, -inf
    %4632 = vmax.xlane.f32.xlu0 %v4631
    %v4633 = vpop.xlane.xlu0 %4632
    %v4634 = vsel %vm546, %v4628, -inf
    %4635 = vmax.xlane.f32.xlu0 %v4634
    %v4636 = vpop.xlane.xlu0 %4635
    %v4637 = vsub.f32 %v4623, %v4633
    %v4638 = vsub.f32 %v4628, %v4636
    %v4639 = vmul.f32 %v4637, 1.442695
    %v4640 = vpow.pop %v4639
    %v4641 = vmul.f32 %v4638, 1.442695
    %v4642 = vpow.pop %v4641
    %v4643 = vsel %vm542, %v4640, 0.0
    %4644 = vadd.xlane.f32.xlu0 %v4643
    %v4645 = vpop.xlane.xlu0 %4644
    %v4646 = vsel %vm546, %v4642, 0.0
    %4647 = vadd.xlane.f32.xlu0 %v4646
    %v4648 = vpop.xlane.xlu0 %4647
    %v4649 = vrcp.pop %v4645
    %v4650 = vmul.f32 1.0, %v4649
    %v4651 = vrcp.pop %v4648
    %v4652 = vmul.f32 1.0, %v4651
    %v4653 = vmul.f32 %v4640, %v4650
    %v4654 = vmul.f32 %v4642, %v4652
    %v4656 = vsel %vm542, %v4653, 0
    %v4659 = vsel %vm542, %v4654, 0
    %v4662 = vsel %vm63, %v4541, 0
    %4664 = vmatprep.subr.mxu0 0.0
    %4665 = vmatpush1.msra.mxu0 %v4536
    %4666 = vmatprep.subr.mxu0 0.0
    %4667 = vmatpush1.msra.mxu0 %v4662
    %4668 = vmatprep.subr.mxu0 0.0
    %4669 = vmatpush1.msra.mxu0 0.0
    %4670 = vmatprep.subr.mxu0 0.0
    %4671 = vmatpush1.msra.mxu0 0.0
    %4672 = vmatprep.subr.mxu0 0.0
    %4673 = vmatpush1.msra.mxu0 0.0
    %4674 = vmatprep.subr.mxu0 0.0
    %4675 = vmatpush1.msra.mxu0 0.0
    %4676 = vmatprep.subr.mxu0 0.0
    %4677 = vmatpush1.msra.mxu0 0.0
    %4678 = vmatprep.subr.mxu0 0.0
    %4679 = vmatpush1.msra.mxu0 0.0
    %4680 = vmatprep.subr.mxu0 0.0
    %4681 = vmatpush1.msra.mxu0 0.0
    %4682 = vmatprep.subr.mxu0 0.0
    %4683 = vmatpush1.msra.mxu0 0.0
    %4684 = vmatprep.subr.mxu0 0.0
    %4685 = vmatpush1.msra.mxu0 0.0
    %4686 = vmatprep.subr.mxu0 0.0
    %4687 = vmatpush1.msra.mxu0 0.0
    %4688 = vmatprep.subr.mxu0 0.0
    %4689 = vmatpush1.msra.mxu0 0.0
    %4690 = vmatprep.subr.mxu0 0.0
    %4691 = vmatpush1.msra.mxu0 0.0
    %4692 = vmatprep.subr.mxu0 0.0
    %4693 = vmatpush1.msra.mxu0 0.0
    %4694 = vmatprep.subr.mxu0 0.0
    %4695 = vmatpush1.msra.mxu0 0.0
    %4696 = vmatprep.subr.mxu0 0.0
    %4697 = vmatpush1.msra.mxu0 0.0
    %4698 = vmatprep.subr.mxu0 0.0
    %4699 = vmatpush1.msra.mxu0 0.0
    %4700 = vmatprep.subr.mxu0 0.0
    %4701 = vmatpush1.msra.mxu0 0.0
    %4702 = vmatprep.subr.mxu0 0.0
    %4703 = vmatpush1.msra.mxu0 0.0
    %4704 = vmatprep.subr.mxu0 0.0
    %4705 = vmatpush1.msra.mxu0 0.0
    %4706 = vmatprep.subr.mxu0 0.0
    %4707 = vmatpush1.msra.mxu0 0.0
    %4708 = vmatprep.subr.mxu0 0.0
    %4709 = vmatpush1.msra.mxu0 0.0
    %4710 = vmatprep.subr.mxu0 0.0
    %4711 = vmatpush1.msra.mxu0 0.0
    %4712 = vmatprep.subr.mxu0 0.0
    %4713 = vmatpush1.msra.mxu0 0.0
    %4714 = vmatprep.subr.mxu0 0.0
    %4715 = vmatpush1.msra.mxu0 0.0
    %4716 = vmatprep.subr.mxu0 0.0
    %4717 = vmatpush1.msra.mxu0 0.0
    %4718 = vmatprep.subr.mxu0 0.0
    %4719 = vmatpush1.msra.mxu0 0.0
    %4720 = vmatprep.subr.mxu0 0.0
    %4721 = vmatpush1.msra.mxu0 0.0
    %4722 = vmatprep.subr.mxu0 0.0
    %4723 = vmatpush1.msra.mxu0 0.0
    %4724 = vmatprep.subr.mxu0 0.0
    %4725 = vmatpush1.msra.mxu0 0.0
    %4726 = vmatprep.subr.mxu0 0.0
    %4727 = vmatpush1.msra.mxu0 0.0
    %4728 = vmatprep.mubr.f32.mxu0 0.0
    %4729 = vmatmul.mubr.f32.gmra.mrb[0].mxu0 %v4656
    %v4730 = vpop.f32.mrb[0].mxu0
    %v4731 = vadd.f32 0.0, %v4730
    %v4732 = vpop.f32.mrb[0].mxu0
    %4733 = vmatprep.mubr.f32.mxu0 0.0
    %4734 = vmatmul.mubr.f32.gmra.mrb[0].mxu0 %v4659
    %v4735 = vpop.f32.mrb[0].mxu0
    %v4736 = vadd.f32 0.0, %v4735
    %v4737 = vpop.f32.mrb[0].mxu0
    %4738 = vdwg.mxu0
    %v4739 = vld [vmem:[%s3118 + $0x18] sm:$0xff]
    %v4741 = vsel %vm454, %v4731, 0
    %v4744 = vsel %vm454, %v4736, 0
    %4746 = vmatprep.subr.mxu0 0.0
    %4747 = vmatpush1.msra.mxu0 %v4739
    %4748 = vmatprep.subr.mxu0 0.0
    %4749 = vmatpush1.msra.mxu0 0.0
    %4750 = vmatprep.subr.mxu0 0.0
    %4751 = vmatpush1.msra.mxu0 0.0
    %4752 = vmatprep.subr.mxu0 0.0
    %4753 = vmatpush1.msra.mxu0 0.0
    %4754 = vmatprep.subr.mxu0 0.0
    %4755 = vmatpush1.msra.mxu0 0.0
    %4756 = vmatprep.subr.mxu0 0.0
    %4757 = vmatpush1.msra.mxu0 0.0
    %4758 = vmatprep.subr.mxu0 0.0
    %4759 = vmatpush1.msra.mxu0 0.0
    %4760 = vmatprep.subr.mxu0 0.0
    %4761 = vmatpush1.msra.mxu0 0.0
    %4762 = vmatprep.subr.mxu0 0.0
    %4763 = vmatpush1.msra.mxu0 0.0
    %4764 = vmatprep.subr.mxu0 0.0
    %4765 = vmatpush1.msra.mxu0 0.0
    %4766 = vmatprep.subr.mxu0 0.0
    %4767 = vmatpush1.msra.mxu0 0.0
    %4768 = vmatprep.subr.mxu0 0.0
    %4769 = vmatpush1.msra.mxu0 0.0
    %4770 = vmatprep.subr.mxu0 0.0
    %4771 = vmatpush1.msra.mxu0 0.0
    %4772 = vmatprep.subr.mxu0 0.0
    %4773 = vmatpush1.msra.mxu0 0.0
    %4774 = vmatprep.subr.mxu0 0.0
    %4775 = vmatpush1.msra.mxu0 0.0
    %4776 = vmatprep.subr.mxu0 0.0
    %4777 = vmatpush1.msra.mxu0 0.0
    %4778 = vmatprep.subr.mxu0 0.0
    %4779 = vmatpush1.msra.mxu0 0.0
    %4780 = vmatprep.subr.mxu0 0.0
    %4781 = vmatpush1.msra.mxu0 0.0
    %4782 = vmatprep.subr.mxu0 0.0
    %4783 = vmatpush1.msra.mxu0 0.0
    %4784 = vmatprep.subr.mxu0 0.0
    %4785 = vmatpush1.msra.mxu0 0.0
    %4786 = vmatprep.subr.mxu0 0.0
    %4787 = vmatpush1.msra.mxu0 0.0
    %4788 = vmatprep.subr.mxu0 0.0
    %4789 = vmatpush1.msra.mxu0 0.0
    %4790 = vmatprep.subr.mxu0 0.0
    %4791 = vmatpush1.msra.mxu0 0.0
    %4792 = vmatprep.subr.mxu0 0.0
    %4793 = vmatpush1.msra.mxu0 0.0
    %4794 = vmatprep.subr.mxu0 0.0
    %4795 = vmatpush1.msra.mxu0 0.0
    %4796 = vmatprep.subr.mxu0 0.0
    %4797 = vmatpush1.msra.mxu0 0.0
    %4798 = vmatprep.subr.mxu0 0.0
    %4799 = vmatpush1.msra.mxu0 0.0
    %4800 = vmatprep.subr.mxu0 0.0
    %4801 = vmatpush1.msra.mxu0 0.0
    %4802 = vmatprep.subr.mxu0 0.0
    %4803 = vmatpush1.msra.mxu0 0.0
    %4804 = vmatprep.subr.mxu0 0.0
    %4805 = vmatpush1.msra.mxu0 0.0
    %4806 = vmatprep.subr.mxu0 0.0
    %4807 = vmatpush1.msra.mxu0 0.0
    %4808 = vmatprep.subr.mxu0 0.0
    %4809 = vmatpush1.msra.mxu0 0.0
    %4810 = vmatprep.mubr.f32.mxu0 0.0
    %4811 = vmatmul.mubr.f32.gmra.mrb[0].mxu0 %v4741
    %v4812 = vpop.f32.mrb[0].mxu0
    %v4813 = vadd.f32 0.0, %v4812
    %v4814 = vpop.f32.mrb[0].mxu0
    %4815 = vmatprep.mubr.f32.mxu0 0.0
    %4816 = vmatmul.mubr.f32.gmra.mrb[0].mxu0 %v4744
    %v4817 = vpop.f32.mrb[0].mxu0
    %v4818 = vadd.f32 0.0, %v4817
    %v4819 = vpop.f32.mrb[0].mxu0
    %4820 = vdwg.mxu0
    %v4821 = vadd.f32 %v4281, %v4813
    %v4822 = vadd.f32 %v4282, %v4818
    %s4823 = scalar_lea.vmem %s8, 1
    %v4824 = vld [vmem:[%s4823] sm:$0x1]
    %v4826 = vlaneseq
    %v4827 = vshrl.u32 %v4826, 7
    %v4828 = vsub.s32 0, %v4827
    %v4829 = vrot.slane %v4824, %v4828
    %v4831 = vadd.f32 %v4821, %v4829
    %v4832 = vadd.f32 %v4822, %v4829
    %s4833 = scalar_lea.vmem %s9, 1
    %v4834 = vld [vmem:[%s4833] sm:$0x1]
    %s4835 = scalar_lea.vmem %s10, 1
    %v4836 = vld [vmem:[%s4835] sm:$0x1]
    %v4837 = vsel %vm146, %v4831, 0.0
    %4838 = vadd.xlane.f32.xlu0 %v4837
    %v4839 = vpop.xlane.xlu0 %4838
    %v4840 = vsel %vm150, %v4832, 0.0
    %4841 = vadd.xlane.f32.xlu0 %v4840
    %v4842 = vpop.xlane.xlu0 %4841
    %v4843 = vmul.f32 %v4839, %v154
    %v4844 = vmul.f32 %v4842, %v154
    %v4845 = vsub.f32 %v4831, %v4843
    %v4846 = vsub.f32 %v4832, %v4844
    %v4847 = vmul.f32 %v4845, %v4845
    %v4848 = vmul.f32 %v4846, %v4846
    %v4849 = vsel %vm146, %v4847, 0.0
    %4850 = vadd.xlane.f32.xlu0 %v4849
    %v4851 = vpop.xlane.xlu0 %4850
    %v4852 = vsel %vm150, %v4848, 0.0
    %4853 = vadd.xlane.f32.xlu0 %v4852
    %v4854 = vpop.xlane.xlu0 %4853
    %v4855 = vmul.f32 %v4851, %v154
    %v4856 = vmul.f32 %v4854, %v154
    %v4857 = vadd.f32 %v4855, 1e-05
    %v4858 = vadd.f32 %v4856, 1e-05
    %v4859 = vrsqrt.pop %v4857
    %v4860 = vrsqrt.pop %v4858
    %v4861 = vmul.f32 %v4845, %v4859
    %v4862 = vmul.f32 %v4846, %v4860
    %v4864 = vlaneseq
    %v4865 = vshrl.u32 %v4864, 7
    %v4866 = vsub.s32 0, %v4865
    %v4867 = vrot.slane %v4834, %v4866
    %v4869 = vmul.f32 %v4861, %v4867
    %v4870 = vmul.f32 %v4862, %v4867
    %v4872 = vlaneseq
    %v4873 = vshrl.u32 %v4872, 7
    %v4874 = vsub.s32 0, %v4873
    %v4875 = vrot.slane %v4836, %v4874
    %v4877 = vadd.f32 %v4869, %v4875
    %v4878 = vadd.f32 %v4870, %v4875
    %s4879 = scalar_lea.vmem %s11, 32
    %v4880 = vld [vmem:[%s4879] sm:$0xff]
    %v4881 = vld [vmem:[%s4879 + $0x8] sm:$0xff]
    %v4882 = vld [vmem:[%s4879 + $0x10] sm:$0xff]
    %v4883 = vld [vmem:[%s4879 + $0x18] sm:$0xff]
    %s4884 = scalar_lea.vmem %s12, 1
    %v4885 = vld [vmem:[%s4884] sm:$0x1]
    %v4887 = vlaneseq
    %v4888 = vshrl.u32 %v4887, 7
    %v4889 = vsub.s32 0, %v4888
    %v4890 = vrot.slane %v4885, %v4889
    %v4893 = vsel %vm146, %v4877, 0
    %v4896 = vsel %vm146, %v4878, 0
    %4898 = vmatprep.subr.mxu0 0.0
    %4899 = vmatpush1.msra.mxu0 %v4880
    %4900 = vmatprep.subr.mxu0 0.0
    %4901 = vmatpush1.msra.mxu0 %v4881
    %4902 = vmatprep.subr.mxu0 0.0
    %4903 = vmatpush1.msra.mxu0 %v4882
    %4904 = vmatprep.subr.mxu0 0.0
    %4905 = vmatpush1.msra.mxu0 %v4883
    %4906 = vmatprep.subr.mxu0 0.0
    %4907 = vmatpush1.msra.mxu0 0.0
    %4908 = vmatprep.subr.mxu0 0.0
    %4909 = vmatpush1.msra.mxu0 0.0
    %4910 = vmatprep.subr.mxu0 0.0
    %4911 = vmatpush1.msra.mxu0 0.0
    %4912 = vmatprep.subr.mxu0 0.0
    %4913 = vmatpush1.msra.mxu0 0.0
    %4914 = vmatprep.subr.mxu0 0.0
    %4915 = vmatpush1.msra.mxu0 0.0
    %4916 = vmatprep.subr.mxu0 0.0
    %4917 = vmatpush1.msra.mxu0 0.0
    %4918 = vmatprep.subr.mxu0 0.0
    %4919 = vmatpush1.msra.mxu0 0.0
    %4920 = vmatprep.subr.mxu0 0.0
    %4921 = vmatpush1.msra.mxu0 0.0
    %4922 = vmatprep.subr.mxu0 0.0
    %4923 = vmatpush1.msra.mxu0 0.0
    %4924 = vmatprep.subr.mxu0 0.0
    %4925 = vmatpush1.msra.mxu0 0.0
    %4926 = vmatprep.subr.mxu0 0.0
    %4927 = vmatpush1.msra.mxu0 0.0
    %4928 = vmatprep.subr.mxu0 0.0
    %4929 = vmatpush1.msra.mxu0 0.0
    %4930 = vmatprep.subr.mxu0 0.0
    %4931 = vmatpush1.msra.mxu0 0.0
    %4932 = vmatprep.subr.mxu0 0.0
    %4933 = vmatpush1.msra.mxu0 0.0
    %4934 = vmatprep.subr.mxu0 0.0
    %4935 = vmatpush1.msra.mxu0 0.0
    %4936 = vmatprep.subr.mxu0 0.0
    %4937 = vmatpush1.msra.mxu0 0.0
    %4938 = vmatprep.subr.mxu0 0.0
    %4939 = vmatpush1.msra.mxu0 0.0
    %4940 = vmatprep.subr.mxu0 0.0
    %4941 = vmatpush1.msra.mxu0 0.0
    %4942 = vmatprep.subr.mxu0 0.0
    %4943 = vmatpush1.msra.mxu0 0.0
    %4944 = vmatprep.subr.mxu0 0.0
    %4945 = vmatpush1.msra.mxu0 0.0
    %4946 = vmatprep.subr.mxu0 0.0
    %4947 = vmatpush1.msra.mxu0 0.0
    %4948 = vmatprep.subr.mxu0 0.0
    %4949 = vmatpush1.msra.mxu0 0.0
    %4950 = vmatprep.subr.mxu0 0.0
    %4951 = vmatpush1.msra.mxu0 0.0
    %4952 = vmatprep.subr.mxu0 0.0
    %4953 = vmatpush1.msra.mxu0 0.0
    %4954 = vmatprep.subr.mxu0 0.0
    %4955 = vmatpush1.msra.mxu0 0.0
    %4956 = vmatprep.subr.mxu0 0.0
    %4957 = vmatpush1.msra.mxu0 0.0
    %4958 = vmatprep.subr.mxu0 0.0
    %4959 = vmatpush1.msra.mxu0 0.0
    %4960 = vmatprep.subr.mxu0 0.0
    %4961 = vmatpush1.msra.mxu0 0.0
    %4962 = vmatprep.mubr.f32.mxu0 0.0
    %4963 = vmatmul.mubr.f32.gmra.mrb[0].mxu0 %v4893
    %v4964 = vpop.f32.mrb[0].mxu0
    %v4965 = vadd.f32 %v4890, %v4964
    %v4966 = vpop.f32.mrb[0].mxu0
    %4967 = vmatprep.mubr.f32.mxu0 0.0
    %4968 = vmatmul.mubr.f32.gmra.mrb[0].mxu0 %v4896
    %v4969 = vpop.f32.mrb[0].mxu0
    %v4970 = vadd.f32 %v4890, %v4969
    %v4971 = vpop.f32.mrb[0].mxu0
    %4972 = vdwg.mxu0
    %v4973 = vmul.f32 %v4965, 0.5
    %v4974 = vmul.f32 %v4970, 0.5
    %v4975 = vmul.f32 %v4965, 0.70710677
    %v4976 = vmul.f32 %v4970, 0.70710677
    %v4977 = verf.f32.pop %v4975
    %v4978 = verf.f32.pop %v4976
    %v4979 = vadd.f32 %v4977, 1.0
    %v4980 = vadd.f32 %v4978, 1.0
    %v4981 = vmul.f32 %v4973, %v4979
    %v4982 = vmul.f32 %v4974, %v4980
    %s4983 = scalar_lea.vmem %s13, 128
    %v4984 = vld [vmem:[%s4983] sm:$0xff]
    %v4985 = vld [vmem:[%s4983 + $0x8] sm:$0xff]
    %v4986 = vld [vmem:[%s4983 + $0x10] sm:$0xff]
    %v4987 = vld [vmem:[%s4983 + $0x18] sm:$0xff]
    %v4988 = vld [vmem:[%s4983 + $0x20] sm:$0xff]
    %v4989 = vld [vmem:[%s4983 + $0x28] sm:$0xff]
    %v4990 = vld [vmem:[%s4983 + $0x30] sm:$0xff]
    %v4991 = vld [vmem:[%s4983 + $0x38] sm:$0xff]
    %v4992 = vld [vmem:[%s4983 + $0x40] sm:$0xff]
    %v4993 = vld [vmem:[%s4983 + $0x48] sm:$0xff]
    %v4994 = vld [vmem:[%s4983 + $0x50] sm:$0xff]
    %v4995 = vld [vmem:[%s4983 + $0x58] sm:$0xff]
    %v4996 = vld [vmem:[%s4983 + $0x60] sm:$0xff]
    %v4997 = vld [vmem:[%s4983 + $0x68] sm:$0xff]
    %v4998 = vld [vmem:[%s4983 + $0x70] sm:$0xff]
    %v4999 = vld [vmem:[%s4983 + $0x78] sm:$0xff]
    %5000 = vmatprep.subr.mxu0 0.0
    %5001 = vmatpush1.msra.mxu0 %v4984
    %5002 = vmatprep.subr.mxu0 0.0
    %5003 = vmatpush1.msra.mxu0 %v4985
    %5004 = vmatprep.subr.mxu0 0.0
    %5005 = vmatpush1.msra.mxu0 %v4986
    %5006 = vmatprep.subr.mxu0 0.0
    %5007 = vmatpush1.msra.mxu0 %v4987
    %5008 = vmatprep.subr.mxu0 0.0
    %5009 = vmatpush1.msra.mxu0 %v4988
    %5010 = vmatprep.subr.mxu0 0.0
    %5011 = vmatpush1.msra.mxu0 %v4989
    %5012 = vmatprep.subr.mxu0 0.0
    %5013 = vmatpush1.msra.mxu0 %v4990
    %5014 = vmatprep.subr.mxu0 0.0
    %5015 = vmatpush1.msra.mxu0 %v4991
    %5016 = vmatprep.subr.mxu0 0.0
    %5017 = vmatpush1.msra.mxu0 %v4992
    %5018 = vmatprep.subr.mxu0 0.0
    %5019 = vmatpush1.msra.mxu0 %v4993
    %5020 = vmatprep.subr.mxu0 0.0
    %5021 = vmatpush1.msra.mxu0 %v4994
    %5022 = vmatprep.subr.mxu0 0.0
    %5023 = vmatpush1.msra.mxu0 %v4995
    %5024 = vmatprep.subr.mxu0 0.0
    %5025 = vmatpush1.msra.mxu0 %v4996
    %5026 = vmatprep.subr.mxu0 0.0
    %5027 = vmatpush1.msra.mxu0 %v4997
    %5028 = vmatprep.subr.mxu0 0.0
    %5029 = vmatpush1.msra.mxu0 %v4998
    %5030 = vmatprep.subr.mxu0 0.0
    %5031 = vmatpush1.msra.mxu0 %v4999
    %5032 = vmatprep.subr.mxu0 0.0
    %5033 = vmatpush1.msra.mxu0 0.0
    %5034 = vmatprep.subr.mxu0 0.0
    %5035 = vmatpush1.msra.mxu0 0.0
    %5036 = vmatprep.subr.mxu0 0.0
    %5037 = vmatpush1.msra.mxu0 0.0
    %5038 = vmatprep.subr.mxu0 0.0
    %5039 = vmatpush1.msra.mxu0 0.0
    %5040 = vmatprep.subr.mxu0 0.0
    %5041 = vmatpush1.msra.mxu0 0.0
    %5042 = vmatprep.subr.mxu0 0.0
    %5043 = vmatpush1.msra.mxu0 0.0
    %5044 = vmatprep.subr.mxu0 0.0
    %5045 = vmatpush1.msra.mxu0 0.0
    %5046 = vmatprep.subr.mxu0 0.0
    %5047 = vmatpush1.msra.mxu0 0.0
    %5048 = vmatprep.subr.mxu0 0.0
    %5049 = vmatpush1.msra.mxu0 0.0
    %5050 = vmatprep.subr.mxu0 0.0
    %5051 = vmatpush1.msra.mxu0 0.0
    %5052 = vmatprep.subr.mxu0 0.0
    %5053 = vmatpush1.msra.mxu0 0.0
    %5054 = vmatprep.subr.mxu0 0.0
    %5055 = vmatpush1.msra.mxu0 0.0
    %5056 = vmatprep.subr.mxu0 0.0
    %5057 = vmatpush1.msra.mxu0 0.0
    %5058 = vmatprep.subr.mxu0 0.0
    %5059 = vmatpush1.msra.mxu0 0.0
    %5060 = vmatprep.subr.mxu0 0.0
    %5061 = vmatpush1.msra.mxu0 0.0
    %5062 = vmatprep.subr.mxu0 0.0
    %5063 = vmatpush1.msra.mxu0 0.0
    %5064 = vmatprep.mubr.f32.mxu0 0.0
    %5065 = vmatmul.mubr.f32.gmra.mrb[0].mxu0 %v4981
    %v5066 = vpop.f32.mrb[0].mxu0
    %v5067 = vadd.f32 0.0, %v5066
    %v5068 = vpop.f32.mrb[0].mxu0
    %5069 = vmatprep.mubr.f32.mxu0 0.0
    %5070 = vmatmul.mubr.f32.gmra.mrb[0].mxu0 %v4982
    %v5071 = vpop.f32.mrb[0].mxu0
    %v5072 = vadd.f32 0.0, %v5071
    %v5073 = vpop.f32.mrb[0].mxu0
    %5074 = vdwg.mxu0
    %v5075 = vadd.f32 %v4831, %v5067
    %v5076 = vadd.f32 %v4832, %v5072
    %s5077 = scalar_lea.vmem %s14, 1
    %v5078 = vld [vmem:[%s5077] sm:$0x1]
    %v5080 = vlaneseq
    %v5081 = vshrl.u32 %v5080, 7
    %v5082 = vsub.s32 0, %v5081
    %v5083 = vrot.slane %v5078, %v5082
    %v5085 = vadd.f32 %v5075, %v5083
    %v5086 = vadd.f32 %v5076, %v5083
    %5087 = vst.msk [vmem:[#allocation2] sm:$0xff] %vm146, %v5085
    %5088 = vst.msk [vmem:[#allocation2 + $0x8] sm:$0x3] %vm150, %v5086
    // Predicated region
    $region62: #{tpu_custom_call.1} parent=1 // pred_check
      _
    $region63: #{tpu_custom_call.1} parent=1 // pred_check_branch
      %5090 = sbr.rel (0) target = $region65
    $region64: #{tpu_custom_call.1} parent=1 // pred_region
      %s5092 = ssub.s32 256, 256
      %5093 = vsyncadd [#allocation3], %s5092
      %s5094 = sshll.u32 [#allocation2], 4
      %s5095 = int_to_ptr.vmem [resolvable:$true] %s5094
      %5100 = dma.vmem_to_hbm [thread:$0]  %s5095, 256, %s15, [#allocation3], 128, 128, 8
    $region65: #{tpu_custom_call.1} parent=1 // pred_fallthru
      _
    // Predicated region
    $region66: #{tpu_custom_call.1} parent=1 // pred_check
      _
    $region67: #{tpu_custom_call.1} parent=1 // pred_check_branch
      %5102 = sbr.rel (0) target = $region69
    $region68: #{tpu_custom_call.1} parent=1 // pred_region
      %5103 = dma.done [#allocation3], 256
    $region69: #{tpu_custom_call.1} parent=1 // pred_fallthru
      _
    %5104 = vsyncpa [#allocation3], 1

</llo_original>
